<compile_context>
chip_gen: v7x
topology: tpu7x:2x2x1
jax: 0.10.0
libtpu: 0.0.40
codegen_flags: <defaults>
</compile_context>

<pallas_src>
from functools import partial

import jax
import jax.numpy as jnp
from jax.experimental import pallas as pl
from jax.experimental.pallas import tpu as pltpu

EPS = 1e-5
LANE = 128        # all feature dims are zero-padded to this lane width
POOL = 3          # pool_size = (1, 3), stride (1, 1)
MAX_NB = 128      # samples per grid step (VMEM-safe on v5e/v6e/v7x)


def _round_up(n, m=LANE):
    return ((n + m - 1) // m) * m


def _pad_axis(a, axis, target):
    pad = [(0, 0)] * a.ndim
    pad[axis] = (0, target - a.shape[axis])
    return jnp.pad(a, pad)


# ------------------------------ fused kernel -------------------------------

def fused_cnn_kernel(xcol_ref, w1_ref, b1_ref, w2_ref, b2_ref,
                     wf1_ref, bf1_ref, wf2_ref, bf2_ref, o_ref,
                     h1_scr, p1_scr, h2_scr, p2_scr):
    """Whole eval-mode forward for one block of NB samples.

    Row layout of every activation buffer is (w-major, sample-minor):
    row r = w * NB + n, so conv/pool window shifts are multiples of NB and the
    fc1 per-position slices are contiguous NB-row blocks.

    xcol_ref : (NB*W1, KW*C*H)  conv1 im2col of the input block (bf16/f32)
    w1_ref   : (KW*C*H, FP)     conv1 weight, BN folded, lane-padded
    w2_ref   : (KW, FP, FP)     conv2 weight, BN folded
    wf1_ref  : (W2p, FP, HP)    fc1 weight, one (FP,HP) slab per position w
    wf2_ref  : (HP, CP)         fc2 weight
    b*_ref   : (1, *) f32       biases (BN folded for the convs)
    o_ref    : (NB, CP) f32     sigmoid output (padded lanes hold 0.5)
    """
    NB = o_ref.shape[0]
    KW = w2_ref.shape[0]
    W2p = wf1_ref.shape[0]
    L1p = p1_scr.shape[0]          # W1p * NB
    L2 = h2_scr.shape[0]           # W2  * NB
    L2p = p2_scr.shape[0]          # W2p * NB

    # ---- layer1: Conv2d(C->F,(KH,KW)) + BN(folded) + ReLU : one matmul ----
    acc1 = jnp.dot(xcol_ref[...], w1_ref[...],
                   preferred_element_type=jnp.float32)
    h1_scr[...] = jnp.maximum(acc1 + b1_ref[...], 0.0)

    # ---- pool1: MaxPool((1,3), stride 1); shifts are multiples of NB ------
    p1_scr[...] = jnp.maximum(
        jnp.maximum(h1_scr[pl.ds(0, L1p), :], h1_scr[pl.ds(NB, L1p), :]),
        h1_scr[pl.ds(2 * NB, L1p), :])

    # ---- layer2: Conv2d(F->F,(1,KW)) + BN(folded) + ReLU ------------------
    acc2 = jnp.dot(p1_scr[pl.ds(0, L2), :].astype(w2_ref.dtype), w2_ref[0],
                   preferred_element_type=jnp.float32)
    for kw in range(1, KW):
        acc2 = acc2 + jnp.dot(
            p1_scr[pl.ds(kw * NB, L2), :].astype(w2_ref.dtype), w2_ref[kw],
            preferred_element_type=jnp.float32)
    h2_scr[...] = jnp.maximum(acc2 + b2_ref[...], 0.0)

    # ---- pool2 -------------------------------------------------------------
    p2_scr[...] = jnp.maximum(
        jnp.maximum(h2_scr[pl.ds(0, L2p), :], h2_scr[pl.ds(NB, L2p), :]),
        h2_scr[pl.ds(2 * NB, L2p), :])

    # ---- fc1 + ReLU (Dropout = identity in eval mode) ----------------------
    # torch flattens (N, F, 1, W2p) as (f, w); that ordering is baked into the
    # wf1 packing, so fc1 is a sum over w of contiguous (NB,FP)@(FP,HP) dots.
    accf = jnp.dot(p2_scr[pl.ds(0, NB), :].astype(wf1_ref.dtype), wf1_ref[0],
                   preferred_element_type=jnp.float32)
    for w in range(1, W2p):
        accf = accf + jnp.dot(
            p2_scr[pl.ds(w * NB, NB), :].astype(wf1_ref.dtype), wf1_ref[w],
            preferred_element_type=jnp.float32)
    hfc = jnp.maximum(accf + bf1_ref[...], 0.0)

    # ---- fc2 + sigmoid ------------------------------------------------------
    logits = jnp.dot(hfc.astype(wf2_ref.dtype), wf2_ref[...],
                     preferred_element_type=jnp.float32) + bf2_ref[...]
    o_ref[...] = jax.nn.sigmoid(logits)


# ---------------------------- parameter packing -----------------------------

def pack_params(params, dtype=jnp.bfloat16):
    """Fold eval-mode BN into conv weights, reorder, zero-pad to 128 lanes.

    Called ONCE outside jit (model-load time); the jitted forward only takes
    the already-packed slabs.
    """
    conv1_w = params["conv1_w"]
    F, C, KH, KW = conv1_w.shape
    hidden, fc1_in = params["fc1_w"].shape
    num_classes = params["fc2_w"].shape[0]
    W2p = fc1_in // F

    FP, HP, CP = _round_up(F), _round_up(hidden), _round_up(num_classes)

    s1 = params["bn1_gamma"] / jnp.sqrt(params["bn1_var"] + EPS)
    t1 = params["bn1_beta"] - params["bn1_mean"] * s1
    s2 = params["bn2_gamma"] / jnp.sqrt(params["bn2_var"] + EPS)
    t2 = params["bn2_beta"] - params["bn2_mean"] * s2

    # conv1: (F, C, KH, KW) -> (KW*C*KH, FP); row = kw*C*KH + c*KH + kh
    w1 = (conv1_w * s1[:, None, None, None]).transpose(3, 1, 2, 0)
    w1 = _pad_axis(w1.reshape(KW * C * KH, F), 1, FP).astype(dtype)
    b1 = _pad_axis((params["conv1_b"] * s1 + t1)[None, :], 1, FP)
    b1 = b1.astype(jnp.float32)

    # conv2: (F, F, 1, KW) -> (KW, FP_in, FP_out), BN scale on out channels
    w2 = (params["conv2_w"][:, :, 0, :] * s2[:, None, None]).transpose(2, 1, 0)
    w2 = _pad_axis(_pad_axis(w2, 1, FP), 2, FP).astype(dtype)
    b2 = _pad_axis((params["conv2_b"] * s2 + t2)[None, :], 1, FP)
    b2 = b2.astype(jnp.float32)

    # fc1: (hidden, F*W2p) -> (W2p, FP, HP); wf1[w, f, h] = fc1_w[h, f*W2p + w]
    wf1 = params["fc1_w"].reshape(hidden, F, W2p).transpose(2, 1, 0)
    wf1 = _pad_axis(_pad_axis(wf1, 1, FP), 2, HP).astype(dtype)
    bf1 = _pad_axis(params["fc1_b"][None, :], 1, HP).astype(jnp.float32)

    # fc2: (num_classes, hidden) -> (HP, CP)
    wf2 = _pad_axis(_pad_axis(params["fc2_w"].T, 0, HP), 1, CP).astype(dtype)
    bf2 = _pad_axis(params["fc2_b"][None, :], 1, CP).astype(jnp.float32)

    return (w1, b1, w2, b2, wf1, bf1, wf2, bf2), num_classes


# ------------------------------- forward pass ------------------------------

@partial(jax.jit, static_argnames=("num_classes",))
def cnn_forward(x, packed, *, num_classes):
    w1, b1, w2, b2, wf1, bf1, wf2, bf2 = packed
    N, C, H, W = x.shape
    CH = C * H
    KCH, FP = w1.shape
    assert KCH % CH == 0, "packed conv1 weight inconsistent with input C*H"
    KW = KCH // CH
    W1 = W - KW + 1
    W1p = W1 - (POOL - 1)
    W2 = W1p - KW + 1
    W2p = W2 - (POOL - 1)
    assert wf1.shape[0] == W2p, "fc1 in_features inconsistent with input width"
    HP = wf1.shape[2]
    CP = wf2.shape[1]

    # --- batch blocking: NB samples per grid step ---------------------------
    NB = min(N, MAX_NB)
    G = -(-N // NB)
    Npad = G * NB
    if Npad != N:
        x = jnp.pad(x, ((0, Npad - N), (0, 0), (0, 0), (0, 0)))

    # --- conv1 im2col in the XLA wrapper ------------------------------------
    # (N, C, H, W) -> (N, W, C*H) -> (N, W1, KW*C*H); lane = kw*CH + c*H + h
    xw = x.transpose(0, 3, 1, 2).reshape(Npad, W, CH)
    xcol = jnp.concatenate([xw[:, kw:kw + W1, :] for kw in range(KW)], axis=-1)
    # per-block (w-major, sample-minor) row ordering, then flatten to 2-D
    xcol = xcol.reshape(G, NB, W1, KCH).transpose(0, 2, 1, 3)
    xcol = xcol.reshape(G * W1 * NB, KCH).astype(w1.dtype)

    flops = 2 * Npad * (W1 * KCH * FP + W2 * KW * FP * FP
                        + W2p * FP * HP + HP * CP)
    bytes_accessed = (xcol.size * xcol.dtype.itemsize
                      + Npad * CP * 4
                      + sum(int(a.size) * a.dtype.itemsize for a in packed))
    cost = pl.CostEstimate(flops=flops, transcendentals=Npad * CP,
                           bytes_accessed=bytes_accessed)

    def full_spec(a):
        nd = a.ndim
        return pl.BlockSpec(a.shape, lambda i, _nd=nd: (0,) * _nd)

    out = pl.pallas_call(
        fused_cnn_kernel,
        out_shape=jax.ShapeDtypeStruct((Npad, CP), jnp.float32),
        grid=(G,),
        in_specs=[pl.BlockSpec((W1 * NB, KCH), lambda i: (i, 0)),
                  full_spec(w1), full_spec(b1),
                  full_spec(w2), full_spec(b2),
                  full_spec(wf1), full_spec(bf1),
                  full_spec(wf2), full_spec(bf2)],
        out_specs=pl.BlockSpec((NB, CP), lambda i: (i, 0)),
        scratch_shapes=[pltpu.VMEM((W1 * NB, FP), jnp.float32),   # h1
                        pltpu.VMEM((W1p * NB, FP), jnp.float32),  # p1
                        pltpu.VMEM((W2 * NB, FP), jnp.float32),   # h2
                        pltpu.VMEM((W2p * NB, FP), jnp.float32)], # p2
        compiler_params=pltpu.CompilerParams(
            dimension_semantics=("parallel",)),
        cost_estimate=cost,
    )(xcol, w1, b1, w2, b2, wf1, bf1, wf2, bf2)

    # TODO(synk): training-mode Dropout(p=0.25) random masking not implemented
    # (identity in eval mode).
    return out[:N, :num_classes]


# ------------------------- pure-JAX reference check -------------------------

def reference_forward(x, params):
    def conv2d(h, w, b):
        y = jax.lax.conv_general_dilated(
            h, w, (1, 1), "VALID",
            dimension_numbers=("NCHW", "OIHW", "NCHW"))
        return y + b.reshape(1, -1, 1, 1)

    def bn(h, g, bt, m, v):
        g, bt, m, v = (t.reshape(1, -1, 1, 1) for t in (g, bt, m, v))
        return g * (h - m) / jnp.sqrt(v + EPS) + bt

    def maxpool_w3(h):
        return jax.lax.reduce_window(h, -jnp.inf, jax.lax.max,
                                     (1, 1, 1, 3), (1, 1, 1, 1), "VALID")

    h = jnp.maximum(bn(conv2d(x, params["conv1_w"], params["conv1_b"]),
                       params["bn1_gamma"], params["bn1_beta"],
                       params["bn1_mean"], params["bn1_var"]), 0.0)
    h = maxpool_w3(h)
    h = jnp.maximum(bn(conv2d(h, params["conv2_w"], params["conv2_b"]),
                       params["bn2_gamma"], params["bn2_beta"],
                       params["bn2_mean"], params["bn2_var"]), 0.0)
    h = maxpool_w3(h)
    flat = h.reshape(h.shape[0], -1)
    h1 = jnp.maximum(flat @ params["fc1_w"].T + params["fc1_b"], 0.0)
    return jax.nn.sigmoid(h1 @ params["fc2_w"].T + params["fc2_b"])


# ----------------------------------- main -----------------------------------

def init_params(key, *, nb_filter, channel, hidden_size, num_classes, fc1_in):
    ks = jax.random.split(key, 12)
    p = {
        "conv1_w": 0.1 * jax.random.normal(ks[0], (nb_filter, channel, 4, 10), jnp.float32),
        "conv1_b": 0.1 * jax.random.normal(ks[1], (nb_filter,), jnp.float32),
        "bn1_gamma": 1.0 + 0.1 * jax.random.normal(ks[2], (nb_filter,), jnp.float32),
        "bn1_beta": 0.1 * jax.random.normal(ks[3], (nb_filter,), jnp.float32),
        "bn1_mean": 0.1 * jax.random.normal(ks[4], (nb_filter,), jnp.float32),
        "bn1_var": 0.5 + jnp.abs(jax.random.normal(ks[5], (nb_filter,), jnp.float32)),
        "conv2_w": 0.1 * jax.random.normal(ks[6], (nb_filter, nb_filter, 1, 10), jnp.float32),
        "conv2_b": 0.1 * jax.random.normal(ks[7], (nb_filter,), jnp.float32),
        "bn2_gamma": 1.0 + 0.1 * jax.random.normal(ks[8], (nb_filter,), jnp.float32),
        "bn2_beta": 0.1 * jax.random.normal(ks[9], (nb_filter,), jnp.float32),
        "bn2_mean": 0.1 * jax.random.normal(ks[10], (nb_filter,), jnp.float32),
        "bn2_var": 0.5 + jnp.abs(jax.random.normal(ks[11], (nb_filter,), jnp.float32)),
    }
    kf = jax.random.split(jax.random.fold_in(key, 7), 4)
    p["fc1_w"] = 0.1 * jax.random.normal(kf[0], (hidden_size, fc1_in), jnp.float32)
    p["fc1_b"] = 0.1 * jax.random.normal(kf[1], (hidden_size,), jnp.float32)
    p["fc2_w"] = 0.1 * jax.random.normal(kf[2], (num_classes, hidden_size), jnp.float32)
    p["fc2_b"] = 0.1 * jax.random.normal(kf[3], (num_classes,), jnp.float32)
    return p


if __name__ == "__main__":
    # Shapes consistent with the module:
    #   channel=7, kernel=(4,10) -> input H must be 4; window_size (W) = 32
    #   nb_filter=8, hidden_size=32, num_classes=2, batch=2
    N, C, H, W = 2, 7, 4, 32
    nb_filter, hidden_size, num_classes = 8, 32, 2

    # out1 = W-9 = 23 ; pool1 = 21 ; out2 = 12 ; pool2 = 10 -> fc1_in = 8*10
    W1 = W - 9
    W1p = W1 - 2
    W2 = W1p - 9
    W2p = W2 - 2
    fc1_in = nb_filter * W2p

    key = jax.random.PRNGKey(0)
    kx, kp = jax.random.split(key)
    x = jax.random.normal(kx, (N, C, H, W), jnp.float32)
    params = init_params(kp, nb_filter=nb_filter, channel=C,
                         hidden_size=hidden_size, num_classes=num_classes,
                         fc1_in=fc1_in)

    ref = jax.block_until_ready(reference_forward(x, params))

    # Exact-math (f32) packing: tight structural check of the fused kernel.
    packed32, ncls = pack_params(params, dtype=jnp.float32)
    out32 = jax.block_until_ready(cnn_forward(x, packed32, num_classes=ncls))
    assert out32.shape == (N, num_classes)
    assert jnp.allclose(out32, ref, rtol=2e-4, atol=1e-4), "f32 mismatch vs reference"

    # Production path: bf16 weights / matmul inputs, f32 accumulation.
    packed16, ncls = pack_params(params, dtype=jnp.bfloat16)
    out16 = jax.block_until_ready(cnn_forward(x, packed16, num_classes=ncls))
    assert out16.shape == (N, num_classes)
    assert jnp.allclose(out16, ref, rtol=2e-2, atol=2e-2), "bf16 mismatch vs reference"

    print("KERNEL_OK")
</pallas_src>

<mosaic_0001>
module attributes {stable_mosaic.version = 11 : i64} {
  func.func @fused_cnn_kernel(%arg0: i32, %arg1: memref<46x280xf32, #tpu.memory_space<vmem>>, %arg2: memref<280x128xf32, #tpu.memory_space<vmem>>, %arg3: memref<1x128xf32, #tpu.memory_space<vmem>>, %arg4: memref<10x128x128xf32, #tpu.memory_space<vmem>>, %arg5: memref<1x128xf32, #tpu.memory_space<vmem>>, %arg6: memref<10x128x128xf32, #tpu.memory_space<vmem>>, %arg7: memref<1x128xf32, #tpu.memory_space<vmem>>, %arg8: memref<128x128xf32, #tpu.memory_space<vmem>>, %arg9: memref<1x128xf32, #tpu.memory_space<vmem>>, %arg10: memref<2x128xf32, #tpu.memory_space<vmem>>, %arg11: memref<46x128xf32, #tpu.memory_space<vmem>>, %arg12: memref<42x128xf32, #tpu.memory_space<vmem>>, %arg13: memref<24x128xf32, #tpu.memory_space<vmem>>, %arg14: memref<20x128xf32, #tpu.memory_space<vmem>>) attributes {dimension_semantics = [#tpu.dimension_semantics<parallel>], iteration_bounds = array<i64: 1>, scalar_prefetch = 0 : i64, scratch_operands = 4 : i64, tpu.core_type = #tpu.core_type<tc>, window_params = [{transform_indices = @transform_0, window_bounds = array<i64: 46, 280>}, {pipeline_mode = #tpu.pipeline_mode<synchronous>, transform_indices = @transform_1, window_bounds = array<i64: 280, 128>}, {pipeline_mode = #tpu.pipeline_mode<synchronous>, transform_indices = @transform_2, window_bounds = array<i64: 1, 128>}, {pipeline_mode = #tpu.pipeline_mode<synchronous>, transform_indices = @transform_3, window_bounds = array<i64: 10, 128, 128>}, {pipeline_mode = #tpu.pipeline_mode<synchronous>, transform_indices = @transform_4, window_bounds = array<i64: 1, 128>}, {pipeline_mode = #tpu.pipeline_mode<synchronous>, transform_indices = @transform_5, window_bounds = array<i64: 10, 128, 128>}, {pipeline_mode = #tpu.pipeline_mode<synchronous>, transform_indices = @transform_6, window_bounds = array<i64: 1, 128>}, {pipeline_mode = #tpu.pipeline_mode<synchronous>, transform_indices = @transform_7, window_bounds = array<i64: 128, 128>}, {pipeline_mode = #tpu.pipeline_mode<synchronous>, transform_indices = @transform_8, window_bounds = array<i64: 1, 128>}, {transform_indices = @transform_9, window_bounds = array<i64: 2, 128>}]} {
    %c0 = arith.constant 0 : index
    %c0_0 = arith.constant 0 : index
    %0 = vector.load %arg1[%c0, %c0_0] : memref<46x280xf32, #tpu.memory_space<vmem>>, vector<46x280xf32>
    %c0_1 = arith.constant 0 : index
    %c0_2 = arith.constant 0 : index
    %1 = vector.load %arg2[%c0_1, %c0_2] : memref<280x128xf32, #tpu.memory_space<vmem>>, vector<280x128xf32>
    %cst = arith.constant dense<0.000000e+00> : vector<46x128xf32>
    %2 = tpu.matmul %0, %1, %cst {dimension_numbers = #tpu.dot_dimension_numbers<[1], [0], [0], [1], [0, 0, 1, 1], [], []>} : vector<46x280xf32>, vector<280x128xf32>, vector<46x128xf32> -> vector<46x128xf32>
    %c0_3 = arith.constant 0 : index
    %c0_4 = arith.constant 0 : index
    %3 = vector.load %arg3[%c0_3, %c0_4] : memref<1x128xf32, #tpu.memory_space<vmem>>, vector<1x128xf32>
    %4 = vector.broadcast %3 : vector<1x128xf32> to vector<46x128xf32>
    %5 = arith.addf %2, %4 : vector<46x128xf32>
    %cst_5 = arith.constant 0.000000e+00 : f32
    %6 = vector.broadcast %cst_5 : f32 to vector<46x128xf32>
    %7 = arith.maximumf %5, %6 : vector<46x128xf32>
    %c0_6 = arith.constant 0 : index
    %c0_7 = arith.constant 0 : index
    %8 = vector.load %arg11[%c0_6, %c0_7] : memref<46x128xf32, #tpu.memory_space<vmem>>, vector<46x128xf32>
    tpu.vector_store %arg11[%c0_6, %c0_7], %7 {strides = array<i32>} : memref<46x128xf32, #tpu.memory_space<vmem>>, vector<46x128xf32>,
    %c0_8 = arith.constant 0 : index
    %c0_9 = arith.constant 0 : index
    %9 = vector.load %arg11[%c0_8, %c0_9] : memref<46x128xf32, #tpu.memory_space<vmem>>, vector<42x128xf32>
    %c2 = arith.constant 2 : index
    %c0_10 = arith.constant 0 : index
    %10 = vector.load %arg11[%c2, %c0_10] : memref<46x128xf32, #tpu.memory_space<vmem>>, vector<42x128xf32>
    %11 = arith.maximumf %9, %10 : vector<42x128xf32>
    %c4 = arith.constant 4 : index
    %c0_11 = arith.constant 0 : index
    %12 = vector.load %arg11[%c4, %c0_11] : memref<46x128xf32, #tpu.memory_space<vmem>>, vector<42x128xf32>
    %13 = arith.maximumf %11, %12 : vector<42x128xf32>
    %c0_12 = arith.constant 0 : index
    %c0_13 = arith.constant 0 : index
    %14 = vector.load %arg12[%c0_12, %c0_13] : memref<42x128xf32, #tpu.memory_space<vmem>>, vector<42x128xf32>
    tpu.vector_store %arg12[%c0_12, %c0_13], %13 {strides = array<i32>} : memref<42x128xf32, #tpu.memory_space<vmem>>, vector<42x128xf32>,
    %c0_14 = arith.constant 0 : index
    %c0_15 = arith.constant 0 : index
    %15 = vector.load %arg12[%c0_14, %c0_15] : memref<42x128xf32, #tpu.memory_space<vmem>>, vector<24x128xf32>
    %c0_16 = arith.constant 0 : index
    %c0_17 = arith.constant 0 : index
    %c0_18 = arith.constant 0 : index
    %16 = vector.load %arg4[%c0_16, %c0_17, %c0_18] : memref<10x128x128xf32, #tpu.memory_space<vmem>>, vector<1x128x128xf32>
    %17 = vector.shape_cast %16 : vector<1x128x128xf32> to vector<128x128xf32>
    %cst_19 = arith.constant dense<0.000000e+00> : vector<24x128xf32>
    %18 = tpu.matmul %15, %17, %cst_19 {dimension_numbers = #tpu.dot_dimension_numbers<[1], [0], [0], [1], [0, 0, 1, 1], [], []>} : vector<24x128xf32>, vector<128x128xf32>, vector<24x128xf32> -> vector<24x128xf32>
    %c2_20 = arith.constant 2 : index
    %c0_21 = arith.constant 0 : index
    %19 = vector.load %arg12[%c2_20, %c0_21] : memref<42x128xf32, #tpu.memory_space<vmem>>, vector<24x128xf32>
    %c1 = arith.constant 1 : index
    %c0_22 = arith.constant 0 : index
    %c0_23 = arith.constant 0 : index
    %20 = vector.load %arg4[%c1, %c0_22, %c0_23] : memref<10x128x128xf32, #tpu.memory_space<vmem>>, vector<1x128x128xf32>
    %21 = vector.shape_cast %20 : vector<1x128x128xf32> to vector<128x128xf32>
    %cst_24 = arith.constant dense<0.000000e+00> : vector<24x128xf32>
    %22 = tpu.matmul %19, %21, %cst_24 {dimension_numbers = #tpu.dot_dimension_numbers<[1], [0], [0], [1], [0, 0, 1, 1], [], []>} : vector<24x128xf32>, vector<128x128xf32>, vector<24x128xf32> -> vector<24x128xf32>
    %23 = arith.addf %18, %22 : vector<24x128xf32>
    %c4_25 = arith.constant 4 : index
    %c0_26 = arith.constant 0 : index
    %24 = vector.load %arg12[%c4_25, %c0_26] : memref<42x128xf32, #tpu.memory_space<vmem>>, vector<24x128xf32>
    %c2_27 = arith.constant 2 : index
    %c0_28 = arith.constant 0 : index
    %c0_29 = arith.constant 0 : index
    %25 = vector.load %arg4[%c2_27, %c0_28, %c0_29] : memref<10x128x128xf32, #tpu.memory_space<vmem>>, vector<1x128x128xf32>
    %26 = vector.shape_cast %25 : vector<1x128x128xf32> to vector<128x128xf32>
    %cst_30 = arith.constant dense<0.000000e+00> : vector<24x128xf32>
    %27 = tpu.matmul %24, %26, %cst_30 {dimension_numbers = #tpu.dot_dimension_numbers<[1], [0], [0], [1], [0, 0, 1, 1], [], []>} : vector<24x128xf32>, vector<128x128xf32>, vector<24x128xf32> -> vector<24x128xf32>
    %28 = arith.addf %23, %27 : vector<24x128xf32>
    %c6 = arith.constant 6 : index
    %c0_31 = arith.constant 0 : index
    %29 = vector.load %arg12[%c6, %c0_31] : memref<42x128xf32, #tpu.memory_space<vmem>>, vector<24x128xf32>
    %c3 = arith.constant 3 : index
    %c0_32 = arith.constant 0 : index
    %c0_33 = arith.constant 0 : index
    %30 = vector.load %arg4[%c3, %c0_32, %c0_33] : memref<10x128x128xf32, #tpu.memory_space<vmem>>, vector<1x128x128xf32>
    %31 = vector.shape_cast %30 : vector<1x128x128xf32> to vector<128x128xf32>
    %cst_34 = arith.constant dense<0.000000e+00> : vector<24x128xf32>
    %32 = tpu.matmul %29, %31, %cst_34 {dimension_numbers = #tpu.dot_dimension_numbers<[1], [0], [0], [1], [0, 0, 1, 1], [], []>} : vector<24x128xf32>, vector<128x128xf32>, vector<24x128xf32> -> vector<24x128xf32>
    %33 = arith.addf %28, %32 : vector<24x128xf32>
    %c8 = arith.constant 8 : index
    %c0_35 = arith.constant 0 : index
    %34 = vector.load %arg12[%c8, %c0_35] : memref<42x128xf32, #tpu.memory_space<vmem>>, vector<24x128xf32>
    %c4_36 = arith.constant 4 : index
    %c0_37 = arith.constant 0 : index
    %c0_38 = arith.constant 0 : index
    %35 = vector.load %arg4[%c4_36, %c0_37, %c0_38] : memref<10x128x128xf32, #tpu.memory_space<vmem>>, vector<1x128x128xf32>
    %36 = vector.shape_cast %35 : vector<1x128x128xf32> to vector<128x128xf32>
    %cst_39 = arith.constant dense<0.000000e+00> : vector<24x128xf32>
    %37 = tpu.matmul %34, %36, %cst_39 {dimension_numbers = #tpu.dot_dimension_numbers<[1], [0], [0], [1], [0, 0, 1, 1], [], []>} : vector<24x128xf32>, vector<128x128xf32>, vector<24x128xf32> -> vector<24x128xf32>
    %38 = arith.addf %33, %37 : vector<24x128xf32>
    %c10 = arith.constant 10 : index
    %c0_40 = arith.constant 0 : index
    %39 = vector.load %arg12[%c10, %c0_40] : memref<42x128xf32, #tpu.memory_space<vmem>>, vector<24x128xf32>
    %c5 = arith.constant 5 : index
    %c0_41 = arith.constant 0 : index
    %c0_42 = arith.constant 0 : index
    %40 = vector.load %arg4[%c5, %c0_41, %c0_42] : memref<10x128x128xf32, #tpu.memory_space<vmem>>, vector<1x128x128xf32>
    %41 = vector.shape_cast %40 : vector<1x128x128xf32> to vector<128x128xf32>
    %cst_43 = arith.constant dense<0.000000e+00> : vector<24x128xf32>
    %42 = tpu.matmul %39, %41, %cst_43 {dimension_numbers = #tpu.dot_dimension_numbers<[1], [0], [0], [1], [0, 0, 1, 1], [], []>} : vector<24x128xf32>, vector<128x128xf32>, vector<24x128xf32> -> vector<24x128xf32>
    %43 = arith.addf %38, %42 : vector<24x128xf32>
    %c12 = arith.constant 12 : index
    %c0_44 = arith.constant 0 : index
    %44 = vector.load %arg12[%c12, %c0_44] : memref<42x128xf32, #tpu.memory_space<vmem>>, vector<24x128xf32>
    %c6_45 = arith.constant 6 : index
    %c0_46 = arith.constant 0 : index
    %c0_47 = arith.constant 0 : index
    %45 = vector.load %arg4[%c6_45, %c0_46, %c0_47] : memref<10x128x128xf32, #tpu.memory_space<vmem>>, vector<1x128x128xf32>
    %46 = vector.shape_cast %45 : vector<1x128x128xf32> to vector<128x128xf32>
    %cst_48 = arith.constant dense<0.000000e+00> : vector<24x128xf32>
    %47 = tpu.matmul %44, %46, %cst_48 {dimension_numbers = #tpu.dot_dimension_numbers<[1], [0], [0], [1], [0, 0, 1, 1], [], []>} : vector<24x128xf32>, vector<128x128xf32>, vector<24x128xf32> -> vector<24x128xf32>
    %48 = arith.addf %43, %47 : vector<24x128xf32>
    %c14 = arith.constant 14 : index
    %c0_49 = arith.constant 0 : index
    %49 = vector.load %arg12[%c14, %c0_49] : memref<42x128xf32, #tpu.memory_space<vmem>>, vector<24x128xf32>
    %c7 = arith.constant 7 : index
    %c0_50 = arith.constant 0 : index
    %c0_51 = arith.constant 0 : index
    %50 = vector.load %arg4[%c7, %c0_50, %c0_51] : memref<10x128x128xf32, #tpu.memory_space<vmem>>, vector<1x128x128xf32>
    %51 = vector.shape_cast %50 : vector<1x128x128xf32> to vector<128x128xf32>
    %cst_52 = arith.constant dense<0.000000e+00> : vector<24x128xf32>
    %52 = tpu.matmul %49, %51, %cst_52 {dimension_numbers = #tpu.dot_dimension_numbers<[1], [0], [0], [1], [0, 0, 1, 1], [], []>} : vector<24x128xf32>, vector<128x128xf32>, vector<24x128xf32> -> vector<24x128xf32>
    %53 = arith.addf %48, %52 : vector<24x128xf32>
    %c16 = arith.constant 16 : index
    %c0_53 = arith.constant 0 : index
    %54 = vector.load %arg12[%c16, %c0_53] : memref<42x128xf32, #tpu.memory_space<vmem>>, vector<24x128xf32>
    %c8_54 = arith.constant 8 : index
    %c0_55 = arith.constant 0 : index
    %c0_56 = arith.constant 0 : index
    %55 = vector.load %arg4[%c8_54, %c0_55, %c0_56] : memref<10x128x128xf32, #tpu.memory_space<vmem>>, vector<1x128x128xf32>
    %56 = vector.shape_cast %55 : vector<1x128x128xf32> to vector<128x128xf32>
    %cst_57 = arith.constant dense<0.000000e+00> : vector<24x128xf32>
    %57 = tpu.matmul %54, %56, %cst_57 {dimension_numbers = #tpu.dot_dimension_numbers<[1], [0], [0], [1], [0, 0, 1, 1], [], []>} : vector<24x128xf32>, vector<128x128xf32>, vector<24x128xf32> -> vector<24x128xf32>
    %58 = arith.addf %53, %57 : vector<24x128xf32>
    %c18 = arith.constant 18 : index
    %c0_58 = arith.constant 0 : index
    %59 = vector.load %arg12[%c18, %c0_58] : memref<42x128xf32, #tpu.memory_space<vmem>>, vector<24x128xf32>
    %c9 = arith.constant 9 : index
    %c0_59 = arith.constant 0 : index
    %c0_60 = arith.constant 0 : index
    %60 = vector.load %arg4[%c9, %c0_59, %c0_60] : memref<10x128x128xf32, #tpu.memory_space<vmem>>, vector<1x128x128xf32>
    %61 = vector.shape_cast %60 : vector<1x128x128xf32> to vector<128x128xf32>
    %cst_61 = arith.constant dense<0.000000e+00> : vector<24x128xf32>
    %62 = tpu.matmul %59, %61, %cst_61 {dimension_numbers = #tpu.dot_dimension_numbers<[1], [0], [0], [1], [0, 0, 1, 1], [], []>} : vector<24x128xf32>, vector<128x128xf32>, vector<24x128xf32> -> vector<24x128xf32>
    %63 = arith.addf %58, %62 : vector<24x128xf32>
    %c0_62 = arith.constant 0 : index
    %c0_63 = arith.constant 0 : index
    %64 = vector.load %arg5[%c0_62, %c0_63] : memref<1x128xf32, #tpu.memory_space<vmem>>, vector<1x128xf32>
    %65 = vector.broadcast %64 : vector<1x128xf32> to vector<24x128xf32>
    %66 = arith.addf %63, %65 : vector<24x128xf32>
    %cst_64 = arith.constant 0.000000e+00 : f32
    %67 = vector.broadcast %cst_64 : f32 to vector<24x128xf32>
    %68 = arith.maximumf %66, %67 : vector<24x128xf32>
    %c0_65 = arith.constant 0 : index
    %c0_66 = arith.constant 0 : index
    %69 = vector.load %arg13[%c0_65, %c0_66] : memref<24x128xf32, #tpu.memory_space<vmem>>, vector<24x128xf32>
    tpu.vector_store %arg13[%c0_65, %c0_66], %68 {strides = array<i32>} : memref<24x128xf32, #tpu.memory_space<vmem>>, vector<24x128xf32>,
    %c0_67 = arith.constant 0 : index
    %c0_68 = arith.constant 0 : index
    %70 = vector.load %arg13[%c0_67, %c0_68] : memref<24x128xf32, #tpu.memory_space<vmem>>, vector<20x128xf32>
    %c2_69 = arith.constant 2 : index
    %c0_70 = arith.constant 0 : index
    %71 = vector.load %arg13[%c2_69, %c0_70] : memref<24x128xf32, #tpu.memory_space<vmem>>, vector<20x128xf32>
    %72 = arith.maximumf %70, %71 : vector<20x128xf32>
    %c4_71 = arith.constant 4 : index
    %c0_72 = arith.constant 0 : index
    %73 = vector.load %arg13[%c4_71, %c0_72] : memref<24x128xf32, #tpu.memory_space<vmem>>, vector<20x128xf32>
    %74 = arith.maximumf %72, %73 : vector<20x128xf32>
    %c0_73 = arith.constant 0 : index
    %c0_74 = arith.constant 0 : index
    %75 = vector.load %arg14[%c0_73, %c0_74] : memref<20x128xf32, #tpu.memory_space<vmem>>, vector<20x128xf32>
    tpu.vector_store %arg14[%c0_73, %c0_74], %74 {strides = array<i32>} : memref<20x128xf32, #tpu.memory_space<vmem>>, vector<20x128xf32>,
    %c0_75 = arith.constant 0 : index
    %c0_76 = arith.constant 0 : index
    %76 = vector.load %arg14[%c0_75, %c0_76] : memref<20x128xf32, #tpu.memory_space<vmem>>, vector<2x128xf32>
    %c0_77 = arith.constant 0 : index
    %c0_78 = arith.constant 0 : index
    %c0_79 = arith.constant 0 : index
    %77 = vector.load %arg6[%c0_77, %c0_78, %c0_79] : memref<10x128x128xf32, #tpu.memory_space<vmem>>, vector<1x128x128xf32>
    %78 = vector.shape_cast %77 : vector<1x128x128xf32> to vector<128x128xf32>
    %cst_80 = arith.constant dense<0.000000e+00> : vector<2x128xf32>
    %79 = tpu.matmul %76, %78, %cst_80 {dimension_numbers = #tpu.dot_dimension_numbers<[1], [0], [0], [1], [0, 0, 1, 1], [], []>} : vector<2x128xf32>, vector<128x128xf32>, vector<2x128xf32> -> vector<2x128xf32>
    %c2_81 = arith.constant 2 : index
    %c0_82 = arith.constant 0 : index
    %80 = vector.load %arg14[%c2_81, %c0_82] : memref<20x128xf32, #tpu.memory_space<vmem>>, vector<2x128xf32>
    %c1_83 = arith.constant 1 : index
    %c0_84 = arith.constant 0 : index
    %c0_85 = arith.constant 0 : index
    %81 = vector.load %arg6[%c1_83, %c0_84, %c0_85] : memref<10x128x128xf32, #tpu.memory_space<vmem>>, vector<1x128x128xf32>
    %82 = vector.shape_cast %81 : vector<1x128x128xf32> to vector<128x128xf32>
    %cst_86 = arith.constant dense<0.000000e+00> : vector<2x128xf32>
    %83 = tpu.matmul %80, %82, %cst_86 {dimension_numbers = #tpu.dot_dimension_numbers<[1], [0], [0], [1], [0, 0, 1, 1], [], []>} : vector<2x128xf32>, vector<128x128xf32>, vector<2x128xf32> -> vector<2x128xf32>
    %84 = arith.addf %79, %83 : vector<2x128xf32>
    %c4_87 = arith.constant 4 : index
    %c0_88 = arith.constant 0 : index
    %85 = vector.load %arg14[%c4_87, %c0_88] : memref<20x128xf32, #tpu.memory_space<vmem>>, vector<2x128xf32>
    %c2_89 = arith.constant 2 : index
    %c0_90 = arith.constant 0 : index
    %c0_91 = arith.constant 0 : index
    %86 = vector.load %arg6[%c2_89, %c0_90, %c0_91] : memref<10x128x128xf32, #tpu.memory_space<vmem>>, vector<1x128x128xf32>
    %87 = vector.shape_cast %86 : vector<1x128x128xf32> to vector<128x128xf32>
    %cst_92 = arith.constant dense<0.000000e+00> : vector<2x128xf32>
    %88 = tpu.matmul %85, %87, %cst_92 {dimension_numbers = #tpu.dot_dimension_numbers<[1], [0], [0], [1], [0, 0, 1, 1], [], []>} : vector<2x128xf32>, vector<128x128xf32>, vector<2x128xf32> -> vector<2x128xf32>
    %89 = arith.addf %84, %88 : vector<2x128xf32>
    %c6_93 = arith.constant 6 : index
    %c0_94 = arith.constant 0 : index
    %90 = vector.load %arg14[%c6_93, %c0_94] : memref<20x128xf32, #tpu.memory_space<vmem>>, vector<2x128xf32>
    %c3_95 = arith.constant 3 : index
    %c0_96 = arith.constant 0 : index
    %c0_97 = arith.constant 0 : index
    %91 = vector.load %arg6[%c3_95, %c0_96, %c0_97] : memref<10x128x128xf32, #tpu.memory_space<vmem>>, vector<1x128x128xf32>
    %92 = vector.shape_cast %91 : vector<1x128x128xf32> to vector<128x128xf32>
    %cst_98 = arith.constant dense<0.000000e+00> : vector<2x128xf32>
    %93 = tpu.matmul %90, %92, %cst_98 {dimension_numbers = #tpu.dot_dimension_numbers<[1], [0], [0], [1], [0, 0, 1, 1], [], []>} : vector<2x128xf32>, vector<128x128xf32>, vector<2x128xf32> -> vector<2x128xf32>
    %94 = arith.addf %89, %93 : vector<2x128xf32>
    %c8_99 = arith.constant 8 : index
    %c0_100 = arith.constant 0 : index
    %95 = vector.load %arg14[%c8_99, %c0_100] : memref<20x128xf32, #tpu.memory_space<vmem>>, vector<2x128xf32>
    %c4_101 = arith.constant 4 : index
    %c0_102 = arith.constant 0 : index
    %c0_103 = arith.constant 0 : index
    %96 = vector.load %arg6[%c4_101, %c0_102, %c0_103] : memref<10x128x128xf32, #tpu.memory_space<vmem>>, vector<1x128x128xf32>
    %97 = vector.shape_cast %96 : vector<1x128x128xf32> to vector<128x128xf32>
    %cst_104 = arith.constant dense<0.000000e+00> : vector<2x128xf32>
    %98 = tpu.matmul %95, %97, %cst_104 {dimension_numbers = #tpu.dot_dimension_numbers<[1], [0], [0], [1], [0, 0, 1, 1], [], []>} : vector<2x128xf32>, vector<128x128xf32>, vector<2x128xf32> -> vector<2x128xf32>
    %99 = arith.addf %94, %98 : vector<2x128xf32>
    %c10_105 = arith.constant 10 : index
    %c0_106 = arith.constant 0 : index
    %100 = vector.load %arg14[%c10_105, %c0_106] : memref<20x128xf32, #tpu.memory_space<vmem>>, vector<2x128xf32>
    %c5_107 = arith.constant 5 : index
    %c0_108 = arith.constant 0 : index
    %c0_109 = arith.constant 0 : index
    %101 = vector.load %arg6[%c5_107, %c0_108, %c0_109] : memref<10x128x128xf32, #tpu.memory_space<vmem>>, vector<1x128x128xf32>
    %102 = vector.shape_cast %101 : vector<1x128x128xf32> to vector<128x128xf32>
    %cst_110 = arith.constant dense<0.000000e+00> : vector<2x128xf32>
    %103 = tpu.matmul %100, %102, %cst_110 {dimension_numbers = #tpu.dot_dimension_numbers<[1], [0], [0], [1], [0, 0, 1, 1], [], []>} : vector<2x128xf32>, vector<128x128xf32>, vector<2x128xf32> -> vector<2x128xf32>
    %104 = arith.addf %99, %103 : vector<2x128xf32>
    %c12_111 = arith.constant 12 : index
    %c0_112 = arith.constant 0 : index
    %105 = vector.load %arg14[%c12_111, %c0_112] : memref<20x128xf32, #tpu.memory_space<vmem>>, vector<2x128xf32>
    %c6_113 = arith.constant 6 : index
    %c0_114 = arith.constant 0 : index
    %c0_115 = arith.constant 0 : index
    %106 = vector.load %arg6[%c6_113, %c0_114, %c0_115] : memref<10x128x128xf32, #tpu.memory_space<vmem>>, vector<1x128x128xf32>
    %107 = vector.shape_cast %106 : vector<1x128x128xf32> to vector<128x128xf32>
    %cst_116 = arith.constant dense<0.000000e+00> : vector<2x128xf32>
    %108 = tpu.matmul %105, %107, %cst_116 {dimension_numbers = #tpu.dot_dimension_numbers<[1], [0], [0], [1], [0, 0, 1, 1], [], []>} : vector<2x128xf32>, vector<128x128xf32>, vector<2x128xf32> -> vector<2x128xf32>
    %109 = arith.addf %104, %108 : vector<2x128xf32>
    %c14_117 = arith.constant 14 : index
    %c0_118 = arith.constant 0 : index
    %110 = vector.load %arg14[%c14_117, %c0_118] : memref<20x128xf32, #tpu.memory_space<vmem>>, vector<2x128xf32>
    %c7_119 = arith.constant 7 : index
    %c0_120 = arith.constant 0 : index
    %c0_121 = arith.constant 0 : index
    %111 = vector.load %arg6[%c7_119, %c0_120, %c0_121] : memref<10x128x128xf32, #tpu.memory_space<vmem>>, vector<1x128x128xf32>
    %112 = vector.shape_cast %111 : vector<1x128x128xf32> to vector<128x128xf32>
    %cst_122 = arith.constant dense<0.000000e+00> : vector<2x128xf32>
    %113 = tpu.matmul %110, %112, %cst_122 {dimension_numbers = #tpu.dot_dimension_numbers<[1], [0], [0], [1], [0, 0, 1, 1], [], []>} : vector<2x128xf32>, vector<128x128xf32>, vector<2x128xf32> -> vector<2x128xf32>
    %114 = arith.addf %109, %113 : vector<2x128xf32>
    %c16_123 = arith.constant 16 : index
    %c0_124 = arith.constant 0 : index
    %115 = vector.load %arg14[%c16_123, %c0_124] : memref<20x128xf32, #tpu.memory_space<vmem>>, vector<2x128xf32>
    %c8_125 = arith.constant 8 : index
    %c0_126 = arith.constant 0 : index
    %c0_127 = arith.constant 0 : index
    %116 = vector.load %arg6[%c8_125, %c0_126, %c0_127] : memref<10x128x128xf32, #tpu.memory_space<vmem>>, vector<1x128x128xf32>
    %117 = vector.shape_cast %116 : vector<1x128x128xf32> to vector<128x128xf32>
    %cst_128 = arith.constant dense<0.000000e+00> : vector<2x128xf32>
    %118 = tpu.matmul %115, %117, %cst_128 {dimension_numbers = #tpu.dot_dimension_numbers<[1], [0], [0], [1], [0, 0, 1, 1], [], []>} : vector<2x128xf32>, vector<128x128xf32>, vector<2x128xf32> -> vector<2x128xf32>
    %119 = arith.addf %114, %118 : vector<2x128xf32>
    %c18_129 = arith.constant 18 : index
    %c0_130 = arith.constant 0 : index
    %120 = vector.load %arg14[%c18_129, %c0_130] : memref<20x128xf32, #tpu.memory_space<vmem>>, vector<2x128xf32>
    %c9_131 = arith.constant 9 : index
    %c0_132 = arith.constant 0 : index
    %c0_133 = arith.constant 0 : index
    %121 = vector.load %arg6[%c9_131, %c0_132, %c0_133] : memref<10x128x128xf32, #tpu.memory_space<vmem>>, vector<1x128x128xf32>
    %122 = vector.shape_cast %121 : vector<1x128x128xf32> to vector<128x128xf32>
    %cst_134 = arith.constant dense<0.000000e+00> : vector<2x128xf32>
    %123 = tpu.matmul %120, %122, %cst_134 {dimension_numbers = #tpu.dot_dimension_numbers<[1], [0], [0], [1], [0, 0, 1, 1], [], []>} : vector<2x128xf32>, vector<128x128xf32>, vector<2x128xf32> -> vector<2x128xf32>
    %124 = arith.addf %119, %123 : vector<2x128xf32>
    %c0_135 = arith.constant 0 : index
    %c0_136 = arith.constant 0 : index
    %125 = vector.load %arg7[%c0_135, %c0_136] : memref<1x128xf32, #tpu.memory_space<vmem>>, vector<1x128xf32>
    %126 = vector.broadcast %125 : vector<1x128xf32> to vector<2x128xf32>
    %127 = arith.addf %124, %126 : vector<2x128xf32>
    %cst_137 = arith.constant 0.000000e+00 : f32
    %128 = vector.broadcast %cst_137 : f32 to vector<2x128xf32>
    %129 = arith.maximumf %127, %128 : vector<2x128xf32>
    %c0_138 = arith.constant 0 : index
    %c0_139 = arith.constant 0 : index
    %130 = vector.load %arg8[%c0_138, %c0_139] : memref<128x128xf32, #tpu.memory_space<vmem>>, vector<128x128xf32>
    %cst_140 = arith.constant dense<0.000000e+00> : vector<2x128xf32>
    %131 = tpu.matmul %129, %130, %cst_140 {dimension_numbers = #tpu.dot_dimension_numbers<[1], [0], [0], [1], [0, 0, 1, 1], [], []>} : vector<2x128xf32>, vector<128x128xf32>, vector<2x128xf32> -> vector<2x128xf32>
    %c0_141 = arith.constant 0 : index
    %c0_142 = arith.constant 0 : index
    %132 = vector.load %arg9[%c0_141, %c0_142] : memref<1x128xf32, #tpu.memory_space<vmem>>, vector<1x128xf32>
    %133 = vector.broadcast %132 : vector<1x128xf32> to vector<2x128xf32>
    %134 = arith.addf %131, %133 : vector<2x128xf32>
    %135 = arith.negf %134 : vector<2x128xf32>
    %136 = math.exp %135 : vector<2x128xf32>
    %cst_143 = arith.constant 1.000000e+00 : f32
    %137 = vector.broadcast %cst_143 : f32 to vector<2x128xf32>
    %138 = arith.addf %137, %136 : vector<2x128xf32>
    %139 = arith.divf %137, %138 : vector<2x128xf32>
    %c0_144 = arith.constant 0 : index
    %c0_145 = arith.constant 0 : index
    %140 = vector.load %arg10[%c0_144, %c0_145] : memref<2x128xf32, #tpu.memory_space<vmem>>, vector<2x128xf32>
    tpu.vector_store %arg10[%c0_144, %c0_145], %139 {strides = array<i32>} : memref<2x128xf32, #tpu.memory_space<vmem>>, vector<2x128xf32>,
    return
  }
  func.func @transform_0(%arg0: i32) -> (i32, i32) {
    %c0_i32 = arith.constant 0 : i32
    %c0_i32_0 = arith.constant 0 : i32
    return %arg0, %c0_i32 : i32, i32
  }
  func.func @transform_1(%arg0: i32) -> (i32, i32) {
    %c0_i32 = arith.constant 0 : i32
    %c0_i32_0 = arith.constant 0 : i32
    %c0_i32_1 = arith.constant 0 : i32
    return %c0_i32, %c0_i32_0 : i32, i32
  }
  func.func @transform_2(%arg0: i32) -> (i32, i32) {
    %c0_i32 = arith.constant 0 : i32
    %c0_i32_0 = arith.constant 0 : i32
    %c0_i32_1 = arith.constant 0 : i32
    return %c0_i32, %c0_i32_0 : i32, i32
  }
  func.func @transform_3(%arg0: i32) -> (i32, i32, i32) {
    %c0_i32 = arith.constant 0 : i32
    %c0_i32_0 = arith.constant 0 : i32
    %c0_i32_1 = arith.constant 0 : i32
    %c0_i32_2 = arith.constant 0 : i32
    return %c0_i32, %c0_i32_0, %c0_i32_1 : i32, i32, i32
  }
  func.func @transform_4(%arg0: i32) -> (i32, i32) {
    %c0_i32 = arith.constant 0 : i32
    %c0_i32_0 = arith.constant 0 : i32
    %c0_i32_1 = arith.constant 0 : i32
    return %c0_i32, %c0_i32_0 : i32, i32
  }
  func.func @transform_5(%arg0: i32) -> (i32, i32, i32) {
    %c0_i32 = arith.constant 0 : i32
    %c0_i32_0 = arith.constant 0 : i32
    %c0_i32_1 = arith.constant 0 : i32
    %c0_i32_2 = arith.constant 0 : i32
    return %c0_i32, %c0_i32_0, %c0_i32_1 : i32, i32, i32
  }
  func.func @transform_6(%arg0: i32) -> (i32, i32) {
    %c0_i32 = arith.constant 0 : i32
    %c0_i32_0 = arith.constant 0 : i32
    %c0_i32_1 = arith.constant 0 : i32
    return %c0_i32, %c0_i32_0 : i32, i32
  }
  func.func @transform_7(%arg0: i32) -> (i32, i32) {
    %c0_i32 = arith.constant 0 : i32
    %c0_i32_0 = arith.constant 0 : i32
    %c0_i32_1 = arith.constant 0 : i32
    return %c0_i32, %c0_i32_0 : i32, i32
  }
  func.func @transform_8(%arg0: i32) -> (i32, i32) {
    %c0_i32 = arith.constant 0 : i32
    %c0_i32_0 = arith.constant 0 : i32
    %c0_i32_1 = arith.constant 0 : i32
    return %c0_i32, %c0_i32_0 : i32, i32
  }
  func.func @transform_9(%arg0: i32) -> (i32, i32) {
    %c0_i32 = arith.constant 0 : i32
    %c0_i32_0 = arith.constant 0 : i32
    return %arg0, %c0_i32 : i32, i32
  }
}

</mosaic_0001>

<llo_original>
// kernel: cnn_forward.1
$region0: #{cnn_forward.1}
  #allocation0 [shape = 'u32[]', space=smem, size = 0x4, offset = 0x4, fixed_abs, tag = 'smem constant byte address 0x4 - core index']
  #allocation1 [shape = 'u32[144,128]{1,0:T(1,128)}', space=vmem, size = 0x12000, scoped, tag = 'internal scratch']
  #allocation2 [shape = 'f32[46,128]{1,0:T(8,128)}', space=vmem, size = 0x6000, scoped, tag = 'scratch operand']
  #allocation3 [shape = 'f32[42,128]{1,0:T(8,128)}', space=vmem, size = 0x6000, scoped, tag = 'scratch operand']
  #allocation4 [shape = 'f32[24,128]{1,0:T(8,128)}', space=vmem, size = 0x3000, scoped, tag = 'scratch operand']
  #allocation5 [shape = 'f32[20,128]{1,0:T(8,128)}', space=vmem, size = 0x3000, scoped, tag = 'scratch operand']
  %s0 = inlined_call_operand.vmem [shape: f32[46,280], index: 0, kind: input, shape index: {}]
  %s1 = inlined_call_operand.vmem [shape: f32[280,128], index: 1, kind: input, shape index: {}]
  %s2 = inlined_call_operand.vmem [shape: f32[1,128], index: 2, kind: input, shape index: {}]
  %s3 = inlined_call_operand.vmem [shape: f32[10,128,128], index: 3, kind: input, shape index: {}]
  %s4 = inlined_call_operand.vmem [shape: f32[1,128], index: 4, kind: input, shape index: {}]
  %s5 = inlined_call_operand.vmem [shape: f32[10,128,128], index: 5, kind: input, shape index: {}]
  %s6 = inlined_call_operand.vmem [shape: f32[1,128], index: 6, kind: input, shape index: {}]
  %s7 = inlined_call_operand.vmem [shape: f32[128,128], index: 7, kind: input, shape index: {}]
  %s8 = inlined_call_operand.vmem [shape: f32[1,128], index: 8, kind: input, shape index: {}]
  %s9 = inlined_call_operand.hbm [shape: f32[2,128], index: 9, kind: output, shape index: {}]
  %s10 = sld [smem:[#allocation0]]
  $region46: #{cnn_forward.1} parent=0
    _
  %s12 = ssub.s32 1, %s10
  %s13 = scalar_select 0, %s12, %s10
  $region1: #{cnn_forward.1} parent=0
    #allocation6 [shape = 'u8[1024]{0}', space=vmem, size = 0x400, scoped, tag = 'output window, operand 0, single buffered']
    #allocation7 [shape = 's32[1]{0}', space=sflag, size = 0x4, scoped, tag = 'scoped memory for cnn_forward.1']
    %14 = vsyncpa [#allocation7], 0
    // Predicated region
    $region2: #{cnn_forward.1} parent=1 // pred_check
      _
    $region3: #{cnn_forward.1} parent=1 // pred_check_branch
      %16 = sbr.rel (0) target = $region5
    $region4: #{cnn_forward.1} parent=1 // pred_region
      _
    $region5: #{cnn_forward.1} parent=1 // pred_fallthru
      _
    // Predicated region
    $region6: #{cnn_forward.1} parent=1 // pred_check
      _
    $region7: #{cnn_forward.1} parent=1 // pred_check_branch
      %18 = sbr.rel (0) target = $region9
    $region8: #{cnn_forward.1} parent=1 // pred_region
      _
    $region9: #{cnn_forward.1} parent=1 // pred_fallthru
      _
    // Predicated region
    $region10: #{cnn_forward.1} parent=1 // pred_check
      _
    $region11: #{cnn_forward.1} parent=1 // pred_check_branch
      %20 = sbr.rel (0) target = $region13
    $region12: #{cnn_forward.1} parent=1 // pred_region
      _
    $region13: #{cnn_forward.1} parent=1 // pred_fallthru
      _
    // Predicated region
    $region14: #{cnn_forward.1} parent=1 // pred_check
      _
    $region15: #{cnn_forward.1} parent=1 // pred_check_branch
      %22 = sbr.rel (0) target = $region17
    $region16: #{cnn_forward.1} parent=1 // pred_region
      _
    $region17: #{cnn_forward.1} parent=1 // pred_fallthru
      _
    // Predicated region
    $region18: #{cnn_forward.1} parent=1 // pred_check
      _
    $region19: #{cnn_forward.1} parent=1 // pred_check_branch
      %24 = sbr.rel (0) target = $region21
    $region20: #{cnn_forward.1} parent=1 // pred_region
      _
    $region21: #{cnn_forward.1} parent=1 // pred_fallthru
      _
    // Predicated region
    $region22: #{cnn_forward.1} parent=1 // pred_check
      _
    $region23: #{cnn_forward.1} parent=1 // pred_check_branch
      %26 = sbr.rel (0) target = $region25
    $region24: #{cnn_forward.1} parent=1 // pred_region
      _
    $region25: #{cnn_forward.1} parent=1 // pred_fallthru
      _
    // Predicated region
    $region26: #{cnn_forward.1} parent=1 // pred_check
      _
    $region27: #{cnn_forward.1} parent=1 // pred_check_branch
      %28 = sbr.rel (0) target = $region29
    $region28: #{cnn_forward.1} parent=1 // pred_region
      _
    $region29: #{cnn_forward.1} parent=1 // pred_fallthru
      _
    // Predicated region
    $region30: #{cnn_forward.1} parent=1 // pred_check
      _
    $region31: #{cnn_forward.1} parent=1 // pred_check_branch
      %30 = sbr.rel (0) target = $region33
    $region32: #{cnn_forward.1} parent=1 // pred_region
      _
    $region33: #{cnn_forward.1} parent=1 // pred_fallthru
      _
    // Predicated region
    $region34: #{cnn_forward.1} parent=1 // pred_check
      _
    $region35: #{cnn_forward.1} parent=1 // pred_check_branch
      %32 = sbr.rel (0) target = $region37
    $region36: #{cnn_forward.1} parent=1 // pred_region
      _
    $region37: #{cnn_forward.1} parent=1 // pred_fallthru
      _
    %v33 = vld [vmem:[%s0] sm:$0xff]
    %v34 = vld [vmem:[%s0 + $0x8] sm:$0xff]
    %v35 = vld [vmem:[%s0 + $0x10] sm:$0xff]
    %v36 = vld [vmem:[%s0 + $0x18] sm:$0xff]
    %v37 = vld [vmem:[%s0 + $0x20] sm:$0xff]
    %v38 = vld [vmem:[%s0 + $0x28] sm:$0xff]
    %v39 = vld [vmem:[%s0 + $0x30] sm:$0xff]
    %v40 = vld [vmem:[%s0 + $0x38] sm:$0xff]
    %v41 = vld [vmem:[%s0 + $0x40] sm:$0xff]
    %v42 = vld [vmem:[%s0 + $0x48] sm:$0xff]
    %v43 = vld [vmem:[%s0 + $0x50] sm:$0xff]
    %v44 = vld [vmem:[%s0 + $0x58] sm:$0xff]
    %v45 = vld [vmem:[%s0 + $0x60] sm:$0xff]
    %v46 = vld [vmem:[%s0 + $0x68] sm:$0xff]
    %v47 = vld [vmem:[%s0 + $0x70] sm:$0xff]
    %v48 = vld [vmem:[%s0 + $0x78] sm:$0x3f]
    %v49 = vld [vmem:[%s0 + $0x80] sm:$0x3f]
    %v50 = vld [vmem:[%s0 + $0x88] sm:$0x3f]
    %v51 = vld [vmem:[%s1] sm:$0xff]
    %v52 = vld [vmem:[%s1 + $0x8] sm:$0xff]
    %v53 = vld [vmem:[%s1 + $0x10] sm:$0xff]
    %v54 = vld [vmem:[%s1 + $0x18] sm:$0xff]
    %v55 = vld [vmem:[%s1 + $0x20] sm:$0xff]
    %v56 = vld [vmem:[%s1 + $0x28] sm:$0xff]
    %v57 = vld [vmem:[%s1 + $0x30] sm:$0xff]
    %v58 = vld [vmem:[%s1 + $0x38] sm:$0xff]
    %v59 = vld [vmem:[%s1 + $0x40] sm:$0xff]
    %v60 = vld [vmem:[%s1 + $0x48] sm:$0xff]
    %v61 = vld [vmem:[%s1 + $0x50] sm:$0xff]
    %v62 = vld [vmem:[%s1 + $0x58] sm:$0xff]
    %v63 = vld [vmem:[%s1 + $0x60] sm:$0xff]
    %v64 = vld [vmem:[%s1 + $0x68] sm:$0xff]
    %v65 = vld [vmem:[%s1 + $0x70] sm:$0xff]
    %v66 = vld [vmem:[%s1 + $0x78] sm:$0xff]
    %v67 = vld [vmem:[%s1 + $0x80] sm:$0xff]
    %v68 = vld [vmem:[%s1 + $0x88] sm:$0xff]
    %v69 = vld [vmem:[%s1 + $0x90] sm:$0xff]
    %v70 = vld [vmem:[%s1 + $0x98] sm:$0xff]
    %v71 = vld [vmem:[%s1 + $0xa0] sm:$0xff]
    %v72 = vld [vmem:[%s1 + $0xa8] sm:$0xff]
    %v73 = vld [vmem:[%s1 + $0xb0] sm:$0xff]
    %v74 = vld [vmem:[%s1 + $0xb8] sm:$0xff]
    %v75 = vld [vmem:[%s1 + $0xc0] sm:$0xff]
    %v76 = vld [vmem:[%s1 + $0xc8] sm:$0xff]
    %v77 = vld [vmem:[%s1 + $0xd0] sm:$0xff]
    %v78 = vld [vmem:[%s1 + $0xd8] sm:$0xff]
    %v79 = vld [vmem:[%s1 + $0xe0] sm:$0xff]
    %v80 = vld [vmem:[%s1 + $0xe8] sm:$0xff]
    %v81 = vld [vmem:[%s1 + $0xf0] sm:$0xff]
    %v82 = vld [vmem:[%s1 + $0xf8] sm:$0xff]
    %v83 = vld [vmem:[%s1 + $0x100] sm:$0xff]
    %v84 = vld [vmem:[%s1 + $0x108] sm:$0xff]
    %v85 = vld [vmem:[%s1 + $0x110] sm:$0xff]
    %v86 = vld [vmem:[%s2] sm:$0x1]
    %v88 = vlaneseq
    %v89 = vshrl.u32 %v88, 7
    %v90 = vsub.s32 0, %v89
    %v91 = vrot.slane %v86, %v90
    %vm93 = vcmask 195584
    %v95 = vsel %vm93, %v35, 0
    %v98 = vsel %vm93, %v38, 0
    %v101 = vsel %vm93, %v41, 0
    %v104 = vsel %vm93, %v44, 0
    %v107 = vsel %vm93, %v47, 0
    %v110 = vsel %vm93, %v50, 0
    %112 = vmatprep.subr.mxu0 0.0
    %113 = vmatpush1.msra.mxu0 %v51
    %114 = vmatprep.subr.mxu0 0.0
    %115 = vmatpush1.msra.mxu0 %v52
    %116 = vmatprep.subr.mxu0 0.0
    %117 = vmatpush1.msra.mxu0 %v53
    %118 = vmatprep.subr.mxu0 0.0
    %119 = vmatpush1.msra.mxu0 %v54
    %120 = vmatprep.subr.mxu0 0.0
    %121 = vmatpush1.msra.mxu0 %v55
    %122 = vmatprep.subr.mxu0 0.0
    %123 = vmatpush1.msra.mxu0 %v56
    %124 = vmatprep.subr.mxu0 0.0
    %125 = vmatpush1.msra.mxu0 %v57
    %126 = vmatprep.subr.mxu0 0.0
    %127 = vmatpush1.msra.mxu0 %v58
    %128 = vmatprep.subr.mxu0 0.0
    %129 = vmatpush1.msra.mxu0 %v59
    %130 = vmatprep.subr.mxu0 0.0
    %131 = vmatpush1.msra.mxu0 %v60
    %132 = vmatprep.subr.mxu0 0.0
    %133 = vmatpush1.msra.mxu0 %v61
    %134 = vmatprep.subr.mxu0 0.0
    %135 = vmatpush1.msra.mxu0 %v62
    %136 = vmatprep.subr.mxu0 0.0
    %137 = vmatpush1.msra.mxu0 %v63
    %138 = vmatprep.subr.mxu0 0.0
    %139 = vmatpush1.msra.mxu0 %v64
    %140 = vmatprep.subr.mxu0 0.0
    %141 = vmatpush1.msra.mxu0 %v65
    %142 = vmatprep.subr.mxu0 0.0
    %143 = vmatpush1.msra.mxu0 %v66
    %144 = vmatprep.subr.mxu0 0.0
    %145 = vmatpush1.msra.mxu0 %v67
    %146 = vmatprep.subr.mxu0 0.0
    %147 = vmatpush1.msra.mxu0 %v68
    %148 = vmatprep.subr.mxu0 0.0
    %149 = vmatpush1.msra.mxu0 %v69
    %150 = vmatprep.subr.mxu0 0.0
    %151 = vmatpush1.msra.mxu0 %v70
    %152 = vmatprep.subr.mxu0 0.0
    %153 = vmatpush1.msra.mxu0 %v71
    %154 = vmatprep.subr.mxu0 0.0
    %155 = vmatpush1.msra.mxu0 %v72
    %156 = vmatprep.subr.mxu0 0.0
    %157 = vmatpush1.msra.mxu0 %v73
    %158 = vmatprep.subr.mxu0 0.0
    %159 = vmatpush1.msra.mxu0 %v74
    %160 = vmatprep.subr.mxu0 0.0
    %161 = vmatpush1.msra.mxu0 %v75
    %162 = vmatprep.subr.mxu0 0.0
    %163 = vmatpush1.msra.mxu0 %v76
    %164 = vmatprep.subr.mxu0 0.0
    %165 = vmatpush1.msra.mxu0 %v77
    %166 = vmatprep.subr.mxu0 0.0
    %167 = vmatpush1.msra.mxu0 %v78
    %168 = vmatprep.subr.mxu0 0.0
    %169 = vmatpush1.msra.mxu0 %v79
    %170 = vmatprep.subr.mxu0 0.0
    %171 = vmatpush1.msra.mxu0 %v80
    %172 = vmatprep.subr.mxu0 0.0
    %173 = vmatpush1.msra.mxu0 %v81
    %174 = vmatprep.subr.mxu0 0.0
    %175 = vmatpush1.msra.mxu0 %v82
    %176 = vmatprep.mubr.f32.mxu0 %v34
    %177 = vmatmul.mubr.f32.gmra.mrb[0].mxu0 %v33
    %v178 = vpop.f32.mrb[0].mxu0
    %v179 = vadd.f32 %v91, %v178
    %v180 = vpop.f32.mrb[0].mxu0
    %181 = vmatprep.mubr.f32.mxu0 %v37
    %182 = vmatmul.mubr.f32.gmra.mrb[0].mxu0 %v36
    %v183 = vpop.f32.mrb[0].mxu0
    %v184 = vadd.f32 %v91, %v183
    %v185 = vpop.f32.mrb[0].mxu0
    %186 = vmatprep.mubr.f32.mxu0 %v40
    %187 = vmatmul.mubr.f32.gmra.mrb[0].mxu0 %v39
    %v188 = vpop.f32.mrb[0].mxu0
    %v189 = vadd.f32 %v91, %v188
    %v190 = vpop.f32.mrb[0].mxu0
    %191 = vmatprep.mubr.f32.mxu0 %v43
    %192 = vmatmul.mubr.f32.gmra.mrb[0].mxu0 %v42
    %v193 = vpop.f32.mrb[0].mxu0
    %v194 = vadd.f32 %v91, %v193
    %v195 = vpop.f32.mrb[0].mxu0
    %196 = vmatprep.mubr.f32.mxu0 %v46
    %197 = vmatmul.mubr.f32.gmra.mrb[0].mxu0 %v45
    %v198 = vpop.f32.mrb[0].mxu0
    %v199 = vadd.f32 %v91, %v198
    %v200 = vpop.f32.mrb[0].mxu0
    %201 = vmatprep.mubr.f32.mxu0 %v49
    %202 = vmatmul.mubr.f32.gmra.mrb[0].mxu0 %v48
    %v203 = vpop.f32.mrb[0].mxu0
    %v204 = vadd.f32 %v91, %v203
    %v205 = vpop.f32.mrb[0].mxu0
    %206 = vdwg.mxu0
    %207 = vmatprep.subr.mxu0 0.0
    %208 = vmatpush1.msra.mxu0 %v83
    %209 = vmatprep.subr.mxu0 0.0
    %210 = vmatpush1.msra.mxu0 %v84
    %211 = vmatprep.subr.mxu0 0.0
    %212 = vmatpush1.msra.mxu0 %v85
    %213 = vmatprep.subr.mxu0 0.0
    %214 = vmatpush1.msra.mxu0 0.0
    %215 = vmatprep.subr.mxu0 0.0
    %216 = vmatpush1.msra.mxu0 0.0
    %217 = vmatprep.subr.mxu0 0.0
    %218 = vmatpush1.msra.mxu0 0.0
    %219 = vmatprep.subr.mxu0 0.0
    %220 = vmatpush1.msra.mxu0 0.0
    %221 = vmatprep.subr.mxu0 0.0
    %222 = vmatpush1.msra.mxu0 0.0
    %223 = vmatprep.subr.mxu0 0.0
    %224 = vmatpush1.msra.mxu0 0.0
    %225 = vmatprep.subr.mxu0 0.0
    %226 = vmatpush1.msra.mxu0 0.0
    %227 = vmatprep.subr.mxu0 0.0
    %228 = vmatpush1.msra.mxu0 0.0
    %229 = vmatprep.subr.mxu0 0.0
    %230 = vmatpush1.msra.mxu0 0.0
    %231 = vmatprep.subr.mxu0 0.0
    %232 = vmatpush1.msra.mxu0 0.0
    %233 = vmatprep.subr.mxu0 0.0
    %234 = vmatpush1.msra.mxu0 0.0
    %235 = vmatprep.subr.mxu0 0.0
    %236 = vmatpush1.msra.mxu0 0.0
    %237 = vmatprep.subr.mxu0 0.0
    %238 = vmatpush1.msra.mxu0 0.0
    %239 = vmatprep.subr.mxu0 0.0
    %240 = vmatpush1.msra.mxu0 0.0
    %241 = vmatprep.subr.mxu0 0.0
    %242 = vmatpush1.msra.mxu0 0.0
    %243 = vmatprep.subr.mxu0 0.0
    %244 = vmatpush1.msra.mxu0 0.0
    %245 = vmatprep.subr.mxu0 0.0
    %246 = vmatpush1.msra.mxu0 0.0
    %247 = vmatprep.subr.mxu0 0.0
    %248 = vmatpush1.msra.mxu0 0.0
    %249 = vmatprep.subr.mxu0 0.0
    %250 = vmatpush1.msra.mxu0 0.0
    %251 = vmatprep.subr.mxu0 0.0
    %252 = vmatpush1.msra.mxu0 0.0
    %253 = vmatprep.subr.mxu0 0.0
    %254 = vmatpush1.msra.mxu0 0.0
    %255 = vmatprep.subr.mxu0 0.0
    %256 = vmatpush1.msra.mxu0 0.0
    %257 = vmatprep.subr.mxu0 0.0
    %258 = vmatpush1.msra.mxu0 0.0
    %259 = vmatprep.subr.mxu0 0.0
    %260 = vmatpush1.msra.mxu0 0.0
    %261 = vmatprep.subr.mxu0 0.0
    %262 = vmatpush1.msra.mxu0 0.0
    %263 = vmatprep.subr.mxu0 0.0
    %264 = vmatpush1.msra.mxu0 0.0
    %265 = vmatprep.subr.mxu0 0.0
    %266 = vmatpush1.msra.mxu0 0.0
    %267 = vmatprep.subr.mxu0 0.0
    %268 = vmatpush1.msra.mxu0 0.0
    %269 = vmatprep.subr.mxu0 0.0
    %270 = vmatpush1.msra.mxu0 0.0
    %271 = vmatprep.mubr.f32.mxu0 0.0
    %272 = vmatmul.mubr.f32.gmra.mrb[0].mxu0 %v95
    %v273 = vpop.f32.mrb[0].mxu0
    %v274 = vadd.f32 %v179, %v273
    %v275 = vpop.f32.mrb[0].mxu0
    %276 = vmatprep.mubr.f32.mxu0 0.0
    %277 = vmatmul.mubr.f32.gmra.mrb[0].mxu0 %v98
    %v278 = vpop.f32.mrb[0].mxu0
    %v279 = vadd.f32 %v184, %v278
    %v280 = vpop.f32.mrb[0].mxu0
    %281 = vmatprep.mubr.f32.mxu0 0.0
    %282 = vmatmul.mubr.f32.gmra.mrb[0].mxu0 %v101
    %v283 = vpop.f32.mrb[0].mxu0
    %v284 = vadd.f32 %v189, %v283
    %v285 = vpop.f32.mrb[0].mxu0
    %286 = vmatprep.mubr.f32.mxu0 0.0
    %287 = vmatmul.mubr.f32.gmra.mrb[0].mxu0 %v104
    %v288 = vpop.f32.mrb[0].mxu0
    %v289 = vadd.f32 %v194, %v288
    %v290 = vpop.f32.mrb[0].mxu0
    %291 = vmatprep.mubr.f32.mxu0 0.0
    %292 = vmatmul.mubr.f32.gmra.mrb[0].mxu0 %v107
    %v293 = vpop.f32.mrb[0].mxu0
    %v294 = vadd.f32 %v199, %v293
    %v295 = vpop.f32.mrb[0].mxu0
    %296 = vmatprep.mubr.f32.mxu0 0.0
    %297 = vmatmul.mubr.f32.gmra.mrb[0].mxu0 %v110
    %v298 = vpop.f32.mrb[0].mxu0
    %v299 = vadd.f32 %v204, %v298
    %v300 = vpop.f32.mrb[0].mxu0
    %301 = vdwg.mxu0
    %v302 = vmax.f32 %v274, 0.0
    %v303 = vmax.f32 %v279, 0.0
    %v304 = vmax.f32 %v284, 0.0
    %v305 = vmax.f32 %v289, 0.0
    %v306 = vmax.f32 %v294, 0.0
    %v307 = vmax.f32 %v299, 0.0
    %308 = vst [vmem:[#allocation2] sm:$0xff] %v302
    %309 = vst [vmem:[#allocation2 + $0x8] sm:$0xff] %v303
    %310 = vst [vmem:[#allocation2 + $0x10] sm:$0xff] %v304
    %311 = vst [vmem:[#allocation2 + $0x18] sm:$0xff] %v305
    %312 = vst [vmem:[#allocation2 + $0x20] sm:$0xff] %v306
    %313 = vst [vmem:[#allocation2 + $0x28] sm:$0x3f] %v307
    %v314 = vld [vmem:[#allocation2] sm:$0xff]
    %v315 = vld [vmem:[#allocation2 + $0x8] sm:$0xff]
    %v316 = vld [vmem:[#allocation2 + $0x10] sm:$0xff]
    %v317 = vld [vmem:[#allocation2 + $0x18] sm:$0xff]
    %v318 = vld [vmem:[#allocation2 + $0x20] sm:$0xff]
    %v319 = vld [vmem:[#allocation2 + $0x28] sm:$0x3]
    %v320 = vld [vmem:[#allocation2 + $0x2] sm:$0xff]
    %v321 = vld [vmem:[#allocation2 + $0xa] sm:$0xff]
    %v322 = vld [vmem:[#allocation2 + $0x12] sm:$0xff]
    %v323 = vld [vmem:[#allocation2 + $0x1a] sm:$0xff]
    %v324 = vld [vmem:[#allocation2 + $0x22] sm:$0xff]
    %v325 = vld [vmem:[#allocation2 + $0x2a] sm:$0x3]
    %v326 = vmax.f32 %v314, %v320
    %v327 = vmax.f32 %v315, %v321
    %v328 = vmax.f32 %v316, %v322
    %v329 = vmax.f32 %v317, %v323
    %v330 = vmax.f32 %v318, %v324
    %v331 = vmax.f32 %v319, %v325
    %v332 = vld [vmem:[#allocation2 + $0x4] sm:$0xff]
    %v333 = vld [vmem:[#allocation2 + $0xc] sm:$0xff]
    %v334 = vld [vmem:[#allocation2 + $0x14] sm:$0xff]
    %v335 = vld [vmem:[#allocation2 + $0x1c] sm:$0xff]
    %v336 = vld [vmem:[#allocation2 + $0x24] sm:$0xff]
    %v337 = vld [vmem:[#allocation2 + $0x2c] sm:$0x3]
    %v338 = vmax.f32 %v326, %v332
    %v339 = vmax.f32 %v327, %v333
    %v340 = vmax.f32 %v328, %v334
    %v341 = vmax.f32 %v329, %v335
    %v342 = vmax.f32 %v330, %v336
    %v343 = vmax.f32 %v331, %v337
    %344 = vst [vmem:[#allocation3] sm:$0xff] %v338
    %345 = vst [vmem:[#allocation3 + $0x8] sm:$0xff] %v339
    %346 = vst [vmem:[#allocation3 + $0x10] sm:$0xff] %v340
    %347 = vst [vmem:[#allocation3 + $0x18] sm:$0xff] %v341
    %348 = vst [vmem:[#allocation3 + $0x20] sm:$0xff] %v342
    %349 = vst [vmem:[#allocation3 + $0x28] sm:$0x3] %v343
    %v350 = vld [vmem:[#allocation3] sm:$0xff]
    %v351 = vld [vmem:[#allocation3 + $0x8] sm:$0xff]
    %v352 = vld [vmem:[#allocation3 + $0x10] sm:$0xff]
    %v353 = vld [vmem:[%s3] sm:$0xff]
    %v354 = vld [vmem:[%s3 + $0x8] sm:$0xff]
    %v355 = vld [vmem:[%s3 + $0x10] sm:$0xff]
    %v356 = vld [vmem:[%s3 + $0x18] sm:$0xff]
    %v357 = vld [vmem:[%s3 + $0x20] sm:$0xff]
    %v358 = vld [vmem:[%s3 + $0x28] sm:$0xff]
    %v359 = vld [vmem:[%s3 + $0x30] sm:$0xff]
    %v360 = vld [vmem:[%s3 + $0x38] sm:$0xff]
    %v361 = vld [vmem:[%s3 + $0x40] sm:$0xff]
    %v362 = vld [vmem:[%s3 + $0x48] sm:$0xff]
    %v363 = vld [vmem:[%s3 + $0x50] sm:$0xff]
    %v364 = vld [vmem:[%s3 + $0x58] sm:$0xff]
    %v365 = vld [vmem:[%s3 + $0x60] sm:$0xff]
    %v366 = vld [vmem:[%s3 + $0x68] sm:$0xff]
    %v367 = vld [vmem:[%s3 + $0x70] sm:$0xff]
    %v368 = vld [vmem:[%s3 + $0x78] sm:$0xff]
    %v369 = vld [vmem:[#allocation3 + $0x2] sm:$0xff]
    %v370 = vld [vmem:[#allocation3 + $0xa] sm:$0xff]
    %v371 = vld [vmem:[#allocation3 + $0x12] sm:$0xff]
    %s372 = scalar_lea.vmem %s3, 128
    %v373 = vld [vmem:[%s372] sm:$0xff]
    %v374 = vld [vmem:[%s372 + $0x8] sm:$0xff]
    %v375 = vld [vmem:[%s372 + $0x10] sm:$0xff]
    %v376 = vld [vmem:[%s372 + $0x18] sm:$0xff]
    %v377 = vld [vmem:[%s372 + $0x20] sm:$0xff]
    %v378 = vld [vmem:[%s372 + $0x28] sm:$0xff]
    %v379 = vld [vmem:[%s372 + $0x30] sm:$0xff]
    %v380 = vld [vmem:[%s372 + $0x38] sm:$0xff]
    %v381 = vld [vmem:[%s372 + $0x40] sm:$0xff]
    %v382 = vld [vmem:[%s372 + $0x48] sm:$0xff]
    %v383 = vld [vmem:[%s372 + $0x50] sm:$0xff]
    %v384 = vld [vmem:[%s372 + $0x58] sm:$0xff]
    %v385 = vld [vmem:[%s372 + $0x60] sm:$0xff]
    %v386 = vld [vmem:[%s372 + $0x68] sm:$0xff]
    %v387 = vld [vmem:[%s372 + $0x70] sm:$0xff]
    %v388 = vld [vmem:[%s372 + $0x78] sm:$0xff]
    %389 = vmatprep.subr.mxu0 0.0
    %390 = vmatpush1.msra.mxu0 %v373
    %391 = vmatprep.subr.mxu0 0.0
    %392 = vmatpush1.msra.mxu0 %v374
    %393 = vmatprep.subr.mxu0 0.0
    %394 = vmatpush1.msra.mxu0 %v375
    %395 = vmatprep.subr.mxu0 0.0
    %396 = vmatpush1.msra.mxu0 %v376
    %397 = vmatprep.subr.mxu0 0.0
    %398 = vmatpush1.msra.mxu0 %v377
    %399 = vmatprep.subr.mxu0 0.0
    %400 = vmatpush1.msra.mxu0 %v378
    %401 = vmatprep.subr.mxu0 0.0
    %402 = vmatpush1.msra.mxu0 %v379
    %403 = vmatprep.subr.mxu0 0.0
    %404 = vmatpush1.msra.mxu0 %v380
    %405 = vmatprep.subr.mxu0 0.0
    %406 = vmatpush1.msra.mxu0 %v381
    %407 = vmatprep.subr.mxu0 0.0
    %408 = vmatpush1.msra.mxu0 %v382
    %409 = vmatprep.subr.mxu0 0.0
    %410 = vmatpush1.msra.mxu0 %v383
    %411 = vmatprep.subr.mxu0 0.0
    %412 = vmatpush1.msra.mxu0 %v384
    %413 = vmatprep.subr.mxu0 0.0
    %414 = vmatpush1.msra.mxu0 %v385
    %415 = vmatprep.subr.mxu0 0.0
    %416 = vmatpush1.msra.mxu0 %v386
    %417 = vmatprep.subr.mxu0 0.0
    %418 = vmatpush1.msra.mxu0 %v387
    %419 = vmatprep.subr.mxu0 0.0
    %420 = vmatpush1.msra.mxu0 %v388
    %421 = vmatprep.subr.mxu0 0.0
    %422 = vmatpush1.msra.mxu0 0.0
    %423 = vmatprep.subr.mxu0 0.0
    %424 = vmatpush1.msra.mxu0 0.0
    %425 = vmatprep.subr.mxu0 0.0
    %426 = vmatpush1.msra.mxu0 0.0
    %427 = vmatprep.subr.mxu0 0.0
    %428 = vmatpush1.msra.mxu0 0.0
    %429 = vmatprep.subr.mxu0 0.0
    %430 = vmatpush1.msra.mxu0 0.0
    %431 = vmatprep.subr.mxu0 0.0
    %432 = vmatpush1.msra.mxu0 0.0
    %433 = vmatprep.subr.mxu0 0.0
    %434 = vmatpush1.msra.mxu0 0.0
    %435 = vmatprep.subr.mxu0 0.0
    %436 = vmatpush1.msra.mxu0 0.0
    %437 = vmatprep.subr.mxu0 0.0
    %438 = vmatpush1.msra.mxu0 0.0
    %439 = vmatprep.subr.mxu0 0.0
    %440 = vmatpush1.msra.mxu0 0.0
    %441 = vmatprep.subr.mxu0 0.0
    %442 = vmatpush1.msra.mxu0 0.0
    %443 = vmatprep.subr.mxu0 0.0
    %444 = vmatpush1.msra.mxu0 0.0
    %445 = vmatprep.subr.mxu0 0.0
    %446 = vmatpush1.msra.mxu0 0.0
    %447 = vmatprep.subr.mxu0 0.0
    %448 = vmatpush1.msra.mxu0 0.0
    %449 = vmatprep.subr.mxu0 0.0
    %450 = vmatpush1.msra.mxu0 0.0
    %451 = vmatprep.subr.mxu0 0.0
    %452 = vmatpush1.msra.mxu0 0.0
    %453 = vmatprep.mubr.f32.mxu0 0.0
    %454 = vmatmul.mubr.f32.gmra.mrb[0].mxu0 %v369
    %v455 = vpop.f32.mrb[0].mxu0
    %v456 = vadd.f32 0.0, %v455
    %v457 = vpop.f32.mrb[0].mxu0
    %458 = vmatprep.mubr.f32.mxu0 0.0
    %459 = vmatmul.mubr.f32.gmra.mrb[0].mxu0 %v370
    %v460 = vpop.f32.mrb[0].mxu0
    %v461 = vadd.f32 0.0, %v460
    %v462 = vpop.f32.mrb[0].mxu0
    %463 = vmatprep.mubr.f32.mxu0 0.0
    %464 = vmatmul.mubr.f32.gmra.mrb[0].mxu0 %v371
    %v465 = vpop.f32.mrb[0].mxu0
    %v466 = vadd.f32 0.0, %v465
    %v467 = vpop.f32.mrb[0].mxu0
    %468 = vdwg.mxu0
    %469 = vmatprep.subr.mxu0 0.0
    %470 = vmatpush1.msra.mxu0 %v353
    %471 = vmatprep.subr.mxu0 0.0
    %472 = vmatpush1.msra.mxu0 %v354
    %473 = vmatprep.subr.mxu0 0.0
    %474 = vmatpush1.msra.mxu0 %v355
    %475 = vmatprep.subr.mxu0 0.0
    %476 = vmatpush1.msra.mxu0 %v356
    %477 = vmatprep.subr.mxu0 0.0
    %478 = vmatpush1.msra.mxu0 %v357
    %479 = vmatprep.subr.mxu0 0.0
    %480 = vmatpush1.msra.mxu0 %v358
    %481 = vmatprep.subr.mxu0 0.0
    %482 = vmatpush1.msra.mxu0 %v359
    %483 = vmatprep.subr.mxu0 0.0
    %484 = vmatpush1.msra.mxu0 %v360
    %485 = vmatprep.subr.mxu0 0.0
    %486 = vmatpush1.msra.mxu0 %v361
    %487 = vmatprep.subr.mxu0 0.0
    %488 = vmatpush1.msra.mxu0 %v362
    %489 = vmatprep.subr.mxu0 0.0
    %490 = vmatpush1.msra.mxu0 %v363
    %491 = vmatprep.subr.mxu0 0.0
    %492 = vmatpush1.msra.mxu0 %v364
    %493 = vmatprep.subr.mxu0 0.0
    %494 = vmatpush1.msra.mxu0 %v365
    %495 = vmatprep.subr.mxu0 0.0
    %496 = vmatpush1.msra.mxu0 %v366
    %497 = vmatprep.subr.mxu0 0.0
    %498 = vmatpush1.msra.mxu0 %v367
    %499 = vmatprep.subr.mxu0 0.0
    %500 = vmatpush1.msra.mxu0 %v368
    %501 = vmatprep.subr.mxu0 0.0
    %502 = vmatpush1.msra.mxu0 0.0
    %503 = vmatprep.subr.mxu0 0.0
    %504 = vmatpush1.msra.mxu0 0.0
    %505 = vmatprep.subr.mxu0 0.0
    %506 = vmatpush1.msra.mxu0 0.0
    %507 = vmatprep.subr.mxu0 0.0
    %508 = vmatpush1.msra.mxu0 0.0
    %509 = vmatprep.subr.mxu0 0.0
    %510 = vmatpush1.msra.mxu0 0.0
    %511 = vmatprep.subr.mxu0 0.0
    %512 = vmatpush1.msra.mxu0 0.0
    %513 = vmatprep.subr.mxu0 0.0
    %514 = vmatpush1.msra.mxu0 0.0
    %515 = vmatprep.subr.mxu0 0.0
    %516 = vmatpush1.msra.mxu0 0.0
    %517 = vmatprep.subr.mxu0 0.0
    %518 = vmatpush1.msra.mxu0 0.0
    %519 = vmatprep.subr.mxu0 0.0
    %520 = vmatpush1.msra.mxu0 0.0
    %521 = vmatprep.subr.mxu0 0.0
    %522 = vmatpush1.msra.mxu0 0.0
    %523 = vmatprep.subr.mxu0 0.0
    %524 = vmatpush1.msra.mxu0 0.0
    %525 = vmatprep.subr.mxu0 0.0
    %526 = vmatpush1.msra.mxu0 0.0
    %527 = vmatprep.subr.mxu0 0.0
    %528 = vmatpush1.msra.mxu0 0.0
    %529 = vmatprep.subr.mxu0 0.0
    %530 = vmatpush1.msra.mxu0 0.0
    %531 = vmatprep.subr.mxu0 0.0
    %532 = vmatpush1.msra.mxu0 0.0
    %533 = vmatprep.mubr.f32.mxu0 0.0
    %534 = vmatmul.mubr.f32.gmra.mrb[0].mxu0 %v350
    %v535 = vpop.f32.mrb[0].mxu0
    %v536 = vadd.f32 %v456, %v535
    %v537 = vpop.f32.mrb[0].mxu0
    %538 = vmatprep.mubr.f32.mxu0 0.0
    %539 = vmatmul.mubr.f32.gmra.mrb[0].mxu0 %v351
    %v540 = vpop.f32.mrb[0].mxu0
    %v541 = vadd.f32 %v461, %v540
    %v542 = vpop.f32.mrb[0].mxu0
    %543 = vmatprep.mubr.f32.mxu0 0.0
    %544 = vmatmul.mubr.f32.gmra.mrb[0].mxu0 %v352
    %v545 = vpop.f32.mrb[0].mxu0
    %v546 = vadd.f32 %v466, %v545
    %v547 = vpop.f32.mrb[0].mxu0
    %548 = vdwg.mxu0
    %v549 = vld [vmem:[#allocation3 + $0x4] sm:$0xff]
    %v550 = vld [vmem:[#allocation3 + $0xc] sm:$0xff]
    %v551 = vld [vmem:[#allocation3 + $0x14] sm:$0xff]
    %s552 = scalar_lea.vmem %s3, 256
    %v553 = vld [vmem:[%s552] sm:$0xff]
    %v554 = vld [vmem:[%s552 + $0x8] sm:$0xff]
    %v555 = vld [vmem:[%s552 + $0x10] sm:$0xff]
    %v556 = vld [vmem:[%s552 + $0x18] sm:$0xff]
    %v557 = vld [vmem:[%s552 + $0x20] sm:$0xff]
    %v558 = vld [vmem:[%s552 + $0x28] sm:$0xff]
    %v559 = vld [vmem:[%s552 + $0x30] sm:$0xff]
    %v560 = vld [vmem:[%s552 + $0x38] sm:$0xff]
    %v561 = vld [vmem:[%s552 + $0x40] sm:$0xff]
    %v562 = vld [vmem:[%s552 + $0x48] sm:$0xff]
    %v563 = vld [vmem:[%s552 + $0x50] sm:$0xff]
    %v564 = vld [vmem:[%s552 + $0x58] sm:$0xff]
    %v565 = vld [vmem:[%s552 + $0x60] sm:$0xff]
    %v566 = vld [vmem:[%s552 + $0x68] sm:$0xff]
    %v567 = vld [vmem:[%s552 + $0x70] sm:$0xff]
    %v568 = vld [vmem:[%s552 + $0x78] sm:$0xff]
    %569 = vmatprep.subr.mxu0 0.0
    %570 = vmatpush1.msra.mxu0 %v553
    %571 = vmatprep.subr.mxu0 0.0
    %572 = vmatpush1.msra.mxu0 %v554
    %573 = vmatprep.subr.mxu0 0.0
    %574 = vmatpush1.msra.mxu0 %v555
    %575 = vmatprep.subr.mxu0 0.0
    %576 = vmatpush1.msra.mxu0 %v556
    %577 = vmatprep.subr.mxu0 0.0
    %578 = vmatpush1.msra.mxu0 %v557
    %579 = vmatprep.subr.mxu0 0.0
    %580 = vmatpush1.msra.mxu0 %v558
    %581 = vmatprep.subr.mxu0 0.0
    %582 = vmatpush1.msra.mxu0 %v559
    %583 = vmatprep.subr.mxu0 0.0
    %584 = vmatpush1.msra.mxu0 %v560
    %585 = vmatprep.subr.mxu0 0.0
    %586 = vmatpush1.msra.mxu0 %v561
    %587 = vmatprep.subr.mxu0 0.0
    %588 = vmatpush1.msra.mxu0 %v562
    %589 = vmatprep.subr.mxu0 0.0
    %590 = vmatpush1.msra.mxu0 %v563
    %591 = vmatprep.subr.mxu0 0.0
    %592 = vmatpush1.msra.mxu0 %v564
    %593 = vmatprep.subr.mxu0 0.0
    %594 = vmatpush1.msra.mxu0 %v565
    %595 = vmatprep.subr.mxu0 0.0
    %596 = vmatpush1.msra.mxu0 %v566
    %597 = vmatprep.subr.mxu0 0.0
    %598 = vmatpush1.msra.mxu0 %v567
    %599 = vmatprep.subr.mxu0 0.0
    %600 = vmatpush1.msra.mxu0 %v568
    %601 = vmatprep.subr.mxu0 0.0
    %602 = vmatpush1.msra.mxu0 0.0
    %603 = vmatprep.subr.mxu0 0.0
    %604 = vmatpush1.msra.mxu0 0.0
    %605 = vmatprep.subr.mxu0 0.0
    %606 = vmatpush1.msra.mxu0 0.0
    %607 = vmatprep.subr.mxu0 0.0
    %608 = vmatpush1.msra.mxu0 0.0
    %609 = vmatprep.subr.mxu0 0.0
    %610 = vmatpush1.msra.mxu0 0.0
    %611 = vmatprep.subr.mxu0 0.0
    %612 = vmatpush1.msra.mxu0 0.0
    %613 = vmatprep.subr.mxu0 0.0
    %614 = vmatpush1.msra.mxu0 0.0
    %615 = vmatprep.subr.mxu0 0.0
    %616 = vmatpush1.msra.mxu0 0.0
    %617 = vmatprep.subr.mxu0 0.0
    %618 = vmatpush1.msra.mxu0 0.0
    %619 = vmatprep.subr.mxu0 0.0
    %620 = vmatpush1.msra.mxu0 0.0
    %621 = vmatprep.subr.mxu0 0.0
    %622 = vmatpush1.msra.mxu0 0.0
    %623 = vmatprep.subr.mxu0 0.0
    %624 = vmatpush1.msra.mxu0 0.0
    %625 = vmatprep.subr.mxu0 0.0
    %626 = vmatpush1.msra.mxu0 0.0
    %627 = vmatprep.subr.mxu0 0.0
    %628 = vmatpush1.msra.mxu0 0.0
    %629 = vmatprep.subr.mxu0 0.0
    %630 = vmatpush1.msra.mxu0 0.0
    %631 = vmatprep.subr.mxu0 0.0
    %632 = vmatpush1.msra.mxu0 0.0
    %633 = vmatprep.mubr.f32.mxu0 0.0
    %634 = vmatmul.mubr.f32.gmra.mrb[0].mxu0 %v549
    %v635 = vpop.f32.mrb[0].mxu0
    %v636 = vadd.f32 0.0, %v635
    %v637 = vpop.f32.mrb[0].mxu0
    %638 = vmatprep.mubr.f32.mxu0 0.0
    %639 = vmatmul.mubr.f32.gmra.mrb[0].mxu0 %v550
    %v640 = vpop.f32.mrb[0].mxu0
    %v641 = vadd.f32 0.0, %v640
    %v642 = vpop.f32.mrb[0].mxu0
    %643 = vmatprep.mubr.f32.mxu0 0.0
    %644 = vmatmul.mubr.f32.gmra.mrb[0].mxu0 %v551
    %v645 = vpop.f32.mrb[0].mxu0
    %v646 = vadd.f32 0.0, %v645
    %v647 = vpop.f32.mrb[0].mxu0
    %648 = vdwg.mxu0
    %v649 = vadd.f32 %v536, %v636
    %v650 = vadd.f32 %v541, %v641
    %v651 = vadd.f32 %v546, %v646
    %v652 = vld [vmem:[#allocation3 + $0x6] sm:$0xff]
    %v653 = vld [vmem:[#allocation3 + $0xe] sm:$0xff]
    %v654 = vld [vmem:[#allocation3 + $0x16] sm:$0xff]
    %s655 = scalar_lea.vmem %s3, 384
    %v656 = vld [vmem:[%s655] sm:$0xff]
    %v657 = vld [vmem:[%s655 + $0x8] sm:$0xff]
    %v658 = vld [vmem:[%s655 + $0x10] sm:$0xff]
    %v659 = vld [vmem:[%s655 + $0x18] sm:$0xff]
    %v660 = vld [vmem:[%s655 + $0x20] sm:$0xff]
    %v661 = vld [vmem:[%s655 + $0x28] sm:$0xff]
    %v662 = vld [vmem:[%s655 + $0x30] sm:$0xff]
    %v663 = vld [vmem:[%s655 + $0x38] sm:$0xff]
    %v664 = vld [vmem:[%s655 + $0x40] sm:$0xff]
    %v665 = vld [vmem:[%s655 + $0x48] sm:$0xff]
    %v666 = vld [vmem:[%s655 + $0x50] sm:$0xff]
    %v667 = vld [vmem:[%s655 + $0x58] sm:$0xff]
    %v668 = vld [vmem:[%s655 + $0x60] sm:$0xff]
    %v669 = vld [vmem:[%s655 + $0x68] sm:$0xff]
    %v670 = vld [vmem:[%s655 + $0x70] sm:$0xff]
    %v671 = vld [vmem:[%s655 + $0x78] sm:$0xff]
    %672 = vmatprep.subr.mxu0 0.0
    %673 = vmatpush1.msra.mxu0 %v656
    %674 = vmatprep.subr.mxu0 0.0
    %675 = vmatpush1.msra.mxu0 %v657
    %676 = vmatprep.subr.mxu0 0.0
    %677 = vmatpush1.msra.mxu0 %v658
    %678 = vmatprep.subr.mxu0 0.0
    %679 = vmatpush1.msra.mxu0 %v659
    %680 = vmatprep.subr.mxu0 0.0
    %681 = vmatpush1.msra.mxu0 %v660
    %682 = vmatprep.subr.mxu0 0.0
    %683 = vmatpush1.msra.mxu0 %v661
    %684 = vmatprep.subr.mxu0 0.0
    %685 = vmatpush1.msra.mxu0 %v662
    %686 = vmatprep.subr.mxu0 0.0
    %687 = vmatpush1.msra.mxu0 %v663
    %688 = vmatprep.subr.mxu0 0.0
    %689 = vmatpush1.msra.mxu0 %v664
    %690 = vmatprep.subr.mxu0 0.0
    %691 = vmatpush1.msra.mxu0 %v665
    %692 = vmatprep.subr.mxu0 0.0
    %693 = vmatpush1.msra.mxu0 %v666
    %694 = vmatprep.subr.mxu0 0.0
    %695 = vmatpush1.msra.mxu0 %v667
    %696 = vmatprep.subr.mxu0 0.0
    %697 = vmatpush1.msra.mxu0 %v668
    %698 = vmatprep.subr.mxu0 0.0
    %699 = vmatpush1.msra.mxu0 %v669
    %700 = vmatprep.subr.mxu0 0.0
    %701 = vmatpush1.msra.mxu0 %v670
    %702 = vmatprep.subr.mxu0 0.0
    %703 = vmatpush1.msra.mxu0 %v671
    %704 = vmatprep.subr.mxu0 0.0
    %705 = vmatpush1.msra.mxu0 0.0
    %706 = vmatprep.subr.mxu0 0.0
    %707 = vmatpush1.msra.mxu0 0.0
    %708 = vmatprep.subr.mxu0 0.0
    %709 = vmatpush1.msra.mxu0 0.0
    %710 = vmatprep.subr.mxu0 0.0
    %711 = vmatpush1.msra.mxu0 0.0
    %712 = vmatprep.subr.mxu0 0.0
    %713 = vmatpush1.msra.mxu0 0.0
    %714 = vmatprep.subr.mxu0 0.0
    %715 = vmatpush1.msra.mxu0 0.0
    %716 = vmatprep.subr.mxu0 0.0
    %717 = vmatpush1.msra.mxu0 0.0
    %718 = vmatprep.subr.mxu0 0.0
    %719 = vmatpush1.msra.mxu0 0.0
    %720 = vmatprep.subr.mxu0 0.0
    %721 = vmatpush1.msra.mxu0 0.0
    %722 = vmatprep.subr.mxu0 0.0
    %723 = vmatpush1.msra.mxu0 0.0
    %724 = vmatprep.subr.mxu0 0.0
    %725 = vmatpush1.msra.mxu0 0.0
    %726 = vmatprep.subr.mxu0 0.0
    %727 = vmatpush1.msra.mxu0 0.0
    %728 = vmatprep.subr.mxu0 0.0
    %729 = vmatpush1.msra.mxu0 0.0
    %730 = vmatprep.subr.mxu0 0.0
    %731 = vmatpush1.msra.mxu0 0.0
    %732 = vmatprep.subr.mxu0 0.0
    %733 = vmatpush1.msra.mxu0 0.0
    %734 = vmatprep.subr.mxu0 0.0
    %735 = vmatpush1.msra.mxu0 0.0
    %736 = vmatprep.mubr.f32.mxu0 0.0
    %737 = vmatmul.mubr.f32.gmra.mrb[0].mxu0 %v652
    %v738 = vpop.f32.mrb[0].mxu0
    %v739 = vadd.f32 0.0, %v738
    %v740 = vpop.f32.mrb[0].mxu0
    %741 = vmatprep.mubr.f32.mxu0 0.0
    %742 = vmatmul.mubr.f32.gmra.mrb[0].mxu0 %v653
    %v743 = vpop.f32.mrb[0].mxu0
    %v744 = vadd.f32 0.0, %v743
    %v745 = vpop.f32.mrb[0].mxu0
    %746 = vmatprep.mubr.f32.mxu0 0.0
    %747 = vmatmul.mubr.f32.gmra.mrb[0].mxu0 %v654
    %v748 = vpop.f32.mrb[0].mxu0
    %v749 = vadd.f32 0.0, %v748
    %v750 = vpop.f32.mrb[0].mxu0
    %751 = vdwg.mxu0
    %v752 = vadd.f32 %v649, %v739
    %v753 = vadd.f32 %v650, %v744
    %v754 = vadd.f32 %v651, %v749
    %v755 = vld [vmem:[#allocation3 + $0x8] sm:$0xff]
    %v756 = vld [vmem:[#allocation3 + $0x10] sm:$0xff]
    %v757 = vld [vmem:[#allocation3 + $0x18] sm:$0xff]
    %s758 = scalar_lea.vmem %s3, 512
    %v759 = vld [vmem:[%s758] sm:$0xff]
    %v760 = vld [vmem:[%s758 + $0x8] sm:$0xff]
    %v761 = vld [vmem:[%s758 + $0x10] sm:$0xff]
    %v762 = vld [vmem:[%s758 + $0x18] sm:$0xff]
    %v763 = vld [vmem:[%s758 + $0x20] sm:$0xff]
    %v764 = vld [vmem:[%s758 + $0x28] sm:$0xff]
    %v765 = vld [vmem:[%s758 + $0x30] sm:$0xff]
    %v766 = vld [vmem:[%s758 + $0x38] sm:$0xff]
    %v767 = vld [vmem:[%s758 + $0x40] sm:$0xff]
    %v768 = vld [vmem:[%s758 + $0x48] sm:$0xff]
    %v769 = vld [vmem:[%s758 + $0x50] sm:$0xff]
    %v770 = vld [vmem:[%s758 + $0x58] sm:$0xff]
    %v771 = vld [vmem:[%s758 + $0x60] sm:$0xff]
    %v772 = vld [vmem:[%s758 + $0x68] sm:$0xff]
    %v773 = vld [vmem:[%s758 + $0x70] sm:$0xff]
    %v774 = vld [vmem:[%s758 + $0x78] sm:$0xff]
    %775 = vmatprep.subr.mxu0 0.0
    %776 = vmatpush1.msra.mxu0 %v759
    %777 = vmatprep.subr.mxu0 0.0
    %778 = vmatpush1.msra.mxu0 %v760
    %779 = vmatprep.subr.mxu0 0.0
    %780 = vmatpush1.msra.mxu0 %v761
    %781 = vmatprep.subr.mxu0 0.0
    %782 = vmatpush1.msra.mxu0 %v762
    %783 = vmatprep.subr.mxu0 0.0
    %784 = vmatpush1.msra.mxu0 %v763
    %785 = vmatprep.subr.mxu0 0.0
    %786 = vmatpush1.msra.mxu0 %v764
    %787 = vmatprep.subr.mxu0 0.0
    %788 = vmatpush1.msra.mxu0 %v765
    %789 = vmatprep.subr.mxu0 0.0
    %790 = vmatpush1.msra.mxu0 %v766
    %791 = vmatprep.subr.mxu0 0.0
    %792 = vmatpush1.msra.mxu0 %v767
    %793 = vmatprep.subr.mxu0 0.0
    %794 = vmatpush1.msra.mxu0 %v768
    %795 = vmatprep.subr.mxu0 0.0
    %796 = vmatpush1.msra.mxu0 %v769
    %797 = vmatprep.subr.mxu0 0.0
    %798 = vmatpush1.msra.mxu0 %v770
    %799 = vmatprep.subr.mxu0 0.0
    %800 = vmatpush1.msra.mxu0 %v771
    %801 = vmatprep.subr.mxu0 0.0
    %802 = vmatpush1.msra.mxu0 %v772
    %803 = vmatprep.subr.mxu0 0.0
    %804 = vmatpush1.msra.mxu0 %v773
    %805 = vmatprep.subr.mxu0 0.0
    %806 = vmatpush1.msra.mxu0 %v774
    %807 = vmatprep.subr.mxu0 0.0
    %808 = vmatpush1.msra.mxu0 0.0
    %809 = vmatprep.subr.mxu0 0.0
    %810 = vmatpush1.msra.mxu0 0.0
    %811 = vmatprep.subr.mxu0 0.0
    %812 = vmatpush1.msra.mxu0 0.0
    %813 = vmatprep.subr.mxu0 0.0
    %814 = vmatpush1.msra.mxu0 0.0
    %815 = vmatprep.subr.mxu0 0.0
    %816 = vmatpush1.msra.mxu0 0.0
    %817 = vmatprep.subr.mxu0 0.0
    %818 = vmatpush1.msra.mxu0 0.0
    %819 = vmatprep.subr.mxu0 0.0
    %820 = vmatpush1.msra.mxu0 0.0
    %821 = vmatprep.subr.mxu0 0.0
    %822 = vmatpush1.msra.mxu0 0.0
    %823 = vmatprep.subr.mxu0 0.0
    %824 = vmatpush1.msra.mxu0 0.0
    %825 = vmatprep.subr.mxu0 0.0
    %826 = vmatpush1.msra.mxu0 0.0
    %827 = vmatprep.subr.mxu0 0.0
    %828 = vmatpush1.msra.mxu0 0.0
    %829 = vmatprep.subr.mxu0 0.0
    %830 = vmatpush1.msra.mxu0 0.0
    %831 = vmatprep.subr.mxu0 0.0
    %832 = vmatpush1.msra.mxu0 0.0
    %833 = vmatprep.subr.mxu0 0.0
    %834 = vmatpush1.msra.mxu0 0.0
    %835 = vmatprep.subr.mxu0 0.0
    %836 = vmatpush1.msra.mxu0 0.0
    %837 = vmatprep.subr.mxu0 0.0
    %838 = vmatpush1.msra.mxu0 0.0
    %839 = vmatprep.mubr.f32.mxu0 0.0
    %840 = vmatmul.mubr.f32.gmra.mrb[0].mxu0 %v755
    %v841 = vpop.f32.mrb[0].mxu0
    %v842 = vadd.f32 0.0, %v841
    %v843 = vpop.f32.mrb[0].mxu0
    %844 = vmatprep.mubr.f32.mxu0 0.0
    %845 = vmatmul.mubr.f32.gmra.mrb[0].mxu0 %v756
    %v846 = vpop.f32.mrb[0].mxu0
    %v847 = vadd.f32 0.0, %v846
    %v848 = vpop.f32.mrb[0].mxu0
    %849 = vmatprep.mubr.f32.mxu0 0.0
    %850 = vmatmul.mubr.f32.gmra.mrb[0].mxu0 %v757
    %v851 = vpop.f32.mrb[0].mxu0
    %v852 = vadd.f32 0.0, %v851
    %v853 = vpop.f32.mrb[0].mxu0
    %854 = vdwg.mxu0
    %v855 = vadd.f32 %v752, %v842
    %v856 = vadd.f32 %v753, %v847
    %v857 = vadd.f32 %v754, %v852
    %v858 = vld [vmem:[#allocation3 + $0xa] sm:$0xff]
    %v859 = vld [vmem:[#allocation3 + $0x12] sm:$0xff]
    %v860 = vld [vmem:[#allocation3 + $0x1a] sm:$0xff]
    %s861 = scalar_lea.vmem %s3, 640
    %v862 = vld [vmem:[%s861] sm:$0xff]
    %v863 = vld [vmem:[%s861 + $0x8] sm:$0xff]
    %v864 = vld [vmem:[%s861 + $0x10] sm:$0xff]
    %v865 = vld [vmem:[%s861 + $0x18] sm:$0xff]
    %v866 = vld [vmem:[%s861 + $0x20] sm:$0xff]
    %v867 = vld [vmem:[%s861 + $0x28] sm:$0xff]
    %v868 = vld [vmem:[%s861 + $0x30] sm:$0xff]
    %v869 = vld [vmem:[%s861 + $0x38] sm:$0xff]
    %v870 = vld [vmem:[%s861 + $0x40] sm:$0xff]
    %v871 = vld [vmem:[%s861 + $0x48] sm:$0xff]
    %v872 = vld [vmem:[%s861 + $0x50] sm:$0xff]
    %v873 = vld [vmem:[%s861 + $0x58] sm:$0xff]
    %v874 = vld [vmem:[%s861 + $0x60] sm:$0xff]
    %v875 = vld [vmem:[%s861 + $0x68] sm:$0xff]
    %v876 = vld [vmem:[%s861 + $0x70] sm:$0xff]
    %v877 = vld [vmem:[%s861 + $0x78] sm:$0xff]
    %878 = vmatprep.subr.mxu0 0.0
    %879 = vmatpush1.msra.mxu0 %v862
    %880 = vmatprep.subr.mxu0 0.0
    %881 = vmatpush1.msra.mxu0 %v863
    %882 = vmatprep.subr.mxu0 0.0
    %883 = vmatpush1.msra.mxu0 %v864
    %884 = vmatprep.subr.mxu0 0.0
    %885 = vmatpush1.msra.mxu0 %v865
    %886 = vmatprep.subr.mxu0 0.0
    %887 = vmatpush1.msra.mxu0 %v866
    %888 = vmatprep.subr.mxu0 0.0
    %889 = vmatpush1.msra.mxu0 %v867
    %890 = vmatprep.subr.mxu0 0.0
    %891 = vmatpush1.msra.mxu0 %v868
    %892 = vmatprep.subr.mxu0 0.0
    %893 = vmatpush1.msra.mxu0 %v869
    %894 = vmatprep.subr.mxu0 0.0
    %895 = vmatpush1.msra.mxu0 %v870
    %896 = vmatprep.subr.mxu0 0.0
    %897 = vmatpush1.msra.mxu0 %v871
    %898 = vmatprep.subr.mxu0 0.0
    %899 = vmatpush1.msra.mxu0 %v872
    %900 = vmatprep.subr.mxu0 0.0
    %901 = vmatpush1.msra.mxu0 %v873
    %902 = vmatprep.subr.mxu0 0.0
    %903 = vmatpush1.msra.mxu0 %v874
    %904 = vmatprep.subr.mxu0 0.0
    %905 = vmatpush1.msra.mxu0 %v875
    %906 = vmatprep.subr.mxu0 0.0
    %907 = vmatpush1.msra.mxu0 %v876
    %908 = vmatprep.subr.mxu0 0.0
    %909 = vmatpush1.msra.mxu0 %v877
    %910 = vmatprep.subr.mxu0 0.0
    %911 = vmatpush1.msra.mxu0 0.0
    %912 = vmatprep.subr.mxu0 0.0
    %913 = vmatpush1.msra.mxu0 0.0
    %914 = vmatprep.subr.mxu0 0.0
    %915 = vmatpush1.msra.mxu0 0.0
    %916 = vmatprep.subr.mxu0 0.0
    %917 = vmatpush1.msra.mxu0 0.0
    %918 = vmatprep.subr.mxu0 0.0
    %919 = vmatpush1.msra.mxu0 0.0
    %920 = vmatprep.subr.mxu0 0.0
    %921 = vmatpush1.msra.mxu0 0.0
    %922 = vmatprep.subr.mxu0 0.0
    %923 = vmatpush1.msra.mxu0 0.0
    %924 = vmatprep.subr.mxu0 0.0
    %925 = vmatpush1.msra.mxu0 0.0
    %926 = vmatprep.subr.mxu0 0.0
    %927 = vmatpush1.msra.mxu0 0.0
    %928 = vmatprep.subr.mxu0 0.0
    %929 = vmatpush1.msra.mxu0 0.0
    %930 = vmatprep.subr.mxu0 0.0
    %931 = vmatpush1.msra.mxu0 0.0
    %932 = vmatprep.subr.mxu0 0.0
    %933 = vmatpush1.msra.mxu0 0.0
    %934 = vmatprep.subr.mxu0 0.0
    %935 = vmatpush1.msra.mxu0 0.0
    %936 = vmatprep.subr.mxu0 0.0
    %937 = vmatpush1.msra.mxu0 0.0
    %938 = vmatprep.subr.mxu0 0.0
    %939 = vmatpush1.msra.mxu0 0.0
    %940 = vmatprep.subr.mxu0 0.0
    %941 = vmatpush1.msra.mxu0 0.0
    %942 = vmatprep.mubr.f32.mxu0 0.0
    %943 = vmatmul.mubr.f32.gmra.mrb[0].mxu0 %v858
    %v944 = vpop.f32.mrb[0].mxu0
    %v945 = vadd.f32 0.0, %v944
    %v946 = vpop.f32.mrb[0].mxu0
    %947 = vmatprep.mubr.f32.mxu0 0.0
    %948 = vmatmul.mubr.f32.gmra.mrb[0].mxu0 %v859
    %v949 = vpop.f32.mrb[0].mxu0
    %v950 = vadd.f32 0.0, %v949
    %v951 = vpop.f32.mrb[0].mxu0
    %952 = vmatprep.mubr.f32.mxu0 0.0
    %953 = vmatmul.mubr.f32.gmra.mrb[0].mxu0 %v860
    %v954 = vpop.f32.mrb[0].mxu0
    %v955 = vadd.f32 0.0, %v954
    %v956 = vpop.f32.mrb[0].mxu0
    %957 = vdwg.mxu0
    %v958 = vadd.f32 %v855, %v945
    %v959 = vadd.f32 %v856, %v950
    %v960 = vadd.f32 %v857, %v955
    %v961 = vld [vmem:[#allocation3 + $0xc] sm:$0xff]
    %v962 = vld [vmem:[#allocation3 + $0x14] sm:$0xff]
    %v963 = vld [vmem:[#allocation3 + $0x1c] sm:$0xff]
    %s964 = scalar_lea.vmem %s3, 768
    %v965 = vld [vmem:[%s964] sm:$0xff]
    %v966 = vld [vmem:[%s964 + $0x8] sm:$0xff]
    %v967 = vld [vmem:[%s964 + $0x10] sm:$0xff]
    %v968 = vld [vmem:[%s964 + $0x18] sm:$0xff]
    %v969 = vld [vmem:[%s964 + $0x20] sm:$0xff]
    %v970 = vld [vmem:[%s964 + $0x28] sm:$0xff]
    %v971 = vld [vmem:[%s964 + $0x30] sm:$0xff]
    %v972 = vld [vmem:[%s964 + $0x38] sm:$0xff]
    %v973 = vld [vmem:[%s964 + $0x40] sm:$0xff]
    %v974 = vld [vmem:[%s964 + $0x48] sm:$0xff]
    %v975 = vld [vmem:[%s964 + $0x50] sm:$0xff]
    %v976 = vld [vmem:[%s964 + $0x58] sm:$0xff]
    %v977 = vld [vmem:[%s964 + $0x60] sm:$0xff]
    %v978 = vld [vmem:[%s964 + $0x68] sm:$0xff]
    %v979 = vld [vmem:[%s964 + $0x70] sm:$0xff]
    %v980 = vld [vmem:[%s964 + $0x78] sm:$0xff]
    %981 = vmatprep.subr.mxu0 0.0
    %982 = vmatpush1.msra.mxu0 %v965
    %983 = vmatprep.subr.mxu0 0.0
    %984 = vmatpush1.msra.mxu0 %v966
    %985 = vmatprep.subr.mxu0 0.0
    %986 = vmatpush1.msra.mxu0 %v967
    %987 = vmatprep.subr.mxu0 0.0
    %988 = vmatpush1.msra.mxu0 %v968
    %989 = vmatprep.subr.mxu0 0.0
    %990 = vmatpush1.msra.mxu0 %v969
    %991 = vmatprep.subr.mxu0 0.0
    %992 = vmatpush1.msra.mxu0 %v970
    %993 = vmatprep.subr.mxu0 0.0
    %994 = vmatpush1.msra.mxu0 %v971
    %995 = vmatprep.subr.mxu0 0.0
    %996 = vmatpush1.msra.mxu0 %v972
    %997 = vmatprep.subr.mxu0 0.0
    %998 = vmatpush1.msra.mxu0 %v973
    %999 = vmatprep.subr.mxu0 0.0
    %1000 = vmatpush1.msra.mxu0 %v974
    %1001 = vmatprep.subr.mxu0 0.0
    %1002 = vmatpush1.msra.mxu0 %v975
    %1003 = vmatprep.subr.mxu0 0.0
    %1004 = vmatpush1.msra.mxu0 %v976
    %1005 = vmatprep.subr.mxu0 0.0
    %1006 = vmatpush1.msra.mxu0 %v977
    %1007 = vmatprep.subr.mxu0 0.0
    %1008 = vmatpush1.msra.mxu0 %v978
    %1009 = vmatprep.subr.mxu0 0.0
    %1010 = vmatpush1.msra.mxu0 %v979
    %1011 = vmatprep.subr.mxu0 0.0
    %1012 = vmatpush1.msra.mxu0 %v980
    %1013 = vmatprep.subr.mxu0 0.0
    %1014 = vmatpush1.msra.mxu0 0.0
    %1015 = vmatprep.subr.mxu0 0.0
    %1016 = vmatpush1.msra.mxu0 0.0
    %1017 = vmatprep.subr.mxu0 0.0
    %1018 = vmatpush1.msra.mxu0 0.0
    %1019 = vmatprep.subr.mxu0 0.0
    %1020 = vmatpush1.msra.mxu0 0.0
    %1021 = vmatprep.subr.mxu0 0.0
    %1022 = vmatpush1.msra.mxu0 0.0
    %1023 = vmatprep.subr.mxu0 0.0
    %1024 = vmatpush1.msra.mxu0 0.0
    %1025 = vmatprep.subr.mxu0 0.0
    %1026 = vmatpush1.msra.mxu0 0.0
    %1027 = vmatprep.subr.mxu0 0.0
    %1028 = vmatpush1.msra.mxu0 0.0
    %1029 = vmatprep.subr.mxu0 0.0
    %1030 = vmatpush1.msra.mxu0 0.0
    %1031 = vmatprep.subr.mxu0 0.0
    %1032 = vmatpush1.msra.mxu0 0.0
    %1033 = vmatprep.subr.mxu0 0.0
    %1034 = vmatpush1.msra.mxu0 0.0
    %1035 = vmatprep.subr.mxu0 0.0
    %1036 = vmatpush1.msra.mxu0 0.0
    %1037 = vmatprep.subr.mxu0 0.0
    %1038 = vmatpush1.msra.mxu0 0.0
    %1039 = vmatprep.subr.mxu0 0.0
    %1040 = vmatpush1.msra.mxu0 0.0
    %1041 = vmatprep.subr.mxu0 0.0
    %1042 = vmatpush1.msra.mxu0 0.0
    %1043 = vmatprep.subr.mxu0 0.0
    %1044 = vmatpush1.msra.mxu0 0.0
    %1045 = vmatprep.mubr.f32.mxu0 0.0
    %1046 = vmatmul.mubr.f32.gmra.mrb[0].mxu0 %v961
    %v1047 = vpop.f32.mrb[0].mxu0
    %v1048 = vadd.f32 0.0, %v1047
    %v1049 = vpop.f32.mrb[0].mxu0
    %1050 = vmatprep.mubr.f32.mxu0 0.0
    %1051 = vmatmul.mubr.f32.gmra.mrb[0].mxu0 %v962
    %v1052 = vpop.f32.mrb[0].mxu0
    %v1053 = vadd.f32 0.0, %v1052
    %v1054 = vpop.f32.mrb[0].mxu0
    %1055 = vmatprep.mubr.f32.mxu0 0.0
    %1056 = vmatmul.mubr.f32.gmra.mrb[0].mxu0 %v963
    %v1057 = vpop.f32.mrb[0].mxu0
    %v1058 = vadd.f32 0.0, %v1057
    %v1059 = vpop.f32.mrb[0].mxu0
    %1060 = vdwg.mxu0
    %v1061 = vadd.f32 %v958, %v1048
    %v1062 = vadd.f32 %v959, %v1053
    %v1063 = vadd.f32 %v960, %v1058
    %v1064 = vld [vmem:[#allocation3 + $0xe] sm:$0xff]
    %v1065 = vld [vmem:[#allocation3 + $0x16] sm:$0xff]
    %v1066 = vld [vmem:[#allocation3 + $0x1e] sm:$0xff]
    %s1067 = scalar_lea.vmem %s3, 896
    %v1068 = vld [vmem:[%s1067] sm:$0xff]
    %v1069 = vld [vmem:[%s1067 + $0x8] sm:$0xff]
    %v1070 = vld [vmem:[%s1067 + $0x10] sm:$0xff]
    %v1071 = vld [vmem:[%s1067 + $0x18] sm:$0xff]
    %v1072 = vld [vmem:[%s1067 + $0x20] sm:$0xff]
    %v1073 = vld [vmem:[%s1067 + $0x28] sm:$0xff]
    %v1074 = vld [vmem:[%s1067 + $0x30] sm:$0xff]
    %v1075 = vld [vmem:[%s1067 + $0x38] sm:$0xff]
    %v1076 = vld [vmem:[%s1067 + $0x40] sm:$0xff]
    %v1077 = vld [vmem:[%s1067 + $0x48] sm:$0xff]
    %v1078 = vld [vmem:[%s1067 + $0x50] sm:$0xff]
    %v1079 = vld [vmem:[%s1067 + $0x58] sm:$0xff]
    %v1080 = vld [vmem:[%s1067 + $0x60] sm:$0xff]
    %v1081 = vld [vmem:[%s1067 + $0x68] sm:$0xff]
    %v1082 = vld [vmem:[%s1067 + $0x70] sm:$0xff]
    %v1083 = vld [vmem:[%s1067 + $0x78] sm:$0xff]
    %1084 = vmatprep.subr.mxu0 0.0
    %1085 = vmatpush1.msra.mxu0 %v1068
    %1086 = vmatprep.subr.mxu0 0.0
    %1087 = vmatpush1.msra.mxu0 %v1069
    %1088 = vmatprep.subr.mxu0 0.0
    %1089 = vmatpush1.msra.mxu0 %v1070
    %1090 = vmatprep.subr.mxu0 0.0
    %1091 = vmatpush1.msra.mxu0 %v1071
    %1092 = vmatprep.subr.mxu0 0.0
    %1093 = vmatpush1.msra.mxu0 %v1072
    %1094 = vmatprep.subr.mxu0 0.0
    %1095 = vmatpush1.msra.mxu0 %v1073
    %1096 = vmatprep.subr.mxu0 0.0
    %1097 = vmatpush1.msra.mxu0 %v1074
    %1098 = vmatprep.subr.mxu0 0.0
    %1099 = vmatpush1.msra.mxu0 %v1075
    %1100 = vmatprep.subr.mxu0 0.0
    %1101 = vmatpush1.msra.mxu0 %v1076
    %1102 = vmatprep.subr.mxu0 0.0
    %1103 = vmatpush1.msra.mxu0 %v1077
    %1104 = vmatprep.subr.mxu0 0.0
    %1105 = vmatpush1.msra.mxu0 %v1078
    %1106 = vmatprep.subr.mxu0 0.0
    %1107 = vmatpush1.msra.mxu0 %v1079
    %1108 = vmatprep.subr.mxu0 0.0
    %1109 = vmatpush1.msra.mxu0 %v1080
    %1110 = vmatprep.subr.mxu0 0.0
    %1111 = vmatpush1.msra.mxu0 %v1081
    %1112 = vmatprep.subr.mxu0 0.0
    %1113 = vmatpush1.msra.mxu0 %v1082
    %1114 = vmatprep.subr.mxu0 0.0
    %1115 = vmatpush1.msra.mxu0 %v1083
    %1116 = vmatprep.subr.mxu0 0.0
    %1117 = vmatpush1.msra.mxu0 0.0
    %1118 = vmatprep.subr.mxu0 0.0
    %1119 = vmatpush1.msra.mxu0 0.0
    %1120 = vmatprep.subr.mxu0 0.0
    %1121 = vmatpush1.msra.mxu0 0.0
    %1122 = vmatprep.subr.mxu0 0.0
    %1123 = vmatpush1.msra.mxu0 0.0
    %1124 = vmatprep.subr.mxu0 0.0
    %1125 = vmatpush1.msra.mxu0 0.0
    %1126 = vmatprep.subr.mxu0 0.0
    %1127 = vmatpush1.msra.mxu0 0.0
    %1128 = vmatprep.subr.mxu0 0.0
    %1129 = vmatpush1.msra.mxu0 0.0
    %1130 = vmatprep.subr.mxu0 0.0
    %1131 = vmatpush1.msra.mxu0 0.0
    %1132 = vmatprep.subr.mxu0 0.0
    %1133 = vmatpush1.msra.mxu0 0.0
    %1134 = vmatprep.subr.mxu0 0.0
    %1135 = vmatpush1.msra.mxu0 0.0
    %1136 = vmatprep.subr.mxu0 0.0
    %1137 = vmatpush1.msra.mxu0 0.0
    %1138 = vmatprep.subr.mxu0 0.0
    %1139 = vmatpush1.msra.mxu0 0.0
    %1140 = vmatprep.subr.mxu0 0.0
    %1141 = vmatpush1.msra.mxu0 0.0
    %1142 = vmatprep.subr.mxu0 0.0
    %1143 = vmatpush1.msra.mxu0 0.0
    %1144 = vmatprep.subr.mxu0 0.0
    %1145 = vmatpush1.msra.mxu0 0.0
    %1146 = vmatprep.subr.mxu0 0.0
    %1147 = vmatpush1.msra.mxu0 0.0
    %1148 = vmatprep.mubr.f32.mxu0 0.0
    %1149 = vmatmul.mubr.f32.gmra.mrb[0].mxu0 %v1064
    %v1150 = vpop.f32.mrb[0].mxu0
    %v1151 = vadd.f32 0.0, %v1150
    %v1152 = vpop.f32.mrb[0].mxu0
    %1153 = vmatprep.mubr.f32.mxu0 0.0
    %1154 = vmatmul.mubr.f32.gmra.mrb[0].mxu0 %v1065
    %v1155 = vpop.f32.mrb[0].mxu0
    %v1156 = vadd.f32 0.0, %v1155
    %v1157 = vpop.f32.mrb[0].mxu0
    %1158 = vmatprep.mubr.f32.mxu0 0.0
    %1159 = vmatmul.mubr.f32.gmra.mrb[0].mxu0 %v1066
    %v1160 = vpop.f32.mrb[0].mxu0
    %v1161 = vadd.f32 0.0, %v1160
    %v1162 = vpop.f32.mrb[0].mxu0
    %1163 = vdwg.mxu0
    %v1164 = vadd.f32 %v1061, %v1151
    %v1165 = vadd.f32 %v1062, %v1156
    %v1166 = vadd.f32 %v1063, %v1161
    %v1167 = vld [vmem:[#allocation3 + $0x10] sm:$0xff]
    %v1168 = vld [vmem:[#allocation3 + $0x18] sm:$0xff]
    %v1169 = vld [vmem:[#allocation3 + $0x20] sm:$0xff]
    %s1170 = scalar_lea.vmem %s3, 1024
    %v1171 = vld [vmem:[%s1170] sm:$0xff]
    %v1172 = vld [vmem:[%s1170 + $0x8] sm:$0xff]
    %v1173 = vld [vmem:[%s1170 + $0x10] sm:$0xff]
    %v1174 = vld [vmem:[%s1170 + $0x18] sm:$0xff]
    %v1175 = vld [vmem:[%s1170 + $0x20] sm:$0xff]
    %v1176 = vld [vmem:[%s1170 + $0x28] sm:$0xff]
    %v1177 = vld [vmem:[%s1170 + $0x30] sm:$0xff]
    %v1178 = vld [vmem:[%s1170 + $0x38] sm:$0xff]
    %v1179 = vld [vmem:[%s1170 + $0x40] sm:$0xff]
    %v1180 = vld [vmem:[%s1170 + $0x48] sm:$0xff]
    %v1181 = vld [vmem:[%s1170 + $0x50] sm:$0xff]
    %v1182 = vld [vmem:[%s1170 + $0x58] sm:$0xff]
    %v1183 = vld [vmem:[%s1170 + $0x60] sm:$0xff]
    %v1184 = vld [vmem:[%s1170 + $0x68] sm:$0xff]
    %v1185 = vld [vmem:[%s1170 + $0x70] sm:$0xff]
    %v1186 = vld [vmem:[%s1170 + $0x78] sm:$0xff]
    %1187 = vmatprep.subr.mxu0 0.0
    %1188 = vmatpush1.msra.mxu0 %v1171
    %1189 = vmatprep.subr.mxu0 0.0
    %1190 = vmatpush1.msra.mxu0 %v1172
    %1191 = vmatprep.subr.mxu0 0.0
    %1192 = vmatpush1.msra.mxu0 %v1173
    %1193 = vmatprep.subr.mxu0 0.0
    %1194 = vmatpush1.msra.mxu0 %v1174
    %1195 = vmatprep.subr.mxu0 0.0
    %1196 = vmatpush1.msra.mxu0 %v1175
    %1197 = vmatprep.subr.mxu0 0.0
    %1198 = vmatpush1.msra.mxu0 %v1176
    %1199 = vmatprep.subr.mxu0 0.0
    %1200 = vmatpush1.msra.mxu0 %v1177
    %1201 = vmatprep.subr.mxu0 0.0
    %1202 = vmatpush1.msra.mxu0 %v1178
    %1203 = vmatprep.subr.mxu0 0.0
    %1204 = vmatpush1.msra.mxu0 %v1179
    %1205 = vmatprep.subr.mxu0 0.0
    %1206 = vmatpush1.msra.mxu0 %v1180
    %1207 = vmatprep.subr.mxu0 0.0
    %1208 = vmatpush1.msra.mxu0 %v1181
    %1209 = vmatprep.subr.mxu0 0.0
    %1210 = vmatpush1.msra.mxu0 %v1182
    %1211 = vmatprep.subr.mxu0 0.0
    %1212 = vmatpush1.msra.mxu0 %v1183
    %1213 = vmatprep.subr.mxu0 0.0
    %1214 = vmatpush1.msra.mxu0 %v1184
    %1215 = vmatprep.subr.mxu0 0.0
    %1216 = vmatpush1.msra.mxu0 %v1185
    %1217 = vmatprep.subr.mxu0 0.0
    %1218 = vmatpush1.msra.mxu0 %v1186
    %1219 = vmatprep.subr.mxu0 0.0
    %1220 = vmatpush1.msra.mxu0 0.0
    %1221 = vmatprep.subr.mxu0 0.0
    %1222 = vmatpush1.msra.mxu0 0.0
    %1223 = vmatprep.subr.mxu0 0.0
    %1224 = vmatpush1.msra.mxu0 0.0
    %1225 = vmatprep.subr.mxu0 0.0
    %1226 = vmatpush1.msra.mxu0 0.0
    %1227 = vmatprep.subr.mxu0 0.0
    %1228 = vmatpush1.msra.mxu0 0.0
    %1229 = vmatprep.subr.mxu0 0.0
    %1230 = vmatpush1.msra.mxu0 0.0
    %1231 = vmatprep.subr.mxu0 0.0
    %1232 = vmatpush1.msra.mxu0 0.0
    %1233 = vmatprep.subr.mxu0 0.0
    %1234 = vmatpush1.msra.mxu0 0.0
    %1235 = vmatprep.subr.mxu0 0.0
    %1236 = vmatpush1.msra.mxu0 0.0
    %1237 = vmatprep.subr.mxu0 0.0
    %1238 = vmatpush1.msra.mxu0 0.0
    %1239 = vmatprep.subr.mxu0 0.0
    %1240 = vmatpush1.msra.mxu0 0.0
    %1241 = vmatprep.subr.mxu0 0.0
    %1242 = vmatpush1.msra.mxu0 0.0
    %1243 = vmatprep.subr.mxu0 0.0
    %1244 = vmatpush1.msra.mxu0 0.0
    %1245 = vmatprep.subr.mxu0 0.0
    %1246 = vmatpush1.msra.mxu0 0.0
    %1247 = vmatprep.subr.mxu0 0.0
    %1248 = vmatpush1.msra.mxu0 0.0
    %1249 = vmatprep.subr.mxu0 0.0
    %1250 = vmatpush1.msra.mxu0 0.0
    %1251 = vmatprep.mubr.f32.mxu0 0.0
    %1252 = vmatmul.mubr.f32.gmra.mrb[0].mxu0 %v1167
    %v1253 = vpop.f32.mrb[0].mxu0
    %v1254 = vadd.f32 0.0, %v1253
    %v1255 = vpop.f32.mrb[0].mxu0
    %1256 = vmatprep.mubr.f32.mxu0 0.0
    %1257 = vmatmul.mubr.f32.gmra.mrb[0].mxu0 %v1168
    %v1258 = vpop.f32.mrb[0].mxu0
    %v1259 = vadd.f32 0.0, %v1258
    %v1260 = vpop.f32.mrb[0].mxu0
    %1261 = vmatprep.mubr.f32.mxu0 0.0
    %1262 = vmatmul.mubr.f32.gmra.mrb[0].mxu0 %v1169
    %v1263 = vpop.f32.mrb[0].mxu0
    %v1264 = vadd.f32 0.0, %v1263
    %v1265 = vpop.f32.mrb[0].mxu0
    %1266 = vdwg.mxu0
    %v1267 = vadd.f32 %v1164, %v1254
    %v1268 = vadd.f32 %v1165, %v1259
    %v1269 = vadd.f32 %v1166, %v1264
    %v1270 = vld [vmem:[#allocation3 + $0x12] sm:$0xff]
    %v1271 = vld [vmem:[#allocation3 + $0x1a] sm:$0xff]
    %v1272 = vld [vmem:[#allocation3 + $0x22] sm:$0xff]
    %s1273 = scalar_lea.vmem %s3, 1152
    %v1274 = vld [vmem:[%s1273] sm:$0xff]
    %v1275 = vld [vmem:[%s1273 + $0x8] sm:$0xff]
    %v1276 = vld [vmem:[%s1273 + $0x10] sm:$0xff]
    %v1277 = vld [vmem:[%s1273 + $0x18] sm:$0xff]
    %v1278 = vld [vmem:[%s1273 + $0x20] sm:$0xff]
    %v1279 = vld [vmem:[%s1273 + $0x28] sm:$0xff]
    %v1280 = vld [vmem:[%s1273 + $0x30] sm:$0xff]
    %v1281 = vld [vmem:[%s1273 + $0x38] sm:$0xff]
    %v1282 = vld [vmem:[%s1273 + $0x40] sm:$0xff]
    %v1283 = vld [vmem:[%s1273 + $0x48] sm:$0xff]
    %v1284 = vld [vmem:[%s1273 + $0x50] sm:$0xff]
    %v1285 = vld [vmem:[%s1273 + $0x58] sm:$0xff]
    %v1286 = vld [vmem:[%s1273 + $0x60] sm:$0xff]
    %v1287 = vld [vmem:[%s1273 + $0x68] sm:$0xff]
    %v1288 = vld [vmem:[%s1273 + $0x70] sm:$0xff]
    %v1289 = vld [vmem:[%s1273 + $0x78] sm:$0xff]
    %1290 = vmatprep.subr.mxu0 0.0
    %1291 = vmatpush1.msra.mxu0 %v1274
    %1292 = vmatprep.subr.mxu0 0.0
    %1293 = vmatpush1.msra.mxu0 %v1275
    %1294 = vmatprep.subr.mxu0 0.0
    %1295 = vmatpush1.msra.mxu0 %v1276
    %1296 = vmatprep.subr.mxu0 0.0
    %1297 = vmatpush1.msra.mxu0 %v1277
    %1298 = vmatprep.subr.mxu0 0.0
    %1299 = vmatpush1.msra.mxu0 %v1278
    %1300 = vmatprep.subr.mxu0 0.0
    %1301 = vmatpush1.msra.mxu0 %v1279
    %1302 = vmatprep.subr.mxu0 0.0
    %1303 = vmatpush1.msra.mxu0 %v1280
    %1304 = vmatprep.subr.mxu0 0.0
    %1305 = vmatpush1.msra.mxu0 %v1281
    %1306 = vmatprep.subr.mxu0 0.0
    %1307 = vmatpush1.msra.mxu0 %v1282
    %1308 = vmatprep.subr.mxu0 0.0
    %1309 = vmatpush1.msra.mxu0 %v1283
    %1310 = vmatprep.subr.mxu0 0.0
    %1311 = vmatpush1.msra.mxu0 %v1284
    %1312 = vmatprep.subr.mxu0 0.0
    %1313 = vmatpush1.msra.mxu0 %v1285
    %1314 = vmatprep.subr.mxu0 0.0
    %1315 = vmatpush1.msra.mxu0 %v1286
    %1316 = vmatprep.subr.mxu0 0.0
    %1317 = vmatpush1.msra.mxu0 %v1287
    %1318 = vmatprep.subr.mxu0 0.0
    %1319 = vmatpush1.msra.mxu0 %v1288
    %1320 = vmatprep.subr.mxu0 0.0
    %1321 = vmatpush1.msra.mxu0 %v1289
    %1322 = vmatprep.subr.mxu0 0.0
    %1323 = vmatpush1.msra.mxu0 0.0
    %1324 = vmatprep.subr.mxu0 0.0
    %1325 = vmatpush1.msra.mxu0 0.0
    %1326 = vmatprep.subr.mxu0 0.0
    %1327 = vmatpush1.msra.mxu0 0.0
    %1328 = vmatprep.subr.mxu0 0.0
    %1329 = vmatpush1.msra.mxu0 0.0
    %1330 = vmatprep.subr.mxu0 0.0
    %1331 = vmatpush1.msra.mxu0 0.0
    %1332 = vmatprep.subr.mxu0 0.0
    %1333 = vmatpush1.msra.mxu0 0.0
    %1334 = vmatprep.subr.mxu0 0.0
    %1335 = vmatpush1.msra.mxu0 0.0
    %1336 = vmatprep.subr.mxu0 0.0
    %1337 = vmatpush1.msra.mxu0 0.0
    %1338 = vmatprep.subr.mxu0 0.0
    %1339 = vmatpush1.msra.mxu0 0.0
    %1340 = vmatprep.subr.mxu0 0.0
    %1341 = vmatpush1.msra.mxu0 0.0
    %1342 = vmatprep.subr.mxu0 0.0
    %1343 = vmatpush1.msra.mxu0 0.0
    %1344 = vmatprep.subr.mxu0 0.0
    %1345 = vmatpush1.msra.mxu0 0.0
    %1346 = vmatprep.subr.mxu0 0.0
    %1347 = vmatpush1.msra.mxu0 0.0
    %1348 = vmatprep.subr.mxu0 0.0
    %1349 = vmatpush1.msra.mxu0 0.0
    %1350 = vmatprep.subr.mxu0 0.0
    %1351 = vmatpush1.msra.mxu0 0.0
    %1352 = vmatprep.subr.mxu0 0.0
    %1353 = vmatpush1.msra.mxu0 0.0
    %1354 = vmatprep.mubr.f32.mxu0 0.0
    %1355 = vmatmul.mubr.f32.gmra.mrb[0].mxu0 %v1270
    %v1356 = vpop.f32.mrb[0].mxu0
    %v1357 = vadd.f32 0.0, %v1356
    %v1358 = vpop.f32.mrb[0].mxu0
    %1359 = vmatprep.mubr.f32.mxu0 0.0
    %1360 = vmatmul.mubr.f32.gmra.mrb[0].mxu0 %v1271
    %v1361 = vpop.f32.mrb[0].mxu0
    %v1362 = vadd.f32 0.0, %v1361
    %v1363 = vpop.f32.mrb[0].mxu0
    %1364 = vmatprep.mubr.f32.mxu0 0.0
    %1365 = vmatmul.mubr.f32.gmra.mrb[0].mxu0 %v1272
    %v1366 = vpop.f32.mrb[0].mxu0
    %v1367 = vadd.f32 0.0, %v1366
    %v1368 = vpop.f32.mrb[0].mxu0
    %1369 = vdwg.mxu0
    %v1370 = vadd.f32 %v1267, %v1357
    %v1371 = vadd.f32 %v1268, %v1362
    %v1372 = vadd.f32 %v1269, %v1367
    %v1373 = vld [vmem:[%s4] sm:$0x1]
    %v1375 = vlaneseq
    %v1376 = vshrl.u32 %v1375, 7
    %v1377 = vsub.s32 0, %v1376
    %v1378 = vrot.slane %v1373, %v1377
    %v1380 = vadd.f32 %v1370, %v1378
    %v1381 = vadd.f32 %v1371, %v1378
    %v1382 = vadd.f32 %v1372, %v1378
    %v1383 = vmax.f32 %v1380, 0.0
    %v1384 = vmax.f32 %v1381, 0.0
    %v1385 = vmax.f32 %v1382, 0.0
    %1386 = vst [vmem:[#allocation4] sm:$0xff] %v1383
    %1387 = vst [vmem:[#allocation4 + $0x8] sm:$0xff] %v1384
    %1388 = vst [vmem:[#allocation4 + $0x10] sm:$0xff] %v1385
    %v1389 = vld [vmem:[#allocation4] sm:$0xff]
    %v1390 = vld [vmem:[#allocation4 + $0x8] sm:$0xff]
    %v1391 = vld [vmem:[#allocation4 + $0x10] sm:$0xf]
    %v1392 = vld [vmem:[#allocation4 + $0x2] sm:$0xff]
    %v1393 = vld [vmem:[#allocation4 + $0xa] sm:$0xff]
    %v1394 = vld [vmem:[#allocation4 + $0x12] sm:$0xf]
    %v1395 = vmax.f32 %v1389, %v1392
    %v1396 = vmax.f32 %v1390, %v1393
    %v1397 = vmax.f32 %v1391, %v1394
    %v1398 = vld [vmem:[#allocation4 + $0x4] sm:$0xff]
    %v1399 = vld [vmem:[#allocation4 + $0xc] sm:$0xff]
    %v1400 = vld [vmem:[#allocation4 + $0x14] sm:$0xf]
    %v1401 = vmax.f32 %v1395, %v1398
    %v1402 = vmax.f32 %v1396, %v1399
    %v1403 = vmax.f32 %v1397, %v1400
    %1404 = vst [vmem:[#allocation5] sm:$0xff] %v1401
    %1405 = vst [vmem:[#allocation5 + $0x8] sm:$0xff] %v1402
    %1406 = vst [vmem:[#allocation5 + $0x10] sm:$0xf] %v1403
    %v1407 = vld [vmem:[#allocation5] sm:$0x3]
    %v1408 = vld [vmem:[%s5] sm:$0xff]
    %v1409 = vld [vmem:[%s5 + $0x8] sm:$0xff]
    %v1410 = vld [vmem:[%s5 + $0x10] sm:$0xff]
    %v1411 = vld [vmem:[%s5 + $0x18] sm:$0xff]
    %v1412 = vld [vmem:[%s5 + $0x20] sm:$0xff]
    %v1413 = vld [vmem:[%s5 + $0x28] sm:$0xff]
    %v1414 = vld [vmem:[%s5 + $0x30] sm:$0xff]
    %v1415 = vld [vmem:[%s5 + $0x38] sm:$0xff]
    %v1416 = vld [vmem:[%s5 + $0x40] sm:$0xff]
    %v1417 = vld [vmem:[%s5 + $0x48] sm:$0xff]
    %v1418 = vld [vmem:[%s5 + $0x50] sm:$0xff]
    %v1419 = vld [vmem:[%s5 + $0x58] sm:$0xff]
    %v1420 = vld [vmem:[%s5 + $0x60] sm:$0xff]
    %v1421 = vld [vmem:[%s5 + $0x68] sm:$0xff]
    %v1422 = vld [vmem:[%s5 + $0x70] sm:$0xff]
    %v1423 = vld [vmem:[%s5 + $0x78] sm:$0xff]
    %v1424 = vld [vmem:[#allocation5 + $0x2] sm:$0x3]
    %s1425 = scalar_lea.vmem %s5, 128
    %v1426 = vld [vmem:[%s1425] sm:$0xff]
    %v1427 = vld [vmem:[%s1425 + $0x8] sm:$0xff]
    %v1428 = vld [vmem:[%s1425 + $0x10] sm:$0xff]
    %v1429 = vld [vmem:[%s1425 + $0x18] sm:$0xff]
    %v1430 = vld [vmem:[%s1425 + $0x20] sm:$0xff]
    %v1431 = vld [vmem:[%s1425 + $0x28] sm:$0xff]
    %v1432 = vld [vmem:[%s1425 + $0x30] sm:$0xff]
    %v1433 = vld [vmem:[%s1425 + $0x38] sm:$0xff]
    %v1434 = vld [vmem:[%s1425 + $0x40] sm:$0xff]
    %v1435 = vld [vmem:[%s1425 + $0x48] sm:$0xff]
    %v1436 = vld [vmem:[%s1425 + $0x50] sm:$0xff]
    %v1437 = vld [vmem:[%s1425 + $0x58] sm:$0xff]
    %v1438 = vld [vmem:[%s1425 + $0x60] sm:$0xff]
    %v1439 = vld [vmem:[%s1425 + $0x68] sm:$0xff]
    %v1440 = vld [vmem:[%s1425 + $0x70] sm:$0xff]
    %v1441 = vld [vmem:[%s1425 + $0x78] sm:$0xff]
    %1442 = vmatprep.subr.mxu0 0.0
    %1443 = vmatpush1.msra.mxu0 %v1426
    %1444 = vmatprep.subr.mxu0 0.0
    %1445 = vmatpush1.msra.mxu0 %v1427
    %1446 = vmatprep.subr.mxu0 0.0
    %1447 = vmatpush1.msra.mxu0 %v1428
    %1448 = vmatprep.subr.mxu0 0.0
    %1449 = vmatpush1.msra.mxu0 %v1429
    %1450 = vmatprep.subr.mxu0 0.0
    %1451 = vmatpush1.msra.mxu0 %v1430
    %1452 = vmatprep.subr.mxu0 0.0
    %1453 = vmatpush1.msra.mxu0 %v1431
    %1454 = vmatprep.subr.mxu0 0.0
    %1455 = vmatpush1.msra.mxu0 %v1432
    %1456 = vmatprep.subr.mxu0 0.0
    %1457 = vmatpush1.msra.mxu0 %v1433
    %1458 = vmatprep.subr.mxu0 0.0
    %1459 = vmatpush1.msra.mxu0 %v1434
    %1460 = vmatprep.subr.mxu0 0.0
    %1461 = vmatpush1.msra.mxu0 %v1435
    %1462 = vmatprep.subr.mxu0 0.0
    %1463 = vmatpush1.msra.mxu0 %v1436
    %1464 = vmatprep.subr.mxu0 0.0
    %1465 = vmatpush1.msra.mxu0 %v1437
    %1466 = vmatprep.subr.mxu0 0.0
    %1467 = vmatpush1.msra.mxu0 %v1438
    %1468 = vmatprep.subr.mxu0 0.0
    %1469 = vmatpush1.msra.mxu0 %v1439
    %1470 = vmatprep.subr.mxu0 0.0
    %1471 = vmatpush1.msra.mxu0 %v1440
    %1472 = vmatprep.subr.mxu0 0.0
    %1473 = vmatpush1.msra.mxu0 %v1441
    %1474 = vmatprep.subr.mxu0 0.0
    %1475 = vmatpush1.msra.mxu0 0.0
    %1476 = vmatprep.subr.mxu0 0.0
    %1477 = vmatpush1.msra.mxu0 0.0
    %1478 = vmatprep.subr.mxu0 0.0
    %1479 = vmatpush1.msra.mxu0 0.0
    %1480 = vmatprep.subr.mxu0 0.0
    %1481 = vmatpush1.msra.mxu0 0.0
    %1482 = vmatprep.subr.mxu0 0.0
    %1483 = vmatpush1.msra.mxu0 0.0
    %1484 = vmatprep.subr.mxu0 0.0
    %1485 = vmatpush1.msra.mxu0 0.0
    %1486 = vmatprep.subr.mxu0 0.0
    %1487 = vmatpush1.msra.mxu0 0.0
    %1488 = vmatprep.subr.mxu0 0.0
    %1489 = vmatpush1.msra.mxu0 0.0
    %1490 = vmatprep.subr.mxu0 0.0
    %1491 = vmatpush1.msra.mxu0 0.0
    %1492 = vmatprep.subr.mxu0 0.0
    %1493 = vmatpush1.msra.mxu0 0.0
    %1494 = vmatprep.subr.mxu0 0.0
    %1495 = vmatpush1.msra.mxu0 0.0
    %1496 = vmatprep.subr.mxu0 0.0
    %1497 = vmatpush1.msra.mxu0 0.0
    %1498 = vmatprep.subr.mxu0 0.0
    %1499 = vmatpush1.msra.mxu0 0.0
    %1500 = vmatprep.subr.mxu0 0.0
    %1501 = vmatpush1.msra.mxu0 0.0
    %1502 = vmatprep.subr.mxu0 0.0
    %1503 = vmatpush1.msra.mxu0 0.0
    %1504 = vmatprep.subr.mxu0 0.0
    %1505 = vmatpush1.msra.mxu0 0.0
    %1506 = vmatprep.mubr.f32.mxu0 0.0
    %1507 = vmatmul.mubr.f32.gmra.mrb[0].mxu0 %v1424
    %v1508 = vpop.f32.mrb[0].mxu0
    %v1509 = vadd.f32 0.0, %v1508
    %v1510 = vpop.f32.mrb[0].mxu0
    %1511 = vdwg.mxu0
    %1512 = vmatprep.subr.mxu0 0.0
    %1513 = vmatpush1.msra.mxu0 %v1408
    %1514 = vmatprep.subr.mxu0 0.0
    %1515 = vmatpush1.msra.mxu0 %v1409
    %1516 = vmatprep.subr.mxu0 0.0
    %1517 = vmatpush1.msra.mxu0 %v1410
    %1518 = vmatprep.subr.mxu0 0.0
    %1519 = vmatpush1.msra.mxu0 %v1411
    %1520 = vmatprep.subr.mxu0 0.0
    %1521 = vmatpush1.msra.mxu0 %v1412
    %1522 = vmatprep.subr.mxu0 0.0
    %1523 = vmatpush1.msra.mxu0 %v1413
    %1524 = vmatprep.subr.mxu0 0.0
    %1525 = vmatpush1.msra.mxu0 %v1414
    %1526 = vmatprep.subr.mxu0 0.0
    %1527 = vmatpush1.msra.mxu0 %v1415
    %1528 = vmatprep.subr.mxu0 0.0
    %1529 = vmatpush1.msra.mxu0 %v1416
    %1530 = vmatprep.subr.mxu0 0.0
    %1531 = vmatpush1.msra.mxu0 %v1417
    %1532 = vmatprep.subr.mxu0 0.0
    %1533 = vmatpush1.msra.mxu0 %v1418
    %1534 = vmatprep.subr.mxu0 0.0
    %1535 = vmatpush1.msra.mxu0 %v1419
    %1536 = vmatprep.subr.mxu0 0.0
    %1537 = vmatpush1.msra.mxu0 %v1420
    %1538 = vmatprep.subr.mxu0 0.0
    %1539 = vmatpush1.msra.mxu0 %v1421
    %1540 = vmatprep.subr.mxu0 0.0
    %1541 = vmatpush1.msra.mxu0 %v1422
    %1542 = vmatprep.subr.mxu0 0.0
    %1543 = vmatpush1.msra.mxu0 %v1423
    %1544 = vmatprep.subr.mxu0 0.0
    %1545 = vmatpush1.msra.mxu0 0.0
    %1546 = vmatprep.subr.mxu0 0.0
    %1547 = vmatpush1.msra.mxu0 0.0
    %1548 = vmatprep.subr.mxu0 0.0
    %1549 = vmatpush1.msra.mxu0 0.0
    %1550 = vmatprep.subr.mxu0 0.0
    %1551 = vmatpush1.msra.mxu0 0.0
    %1552 = vmatprep.subr.mxu0 0.0
    %1553 = vmatpush1.msra.mxu0 0.0
    %1554 = vmatprep.subr.mxu0 0.0
    %1555 = vmatpush1.msra.mxu0 0.0
    %1556 = vmatprep.subr.mxu0 0.0
    %1557 = vmatpush1.msra.mxu0 0.0
    %1558 = vmatprep.subr.mxu0 0.0
    %1559 = vmatpush1.msra.mxu0 0.0
    %1560 = vmatprep.subr.mxu0 0.0
    %1561 = vmatpush1.msra.mxu0 0.0
    %1562 = vmatprep.subr.mxu0 0.0
    %1563 = vmatpush1.msra.mxu0 0.0
    %1564 = vmatprep.subr.mxu0 0.0
    %1565 = vmatpush1.msra.mxu0 0.0
    %1566 = vmatprep.subr.mxu0 0.0
    %1567 = vmatpush1.msra.mxu0 0.0
    %1568 = vmatprep.subr.mxu0 0.0
    %1569 = vmatpush1.msra.mxu0 0.0
    %1570 = vmatprep.subr.mxu0 0.0
    %1571 = vmatpush1.msra.mxu0 0.0
    %1572 = vmatprep.subr.mxu0 0.0
    %1573 = vmatpush1.msra.mxu0 0.0
    %1574 = vmatprep.subr.mxu0 0.0
    %1575 = vmatpush1.msra.mxu0 0.0
    %1576 = vmatprep.mubr.f32.mxu0 0.0
    %1577 = vmatmul.mubr.f32.gmra.mrb[0].mxu0 %v1407
    %v1578 = vpop.f32.mrb[0].mxu0
    %v1579 = vadd.f32 %v1509, %v1578
    %v1580 = vpop.f32.mrb[0].mxu0
    %1581 = vdwg.mxu0
    %v1582 = vld [vmem:[#allocation5 + $0x4] sm:$0x3]
    %s1583 = scalar_lea.vmem %s5, 256
    %v1584 = vld [vmem:[%s1583] sm:$0xff]
    %v1585 = vld [vmem:[%s1583 + $0x8] sm:$0xff]
    %v1586 = vld [vmem:[%s1583 + $0x10] sm:$0xff]
    %v1587 = vld [vmem:[%s1583 + $0x18] sm:$0xff]
    %v1588 = vld [vmem:[%s1583 + $0x20] sm:$0xff]
    %v1589 = vld [vmem:[%s1583 + $0x28] sm:$0xff]
    %v1590 = vld [vmem:[%s1583 + $0x30] sm:$0xff]
    %v1591 = vld [vmem:[%s1583 + $0x38] sm:$0xff]
    %v1592 = vld [vmem:[%s1583 + $0x40] sm:$0xff]
    %v1593 = vld [vmem:[%s1583 + $0x48] sm:$0xff]
    %v1594 = vld [vmem:[%s1583 + $0x50] sm:$0xff]
    %v1595 = vld [vmem:[%s1583 + $0x58] sm:$0xff]
    %v1596 = vld [vmem:[%s1583 + $0x60] sm:$0xff]
    %v1597 = vld [vmem:[%s1583 + $0x68] sm:$0xff]
    %v1598 = vld [vmem:[%s1583 + $0x70] sm:$0xff]
    %v1599 = vld [vmem:[%s1583 + $0x78] sm:$0xff]
    %1600 = vmatprep.subr.mxu0 0.0
    %1601 = vmatpush1.msra.mxu0 %v1584
    %1602 = vmatprep.subr.mxu0 0.0
    %1603 = vmatpush1.msra.mxu0 %v1585
    %1604 = vmatprep.subr.mxu0 0.0
    %1605 = vmatpush1.msra.mxu0 %v1586
    %1606 = vmatprep.subr.mxu0 0.0
    %1607 = vmatpush1.msra.mxu0 %v1587
    %1608 = vmatprep.subr.mxu0 0.0
    %1609 = vmatpush1.msra.mxu0 %v1588
    %1610 = vmatprep.subr.mxu0 0.0
    %1611 = vmatpush1.msra.mxu0 %v1589
    %1612 = vmatprep.subr.mxu0 0.0
    %1613 = vmatpush1.msra.mxu0 %v1590
    %1614 = vmatprep.subr.mxu0 0.0
    %1615 = vmatpush1.msra.mxu0 %v1591
    %1616 = vmatprep.subr.mxu0 0.0
    %1617 = vmatpush1.msra.mxu0 %v1592
    %1618 = vmatprep.subr.mxu0 0.0
    %1619 = vmatpush1.msra.mxu0 %v1593
    %1620 = vmatprep.subr.mxu0 0.0
    %1621 = vmatpush1.msra.mxu0 %v1594
    %1622 = vmatprep.subr.mxu0 0.0
    %1623 = vmatpush1.msra.mxu0 %v1595
    %1624 = vmatprep.subr.mxu0 0.0
    %1625 = vmatpush1.msra.mxu0 %v1596
    %1626 = vmatprep.subr.mxu0 0.0
    %1627 = vmatpush1.msra.mxu0 %v1597
    %1628 = vmatprep.subr.mxu0 0.0
    %1629 = vmatpush1.msra.mxu0 %v1598
    %1630 = vmatprep.subr.mxu0 0.0
    %1631 = vmatpush1.msra.mxu0 %v1599
    %1632 = vmatprep.subr.mxu0 0.0
    %1633 = vmatpush1.msra.mxu0 0.0
    %1634 = vmatprep.subr.mxu0 0.0
    %1635 = vmatpush1.msra.mxu0 0.0
    %1636 = vmatprep.subr.mxu0 0.0
    %1637 = vmatpush1.msra.mxu0 0.0
    %1638 = vmatprep.subr.mxu0 0.0
    %1639 = vmatpush1.msra.mxu0 0.0
    %1640 = vmatprep.subr.mxu0 0.0
    %1641 = vmatpush1.msra.mxu0 0.0
    %1642 = vmatprep.subr.mxu0 0.0
    %1643 = vmatpush1.msra.mxu0 0.0
    %1644 = vmatprep.subr.mxu0 0.0
    %1645 = vmatpush1.msra.mxu0 0.0
    %1646 = vmatprep.subr.mxu0 0.0
    %1647 = vmatpush1.msra.mxu0 0.0
    %1648 = vmatprep.subr.mxu0 0.0
    %1649 = vmatpush1.msra.mxu0 0.0
    %1650 = vmatprep.subr.mxu0 0.0
    %1651 = vmatpush1.msra.mxu0 0.0
    %1652 = vmatprep.subr.mxu0 0.0
    %1653 = vmatpush1.msra.mxu0 0.0
    %1654 = vmatprep.subr.mxu0 0.0
    %1655 = vmatpush1.msra.mxu0 0.0
    %1656 = vmatprep.subr.mxu0 0.0
    %1657 = vmatpush1.msra.mxu0 0.0
    %1658 = vmatprep.subr.mxu0 0.0
    %1659 = vmatpush1.msra.mxu0 0.0
    %1660 = vmatprep.subr.mxu0 0.0
    %1661 = vmatpush1.msra.mxu0 0.0
    %1662 = vmatprep.subr.mxu0 0.0
    %1663 = vmatpush1.msra.mxu0 0.0
    %1664 = vmatprep.mubr.f32.mxu0 0.0
    %1665 = vmatmul.mubr.f32.gmra.mrb[0].mxu0 %v1582
    %v1666 = vpop.f32.mrb[0].mxu0
    %v1667 = vadd.f32 0.0, %v1666
    %v1668 = vpop.f32.mrb[0].mxu0
    %1669 = vdwg.mxu0
    %v1670 = vadd.f32 %v1579, %v1667
    %v1671 = vld [vmem:[#allocation5 + $0x6] sm:$0x3]
    %s1672 = scalar_lea.vmem %s5, 384
    %v1673 = vld [vmem:[%s1672] sm:$0xff]
    %v1674 = vld [vmem:[%s1672 + $0x8] sm:$0xff]
    %v1675 = vld [vmem:[%s1672 + $0x10] sm:$0xff]
    %v1676 = vld [vmem:[%s1672 + $0x18] sm:$0xff]
    %v1677 = vld [vmem:[%s1672 + $0x20] sm:$0xff]
    %v1678 = vld [vmem:[%s1672 + $0x28] sm:$0xff]
    %v1679 = vld [vmem:[%s1672 + $0x30] sm:$0xff]
    %v1680 = vld [vmem:[%s1672 + $0x38] sm:$0xff]
    %v1681 = vld [vmem:[%s1672 + $0x40] sm:$0xff]
    %v1682 = vld [vmem:[%s1672 + $0x48] sm:$0xff]
    %v1683 = vld [vmem:[%s1672 + $0x50] sm:$0xff]
    %v1684 = vld [vmem:[%s1672 + $0x58] sm:$0xff]
    %v1685 = vld [vmem:[%s1672 + $0x60] sm:$0xff]
    %v1686 = vld [vmem:[%s1672 + $0x68] sm:$0xff]
    %v1687 = vld [vmem:[%s1672 + $0x70] sm:$0xff]
    %v1688 = vld [vmem:[%s1672 + $0x78] sm:$0xff]
    %1689 = vmatprep.subr.mxu0 0.0
    %1690 = vmatpush1.msra.mxu0 %v1673
    %1691 = vmatprep.subr.mxu0 0.0
    %1692 = vmatpush1.msra.mxu0 %v1674
    %1693 = vmatprep.subr.mxu0 0.0
    %1694 = vmatpush1.msra.mxu0 %v1675
    %1695 = vmatprep.subr.mxu0 0.0
    %1696 = vmatpush1.msra.mxu0 %v1676
    %1697 = vmatprep.subr.mxu0 0.0
    %1698 = vmatpush1.msra.mxu0 %v1677
    %1699 = vmatprep.subr.mxu0 0.0
    %1700 = vmatpush1.msra.mxu0 %v1678
    %1701 = vmatprep.subr.mxu0 0.0
    %1702 = vmatpush1.msra.mxu0 %v1679
    %1703 = vmatprep.subr.mxu0 0.0
    %1704 = vmatpush1.msra.mxu0 %v1680
    %1705 = vmatprep.subr.mxu0 0.0
    %1706 = vmatpush1.msra.mxu0 %v1681
    %1707 = vmatprep.subr.mxu0 0.0
    %1708 = vmatpush1.msra.mxu0 %v1682
    %1709 = vmatprep.subr.mxu0 0.0
    %1710 = vmatpush1.msra.mxu0 %v1683
    %1711 = vmatprep.subr.mxu0 0.0
    %1712 = vmatpush1.msra.mxu0 %v1684
    %1713 = vmatprep.subr.mxu0 0.0
    %1714 = vmatpush1.msra.mxu0 %v1685
    %1715 = vmatprep.subr.mxu0 0.0
    %1716 = vmatpush1.msra.mxu0 %v1686
    %1717 = vmatprep.subr.mxu0 0.0
    %1718 = vmatpush1.msra.mxu0 %v1687
    %1719 = vmatprep.subr.mxu0 0.0
    %1720 = vmatpush1.msra.mxu0 %v1688
    %1721 = vmatprep.subr.mxu0 0.0
    %1722 = vmatpush1.msra.mxu0 0.0
    %1723 = vmatprep.subr.mxu0 0.0
    %1724 = vmatpush1.msra.mxu0 0.0
    %1725 = vmatprep.subr.mxu0 0.0
    %1726 = vmatpush1.msra.mxu0 0.0
    %1727 = vmatprep.subr.mxu0 0.0
    %1728 = vmatpush1.msra.mxu0 0.0
    %1729 = vmatprep.subr.mxu0 0.0
    %1730 = vmatpush1.msra.mxu0 0.0
    %1731 = vmatprep.subr.mxu0 0.0
    %1732 = vmatpush1.msra.mxu0 0.0
    %1733 = vmatprep.subr.mxu0 0.0
    %1734 = vmatpush1.msra.mxu0 0.0
    %1735 = vmatprep.subr.mxu0 0.0
    %1736 = vmatpush1.msra.mxu0 0.0
    %1737 = vmatprep.subr.mxu0 0.0
    %1738 = vmatpush1.msra.mxu0 0.0
    %1739 = vmatprep.subr.mxu0 0.0
    %1740 = vmatpush1.msra.mxu0 0.0
    %1741 = vmatprep.subr.mxu0 0.0
    %1742 = vmatpush1.msra.mxu0 0.0
    %1743 = vmatprep.subr.mxu0 0.0
    %1744 = vmatpush1.msra.mxu0 0.0
    %1745 = vmatprep.subr.mxu0 0.0
    %1746 = vmatpush1.msra.mxu0 0.0
    %1747 = vmatprep.subr.mxu0 0.0
    %1748 = vmatpush1.msra.mxu0 0.0
    %1749 = vmatprep.subr.mxu0 0.0
    %1750 = vmatpush1.msra.mxu0 0.0
    %1751 = vmatprep.subr.mxu0 0.0
    %1752 = vmatpush1.msra.mxu0 0.0
    %1753 = vmatprep.mubr.f32.mxu0 0.0
    %1754 = vmatmul.mubr.f32.gmra.mrb[0].mxu0 %v1671
    %v1755 = vpop.f32.mrb[0].mxu0
    %v1756 = vadd.f32 0.0, %v1755
    %v1757 = vpop.f32.mrb[0].mxu0
    %1758 = vdwg.mxu0
    %v1759 = vadd.f32 %v1670, %v1756
    %v1760 = vld [vmem:[#allocation5 + $0x8] sm:$0x3]
    %s1761 = scalar_lea.vmem %s5, 512
    %v1762 = vld [vmem:[%s1761] sm:$0xff]
    %v1763 = vld [vmem:[%s1761 + $0x8] sm:$0xff]
    %v1764 = vld [vmem:[%s1761 + $0x10] sm:$0xff]
    %v1765 = vld [vmem:[%s1761 + $0x18] sm:$0xff]
    %v1766 = vld [vmem:[%s1761 + $0x20] sm:$0xff]
    %v1767 = vld [vmem:[%s1761 + $0x28] sm:$0xff]
    %v1768 = vld [vmem:[%s1761 + $0x30] sm:$0xff]
    %v1769 = vld [vmem:[%s1761 + $0x38] sm:$0xff]
    %v1770 = vld [vmem:[%s1761 + $0x40] sm:$0xff]
    %v1771 = vld [vmem:[%s1761 + $0x48] sm:$0xff]
    %v1772 = vld [vmem:[%s1761 + $0x50] sm:$0xff]
    %v1773 = vld [vmem:[%s1761 + $0x58] sm:$0xff]
    %v1774 = vld [vmem:[%s1761 + $0x60] sm:$0xff]
    %v1775 = vld [vmem:[%s1761 + $0x68] sm:$0xff]
    %v1776 = vld [vmem:[%s1761 + $0x70] sm:$0xff]
    %v1777 = vld [vmem:[%s1761 + $0x78] sm:$0xff]
    %1778 = vmatprep.subr.mxu0 0.0
    %1779 = vmatpush1.msra.mxu0 %v1762
    %1780 = vmatprep.subr.mxu0 0.0
    %1781 = vmatpush1.msra.mxu0 %v1763
    %1782 = vmatprep.subr.mxu0 0.0
    %1783 = vmatpush1.msra.mxu0 %v1764
    %1784 = vmatprep.subr.mxu0 0.0
    %1785 = vmatpush1.msra.mxu0 %v1765
    %1786 = vmatprep.subr.mxu0 0.0
    %1787 = vmatpush1.msra.mxu0 %v1766
    %1788 = vmatprep.subr.mxu0 0.0
    %1789 = vmatpush1.msra.mxu0 %v1767
    %1790 = vmatprep.subr.mxu0 0.0
    %1791 = vmatpush1.msra.mxu0 %v1768
    %1792 = vmatprep.subr.mxu0 0.0
    %1793 = vmatpush1.msra.mxu0 %v1769
    %1794 = vmatprep.subr.mxu0 0.0
    %1795 = vmatpush1.msra.mxu0 %v1770
    %1796 = vmatprep.subr.mxu0 0.0
    %1797 = vmatpush1.msra.mxu0 %v1771
    %1798 = vmatprep.subr.mxu0 0.0
    %1799 = vmatpush1.msra.mxu0 %v1772
    %1800 = vmatprep.subr.mxu0 0.0
    %1801 = vmatpush1.msra.mxu0 %v1773
    %1802 = vmatprep.subr.mxu0 0.0
    %1803 = vmatpush1.msra.mxu0 %v1774
    %1804 = vmatprep.subr.mxu0 0.0
    %1805 = vmatpush1.msra.mxu0 %v1775
    %1806 = vmatprep.subr.mxu0 0.0
    %1807 = vmatpush1.msra.mxu0 %v1776
    %1808 = vmatprep.subr.mxu0 0.0
    %1809 = vmatpush1.msra.mxu0 %v1777
    %1810 = vmatprep.subr.mxu0 0.0
    %1811 = vmatpush1.msra.mxu0 0.0
    %1812 = vmatprep.subr.mxu0 0.0
    %1813 = vmatpush1.msra.mxu0 0.0
    %1814 = vmatprep.subr.mxu0 0.0
    %1815 = vmatpush1.msra.mxu0 0.0
    %1816 = vmatprep.subr.mxu0 0.0
    %1817 = vmatpush1.msra.mxu0 0.0
    %1818 = vmatprep.subr.mxu0 0.0
    %1819 = vmatpush1.msra.mxu0 0.0
    %1820 = vmatprep.subr.mxu0 0.0
    %1821 = vmatpush1.msra.mxu0 0.0
    %1822 = vmatprep.subr.mxu0 0.0
    %1823 = vmatpush1.msra.mxu0 0.0
    %1824 = vmatprep.subr.mxu0 0.0
    %1825 = vmatpush1.msra.mxu0 0.0
    %1826 = vmatprep.subr.mxu0 0.0
    %1827 = vmatpush1.msra.mxu0 0.0
    %1828 = vmatprep.subr.mxu0 0.0
    %1829 = vmatpush1.msra.mxu0 0.0
    %1830 = vmatprep.subr.mxu0 0.0
    %1831 = vmatpush1.msra.mxu0 0.0
    %1832 = vmatprep.subr.mxu0 0.0
    %1833 = vmatpush1.msra.mxu0 0.0
    %1834 = vmatprep.subr.mxu0 0.0
    %1835 = vmatpush1.msra.mxu0 0.0
    %1836 = vmatprep.subr.mxu0 0.0
    %1837 = vmatpush1.msra.mxu0 0.0
    %1838 = vmatprep.subr.mxu0 0.0
    %1839 = vmatpush1.msra.mxu0 0.0
    %1840 = vmatprep.subr.mxu0 0.0
    %1841 = vmatpush1.msra.mxu0 0.0
    %1842 = vmatprep.mubr.f32.mxu0 0.0
    %1843 = vmatmul.mubr.f32.gmra.mrb[0].mxu0 %v1760
    %v1844 = vpop.f32.mrb[0].mxu0
    %v1845 = vadd.f32 0.0, %v1844
    %v1846 = vpop.f32.mrb[0].mxu0
    %1847 = vdwg.mxu0
    %v1848 = vadd.f32 %v1759, %v1845
    %v1849 = vld [vmem:[#allocation5 + $0xa] sm:$0x3]
    %s1850 = scalar_lea.vmem %s5, 640
    %v1851 = vld [vmem:[%s1850] sm:$0xff]
    %v1852 = vld [vmem:[%s1850 + $0x8] sm:$0xff]
    %v1853 = vld [vmem:[%s1850 + $0x10] sm:$0xff]
    %v1854 = vld [vmem:[%s1850 + $0x18] sm:$0xff]
    %v1855 = vld [vmem:[%s1850 + $0x20] sm:$0xff]
    %v1856 = vld [vmem:[%s1850 + $0x28] sm:$0xff]
    %v1857 = vld [vmem:[%s1850 + $0x30] sm:$0xff]
    %v1858 = vld [vmem:[%s1850 + $0x38] sm:$0xff]
    %v1859 = vld [vmem:[%s1850 + $0x40] sm:$0xff]
    %v1860 = vld [vmem:[%s1850 + $0x48] sm:$0xff]
    %v1861 = vld [vmem:[%s1850 + $0x50] sm:$0xff]
    %v1862 = vld [vmem:[%s1850 + $0x58] sm:$0xff]
    %v1863 = vld [vmem:[%s1850 + $0x60] sm:$0xff]
    %v1864 = vld [vmem:[%s1850 + $0x68] sm:$0xff]
    %v1865 = vld [vmem:[%s1850 + $0x70] sm:$0xff]
    %v1866 = vld [vmem:[%s1850 + $0x78] sm:$0xff]
    %1867 = vmatprep.subr.mxu0 0.0
    %1868 = vmatpush1.msra.mxu0 %v1851
    %1869 = vmatprep.subr.mxu0 0.0
    %1870 = vmatpush1.msra.mxu0 %v1852
    %1871 = vmatprep.subr.mxu0 0.0
    %1872 = vmatpush1.msra.mxu0 %v1853
    %1873 = vmatprep.subr.mxu0 0.0
    %1874 = vmatpush1.msra.mxu0 %v1854
    %1875 = vmatprep.subr.mxu0 0.0
    %1876 = vmatpush1.msra.mxu0 %v1855
    %1877 = vmatprep.subr.mxu0 0.0
    %1878 = vmatpush1.msra.mxu0 %v1856
    %1879 = vmatprep.subr.mxu0 0.0
    %1880 = vmatpush1.msra.mxu0 %v1857
    %1881 = vmatprep.subr.mxu0 0.0
    %1882 = vmatpush1.msra.mxu0 %v1858
    %1883 = vmatprep.subr.mxu0 0.0
    %1884 = vmatpush1.msra.mxu0 %v1859
    %1885 = vmatprep.subr.mxu0 0.0
    %1886 = vmatpush1.msra.mxu0 %v1860
    %1887 = vmatprep.subr.mxu0 0.0
    %1888 = vmatpush1.msra.mxu0 %v1861
    %1889 = vmatprep.subr.mxu0 0.0
    %1890 = vmatpush1.msra.mxu0 %v1862
    %1891 = vmatprep.subr.mxu0 0.0
    %1892 = vmatpush1.msra.mxu0 %v1863
    %1893 = vmatprep.subr.mxu0 0.0
    %1894 = vmatpush1.msra.mxu0 %v1864
    %1895 = vmatprep.subr.mxu0 0.0
    %1896 = vmatpush1.msra.mxu0 %v1865
    %1897 = vmatprep.subr.mxu0 0.0
    %1898 = vmatpush1.msra.mxu0 %v1866
    %1899 = vmatprep.subr.mxu0 0.0
    %1900 = vmatpush1.msra.mxu0 0.0
    %1901 = vmatprep.subr.mxu0 0.0
    %1902 = vmatpush1.msra.mxu0 0.0
    %1903 = vmatprep.subr.mxu0 0.0
    %1904 = vmatpush1.msra.mxu0 0.0
    %1905 = vmatprep.subr.mxu0 0.0
    %1906 = vmatpush1.msra.mxu0 0.0
    %1907 = vmatprep.subr.mxu0 0.0
    %1908 = vmatpush1.msra.mxu0 0.0
    %1909 = vmatprep.subr.mxu0 0.0
    %1910 = vmatpush1.msra.mxu0 0.0
    %1911 = vmatprep.subr.mxu0 0.0
    %1912 = vmatpush1.msra.mxu0 0.0
    %1913 = vmatprep.subr.mxu0 0.0
    %1914 = vmatpush1.msra.mxu0 0.0
    %1915 = vmatprep.subr.mxu0 0.0
    %1916 = vmatpush1.msra.mxu0 0.0
    %1917 = vmatprep.subr.mxu0 0.0
    %1918 = vmatpush1.msra.mxu0 0.0
    %1919 = vmatprep.subr.mxu0 0.0
    %1920 = vmatpush1.msra.mxu0 0.0
    %1921 = vmatprep.subr.mxu0 0.0
    %1922 = vmatpush1.msra.mxu0 0.0
    %1923 = vmatprep.subr.mxu0 0.0
    %1924 = vmatpush1.msra.mxu0 0.0
    %1925 = vmatprep.subr.mxu0 0.0
    %1926 = vmatpush1.msra.mxu0 0.0
    %1927 = vmatprep.subr.mxu0 0.0
    %1928 = vmatpush1.msra.mxu0 0.0
    %1929 = vmatprep.subr.mxu0 0.0
    %1930 = vmatpush1.msra.mxu0 0.0
    %1931 = vmatprep.mubr.f32.mxu0 0.0
    %1932 = vmatmul.mubr.f32.gmra.mrb[0].mxu0 %v1849
    %v1933 = vpop.f32.mrb[0].mxu0
    %v1934 = vadd.f32 0.0, %v1933
    %v1935 = vpop.f32.mrb[0].mxu0
    %1936 = vdwg.mxu0
    %v1937 = vadd.f32 %v1848, %v1934
    %v1938 = vld [vmem:[#allocation5 + $0xc] sm:$0x3]
    %s1939 = scalar_lea.vmem %s5, 768
    %v1940 = vld [vmem:[%s1939] sm:$0xff]
    %v1941 = vld [vmem:[%s1939 + $0x8] sm:$0xff]
    %v1942 = vld [vmem:[%s1939 + $0x10] sm:$0xff]
    %v1943 = vld [vmem:[%s1939 + $0x18] sm:$0xff]
    %v1944 = vld [vmem:[%s1939 + $0x20] sm:$0xff]
    %v1945 = vld [vmem:[%s1939 + $0x28] sm:$0xff]
    %v1946 = vld [vmem:[%s1939 + $0x30] sm:$0xff]
    %v1947 = vld [vmem:[%s1939 + $0x38] sm:$0xff]
    %v1948 = vld [vmem:[%s1939 + $0x40] sm:$0xff]
    %v1949 = vld [vmem:[%s1939 + $0x48] sm:$0xff]
    %v1950 = vld [vmem:[%s1939 + $0x50] sm:$0xff]
    %v1951 = vld [vmem:[%s1939 + $0x58] sm:$0xff]
    %v1952 = vld [vmem:[%s1939 + $0x60] sm:$0xff]
    %v1953 = vld [vmem:[%s1939 + $0x68] sm:$0xff]
    %v1954 = vld [vmem:[%s1939 + $0x70] sm:$0xff]
    %v1955 = vld [vmem:[%s1939 + $0x78] sm:$0xff]
    %1956 = vmatprep.subr.mxu0 0.0
    %1957 = vmatpush1.msra.mxu0 %v1940
    %1958 = vmatprep.subr.mxu0 0.0
    %1959 = vmatpush1.msra.mxu0 %v1941
    %1960 = vmatprep.subr.mxu0 0.0
    %1961 = vmatpush1.msra.mxu0 %v1942
    %1962 = vmatprep.subr.mxu0 0.0
    %1963 = vmatpush1.msra.mxu0 %v1943
    %1964 = vmatprep.subr.mxu0 0.0
    %1965 = vmatpush1.msra.mxu0 %v1944
    %1966 = vmatprep.subr.mxu0 0.0
    %1967 = vmatpush1.msra.mxu0 %v1945
    %1968 = vmatprep.subr.mxu0 0.0
    %1969 = vmatpush1.msra.mxu0 %v1946
    %1970 = vmatprep.subr.mxu0 0.0
    %1971 = vmatpush1.msra.mxu0 %v1947
    %1972 = vmatprep.subr.mxu0 0.0
    %1973 = vmatpush1.msra.mxu0 %v1948
    %1974 = vmatprep.subr.mxu0 0.0
    %1975 = vmatpush1.msra.mxu0 %v1949
    %1976 = vmatprep.subr.mxu0 0.0
    %1977 = vmatpush1.msra.mxu0 %v1950
    %1978 = vmatprep.subr.mxu0 0.0
    %1979 = vmatpush1.msra.mxu0 %v1951
    %1980 = vmatprep.subr.mxu0 0.0
    %1981 = vmatpush1.msra.mxu0 %v1952
    %1982 = vmatprep.subr.mxu0 0.0
    %1983 = vmatpush1.msra.mxu0 %v1953
    %1984 = vmatprep.subr.mxu0 0.0
    %1985 = vmatpush1.msra.mxu0 %v1954
    %1986 = vmatprep.subr.mxu0 0.0
    %1987 = vmatpush1.msra.mxu0 %v1955
    %1988 = vmatprep.subr.mxu0 0.0
    %1989 = vmatpush1.msra.mxu0 0.0
    %1990 = vmatprep.subr.mxu0 0.0
    %1991 = vmatpush1.msra.mxu0 0.0
    %1992 = vmatprep.subr.mxu0 0.0
    %1993 = vmatpush1.msra.mxu0 0.0
    %1994 = vmatprep.subr.mxu0 0.0
    %1995 = vmatpush1.msra.mxu0 0.0
    %1996 = vmatprep.subr.mxu0 0.0
    %1997 = vmatpush1.msra.mxu0 0.0
    %1998 = vmatprep.subr.mxu0 0.0
    %1999 = vmatpush1.msra.mxu0 0.0
    %2000 = vmatprep.subr.mxu0 0.0
    %2001 = vmatpush1.msra.mxu0 0.0
    %2002 = vmatprep.subr.mxu0 0.0
    %2003 = vmatpush1.msra.mxu0 0.0
    %2004 = vmatprep.subr.mxu0 0.0
    %2005 = vmatpush1.msra.mxu0 0.0
    %2006 = vmatprep.subr.mxu0 0.0
    %2007 = vmatpush1.msra.mxu0 0.0
    %2008 = vmatprep.subr.mxu0 0.0
    %2009 = vmatpush1.msra.mxu0 0.0
    %2010 = vmatprep.subr.mxu0 0.0
    %2011 = vmatpush1.msra.mxu0 0.0
    %2012 = vmatprep.subr.mxu0 0.0
    %2013 = vmatpush1.msra.mxu0 0.0
    %2014 = vmatprep.subr.mxu0 0.0
    %2015 = vmatpush1.msra.mxu0 0.0
    %2016 = vmatprep.subr.mxu0 0.0
    %2017 = vmatpush1.msra.mxu0 0.0
    %2018 = vmatprep.subr.mxu0 0.0
    %2019 = vmatpush1.msra.mxu0 0.0
    %2020 = vmatprep.mubr.f32.mxu0 0.0
    %2021 = vmatmul.mubr.f32.gmra.mrb[0].mxu0 %v1938
    %v2022 = vpop.f32.mrb[0].mxu0
    %v2023 = vadd.f32 0.0, %v2022
    %v2024 = vpop.f32.mrb[0].mxu0
    %2025 = vdwg.mxu0
    %v2026 = vadd.f32 %v1937, %v2023
    %v2027 = vld [vmem:[#allocation5 + $0xe] sm:$0x3]
    %s2028 = scalar_lea.vmem %s5, 896
    %v2029 = vld [vmem:[%s2028] sm:$0xff]
    %v2030 = vld [vmem:[%s2028 + $0x8] sm:$0xff]
    %v2031 = vld [vmem:[%s2028 + $0x10] sm:$0xff]
    %v2032 = vld [vmem:[%s2028 + $0x18] sm:$0xff]
    %v2033 = vld [vmem:[%s2028 + $0x20] sm:$0xff]
    %v2034 = vld [vmem:[%s2028 + $0x28] sm:$0xff]
    %v2035 = vld [vmem:[%s2028 + $0x30] sm:$0xff]
    %v2036 = vld [vmem:[%s2028 + $0x38] sm:$0xff]
    %v2037 = vld [vmem:[%s2028 + $0x40] sm:$0xff]
    %v2038 = vld [vmem:[%s2028 + $0x48] sm:$0xff]
    %v2039 = vld [vmem:[%s2028 + $0x50] sm:$0xff]
    %v2040 = vld [vmem:[%s2028 + $0x58] sm:$0xff]
    %v2041 = vld [vmem:[%s2028 + $0x60] sm:$0xff]
    %v2042 = vld [vmem:[%s2028 + $0x68] sm:$0xff]
    %v2043 = vld [vmem:[%s2028 + $0x70] sm:$0xff]
    %v2044 = vld [vmem:[%s2028 + $0x78] sm:$0xff]
    %2045 = vmatprep.subr.mxu0 0.0
    %2046 = vmatpush1.msra.mxu0 %v2029
    %2047 = vmatprep.subr.mxu0 0.0
    %2048 = vmatpush1.msra.mxu0 %v2030
    %2049 = vmatprep.subr.mxu0 0.0
    %2050 = vmatpush1.msra.mxu0 %v2031
    %2051 = vmatprep.subr.mxu0 0.0
    %2052 = vmatpush1.msra.mxu0 %v2032
    %2053 = vmatprep.subr.mxu0 0.0
    %2054 = vmatpush1.msra.mxu0 %v2033
    %2055 = vmatprep.subr.mxu0 0.0
    %2056 = vmatpush1.msra.mxu0 %v2034
    %2057 = vmatprep.subr.mxu0 0.0
    %2058 = vmatpush1.msra.mxu0 %v2035
    %2059 = vmatprep.subr.mxu0 0.0
    %2060 = vmatpush1.msra.mxu0 %v2036
    %2061 = vmatprep.subr.mxu0 0.0
    %2062 = vmatpush1.msra.mxu0 %v2037
    %2063 = vmatprep.subr.mxu0 0.0
    %2064 = vmatpush1.msra.mxu0 %v2038
    %2065 = vmatprep.subr.mxu0 0.0
    %2066 = vmatpush1.msra.mxu0 %v2039
    %2067 = vmatprep.subr.mxu0 0.0
    %2068 = vmatpush1.msra.mxu0 %v2040
    %2069 = vmatprep.subr.mxu0 0.0
    %2070 = vmatpush1.msra.mxu0 %v2041
    %2071 = vmatprep.subr.mxu0 0.0
    %2072 = vmatpush1.msra.mxu0 %v2042
    %2073 = vmatprep.subr.mxu0 0.0
    %2074 = vmatpush1.msra.mxu0 %v2043
    %2075 = vmatprep.subr.mxu0 0.0
    %2076 = vmatpush1.msra.mxu0 %v2044
    %2077 = vmatprep.subr.mxu0 0.0
    %2078 = vmatpush1.msra.mxu0 0.0
    %2079 = vmatprep.subr.mxu0 0.0
    %2080 = vmatpush1.msra.mxu0 0.0
    %2081 = vmatprep.subr.mxu0 0.0
    %2082 = vmatpush1.msra.mxu0 0.0
    %2083 = vmatprep.subr.mxu0 0.0
    %2084 = vmatpush1.msra.mxu0 0.0
    %2085 = vmatprep.subr.mxu0 0.0
    %2086 = vmatpush1.msra.mxu0 0.0
    %2087 = vmatprep.subr.mxu0 0.0
    %2088 = vmatpush1.msra.mxu0 0.0
    %2089 = vmatprep.subr.mxu0 0.0
    %2090 = vmatpush1.msra.mxu0 0.0
    %2091 = vmatprep.subr.mxu0 0.0
    %2092 = vmatpush1.msra.mxu0 0.0
    %2093 = vmatprep.subr.mxu0 0.0
    %2094 = vmatpush1.msra.mxu0 0.0
    %2095 = vmatprep.subr.mxu0 0.0
    %2096 = vmatpush1.msra.mxu0 0.0
    %2097 = vmatprep.subr.mxu0 0.0
    %2098 = vmatpush1.msra.mxu0 0.0
    %2099 = vmatprep.subr.mxu0 0.0
    %2100 = vmatpush1.msra.mxu0 0.0
    %2101 = vmatprep.subr.mxu0 0.0
    %2102 = vmatpush1.msra.mxu0 0.0
    %2103 = vmatprep.subr.mxu0 0.0
    %2104 = vmatpush1.msra.mxu0 0.0
    %2105 = vmatprep.subr.mxu0 0.0
    %2106 = vmatpush1.msra.mxu0 0.0
    %2107 = vmatprep.subr.mxu0 0.0
    %2108 = vmatpush1.msra.mxu0 0.0
    %2109 = vmatprep.mubr.f32.mxu0 0.0
    %2110 = vmatmul.mubr.f32.gmra.mrb[0].mxu0 %v2027
    %v2111 = vpop.f32.mrb[0].mxu0
    %v2112 = vadd.f32 0.0, %v2111
    %v2113 = vpop.f32.mrb[0].mxu0
    %2114 = vdwg.mxu0
    %v2115 = vadd.f32 %v2026, %v2112
    %v2116 = vld [vmem:[#allocation5 + $0x10] sm:$0x3]
    %s2117 = scalar_lea.vmem %s5, 1024
    %v2118 = vld [vmem:[%s2117] sm:$0xff]
    %v2119 = vld [vmem:[%s2117 + $0x8] sm:$0xff]
    %v2120 = vld [vmem:[%s2117 + $0x10] sm:$0xff]
    %v2121 = vld [vmem:[%s2117 + $0x18] sm:$0xff]
    %v2122 = vld [vmem:[%s2117 + $0x20] sm:$0xff]
    %v2123 = vld [vmem:[%s2117 + $0x28] sm:$0xff]
    %v2124 = vld [vmem:[%s2117 + $0x30] sm:$0xff]
    %v2125 = vld [vmem:[%s2117 + $0x38] sm:$0xff]
    %v2126 = vld [vmem:[%s2117 + $0x40] sm:$0xff]
    %v2127 = vld [vmem:[%s2117 + $0x48] sm:$0xff]
    %v2128 = vld [vmem:[%s2117 + $0x50] sm:$0xff]
    %v2129 = vld [vmem:[%s2117 + $0x58] sm:$0xff]
    %v2130 = vld [vmem:[%s2117 + $0x60] sm:$0xff]
    %v2131 = vld [vmem:[%s2117 + $0x68] sm:$0xff]
    %v2132 = vld [vmem:[%s2117 + $0x70] sm:$0xff]
    %v2133 = vld [vmem:[%s2117 + $0x78] sm:$0xff]
    %2134 = vmatprep.subr.mxu0 0.0
    %2135 = vmatpush1.msra.mxu0 %v2118
    %2136 = vmatprep.subr.mxu0 0.0
    %2137 = vmatpush1.msra.mxu0 %v2119
    %2138 = vmatprep.subr.mxu0 0.0
    %2139 = vmatpush1.msra.mxu0 %v2120
    %2140 = vmatprep.subr.mxu0 0.0
    %2141 = vmatpush1.msra.mxu0 %v2121
    %2142 = vmatprep.subr.mxu0 0.0
    %2143 = vmatpush1.msra.mxu0 %v2122
    %2144 = vmatprep.subr.mxu0 0.0
    %2145 = vmatpush1.msra.mxu0 %v2123
    %2146 = vmatprep.subr.mxu0 0.0
    %2147 = vmatpush1.msra.mxu0 %v2124
    %2148 = vmatprep.subr.mxu0 0.0
    %2149 = vmatpush1.msra.mxu0 %v2125
    %2150 = vmatprep.subr.mxu0 0.0
    %2151 = vmatpush1.msra.mxu0 %v2126
    %2152 = vmatprep.subr.mxu0 0.0
    %2153 = vmatpush1.msra.mxu0 %v2127
    %2154 = vmatprep.subr.mxu0 0.0
    %2155 = vmatpush1.msra.mxu0 %v2128
    %2156 = vmatprep.subr.mxu0 0.0
    %2157 = vmatpush1.msra.mxu0 %v2129
    %2158 = vmatprep.subr.mxu0 0.0
    %2159 = vmatpush1.msra.mxu0 %v2130
    %2160 = vmatprep.subr.mxu0 0.0
    %2161 = vmatpush1.msra.mxu0 %v2131
    %2162 = vmatprep.subr.mxu0 0.0
    %2163 = vmatpush1.msra.mxu0 %v2132
    %2164 = vmatprep.subr.mxu0 0.0
    %2165 = vmatpush1.msra.mxu0 %v2133
    %2166 = vmatprep.subr.mxu0 0.0
    %2167 = vmatpush1.msra.mxu0 0.0
    %2168 = vmatprep.subr.mxu0 0.0
    %2169 = vmatpush1.msra.mxu0 0.0
    %2170 = vmatprep.subr.mxu0 0.0
    %2171 = vmatpush1.msra.mxu0 0.0
    %2172 = vmatprep.subr.mxu0 0.0
    %2173 = vmatpush1.msra.mxu0 0.0
    %2174 = vmatprep.subr.mxu0 0.0
    %2175 = vmatpush1.msra.mxu0 0.0
    %2176 = vmatprep.subr.mxu0 0.0
    %2177 = vmatpush1.msra.mxu0 0.0
    %2178 = vmatprep.subr.mxu0 0.0
    %2179 = vmatpush1.msra.mxu0 0.0
    %2180 = vmatprep.subr.mxu0 0.0
    %2181 = vmatpush1.msra.mxu0 0.0
    %2182 = vmatprep.subr.mxu0 0.0
    %2183 = vmatpush1.msra.mxu0 0.0
    %2184 = vmatprep.subr.mxu0 0.0
    %2185 = vmatpush1.msra.mxu0 0.0
    %2186 = vmatprep.subr.mxu0 0.0
    %2187 = vmatpush1.msra.mxu0 0.0
    %2188 = vmatprep.subr.mxu0 0.0
    %2189 = vmatpush1.msra.mxu0 0.0
    %2190 = vmatprep.subr.mxu0 0.0
    %2191 = vmatpush1.msra.mxu0 0.0
    %2192 = vmatprep.subr.mxu0 0.0
    %2193 = vmatpush1.msra.mxu0 0.0
    %2194 = vmatprep.subr.mxu0 0.0
    %2195 = vmatpush1.msra.mxu0 0.0
    %2196 = vmatprep.subr.mxu0 0.0
    %2197 = vmatpush1.msra.mxu0 0.0
    %2198 = vmatprep.mubr.f32.mxu0 0.0
    %2199 = vmatmul.mubr.f32.gmra.mrb[0].mxu0 %v2116
    %v2200 = vpop.f32.mrb[0].mxu0
    %v2201 = vadd.f32 0.0, %v2200
    %v2202 = vpop.f32.mrb[0].mxu0
    %2203 = vdwg.mxu0
    %v2204 = vadd.f32 %v2115, %v2201
    %v2205 = vld [vmem:[#allocation5 + $0x12] sm:$0x3]
    %s2206 = scalar_lea.vmem %s5, 1152
    %v2207 = vld [vmem:[%s2206] sm:$0xff]
    %v2208 = vld [vmem:[%s2206 + $0x8] sm:$0xff]
    %v2209 = vld [vmem:[%s2206 + $0x10] sm:$0xff]
    %v2210 = vld [vmem:[%s2206 + $0x18] sm:$0xff]
    %v2211 = vld [vmem:[%s2206 + $0x20] sm:$0xff]
    %v2212 = vld [vmem:[%s2206 + $0x28] sm:$0xff]
    %v2213 = vld [vmem:[%s2206 + $0x30] sm:$0xff]
    %v2214 = vld [vmem:[%s2206 + $0x38] sm:$0xff]
    %v2215 = vld [vmem:[%s2206 + $0x40] sm:$0xff]
    %v2216 = vld [vmem:[%s2206 + $0x48] sm:$0xff]
    %v2217 = vld [vmem:[%s2206 + $0x50] sm:$0xff]
    %v2218 = vld [vmem:[%s2206 + $0x58] sm:$0xff]
    %v2219 = vld [vmem:[%s2206 + $0x60] sm:$0xff]
    %v2220 = vld [vmem:[%s2206 + $0x68] sm:$0xff]
    %v2221 = vld [vmem:[%s2206 + $0x70] sm:$0xff]
    %v2222 = vld [vmem:[%s2206 + $0x78] sm:$0xff]
    %2223 = vmatprep.subr.mxu0 0.0
    %2224 = vmatpush1.msra.mxu0 %v2207
    %2225 = vmatprep.subr.mxu0 0.0
    %2226 = vmatpush1.msra.mxu0 %v2208
    %2227 = vmatprep.subr.mxu0 0.0
    %2228 = vmatpush1.msra.mxu0 %v2209
    %2229 = vmatprep.subr.mxu0 0.0
    %2230 = vmatpush1.msra.mxu0 %v2210
    %2231 = vmatprep.subr.mxu0 0.0
    %2232 = vmatpush1.msra.mxu0 %v2211
    %2233 = vmatprep.subr.mxu0 0.0
    %2234 = vmatpush1.msra.mxu0 %v2212
    %2235 = vmatprep.subr.mxu0 0.0
    %2236 = vmatpush1.msra.mxu0 %v2213
    %2237 = vmatprep.subr.mxu0 0.0
    %2238 = vmatpush1.msra.mxu0 %v2214
    %2239 = vmatprep.subr.mxu0 0.0
    %2240 = vmatpush1.msra.mxu0 %v2215
    %2241 = vmatprep.subr.mxu0 0.0
    %2242 = vmatpush1.msra.mxu0 %v2216
    %2243 = vmatprep.subr.mxu0 0.0
    %2244 = vmatpush1.msra.mxu0 %v2217
    %2245 = vmatprep.subr.mxu0 0.0
    %2246 = vmatpush1.msra.mxu0 %v2218
    %2247 = vmatprep.subr.mxu0 0.0
    %2248 = vmatpush1.msra.mxu0 %v2219
    %2249 = vmatprep.subr.mxu0 0.0
    %2250 = vmatpush1.msra.mxu0 %v2220
    %2251 = vmatprep.subr.mxu0 0.0
    %2252 = vmatpush1.msra.mxu0 %v2221
    %2253 = vmatprep.subr.mxu0 0.0
    %2254 = vmatpush1.msra.mxu0 %v2222
    %2255 = vmatprep.subr.mxu0 0.0
    %2256 = vmatpush1.msra.mxu0 0.0
    %2257 = vmatprep.subr.mxu0 0.0
    %2258 = vmatpush1.msra.mxu0 0.0
    %2259 = vmatprep.subr.mxu0 0.0
    %2260 = vmatpush1.msra.mxu0 0.0
    %2261 = vmatprep.subr.mxu0 0.0
    %2262 = vmatpush1.msra.mxu0 0.0
    %2263 = vmatprep.subr.mxu0 0.0
    %2264 = vmatpush1.msra.mxu0 0.0
    %2265 = vmatprep.subr.mxu0 0.0
    %2266 = vmatpush1.msra.mxu0 0.0
    %2267 = vmatprep.subr.mxu0 0.0
    %2268 = vmatpush1.msra.mxu0 0.0
    %2269 = vmatprep.subr.mxu0 0.0
    %2270 = vmatpush1.msra.mxu0 0.0
    %2271 = vmatprep.subr.mxu0 0.0
    %2272 = vmatpush1.msra.mxu0 0.0
    %2273 = vmatprep.subr.mxu0 0.0
    %2274 = vmatpush1.msra.mxu0 0.0
    %2275 = vmatprep.subr.mxu0 0.0
    %2276 = vmatpush1.msra.mxu0 0.0
    %2277 = vmatprep.subr.mxu0 0.0
    %2278 = vmatpush1.msra.mxu0 0.0
    %2279 = vmatprep.subr.mxu0 0.0
    %2280 = vmatpush1.msra.mxu0 0.0
    %2281 = vmatprep.subr.mxu0 0.0
    %2282 = vmatpush1.msra.mxu0 0.0
    %2283 = vmatprep.subr.mxu0 0.0
    %2284 = vmatpush1.msra.mxu0 0.0
    %2285 = vmatprep.subr.mxu0 0.0
    %2286 = vmatpush1.msra.mxu0 0.0
    %2287 = vmatprep.mubr.f32.mxu0 0.0
    %2288 = vmatmul.mubr.f32.gmra.mrb[0].mxu0 %v2205
    %v2289 = vpop.f32.mrb[0].mxu0
    %v2290 = vadd.f32 0.0, %v2289
    %v2291 = vpop.f32.mrb[0].mxu0
    %2292 = vdwg.mxu0
    %v2293 = vadd.f32 %v2204, %v2290
    %v2294 = vld [vmem:[%s6] sm:$0x1]
    %v2296 = vlaneseq
    %v2297 = vshrl.u32 %v2296, 7
    %v2298 = vsub.s32 0, %v2297
    %v2299 = vrot.slane %v2294, %v2298
    %v2301 = vadd.f32 %v2293, %v2299
    %v2302 = vmax.f32 %v2301, 0.0
    %v2303 = vld [vmem:[%s7] sm:$0xff]
    %v2304 = vld [vmem:[%s7 + $0x8] sm:$0xff]
    %v2305 = vld [vmem:[%s7 + $0x10] sm:$0xff]
    %v2306 = vld [vmem:[%s7 + $0x18] sm:$0xff]
    %v2307 = vld [vmem:[%s7 + $0x20] sm:$0xff]
    %v2308 = vld [vmem:[%s7 + $0x28] sm:$0xff]
    %v2309 = vld [vmem:[%s7 + $0x30] sm:$0xff]
    %v2310 = vld [vmem:[%s7 + $0x38] sm:$0xff]
    %v2311 = vld [vmem:[%s7 + $0x40] sm:$0xff]
    %v2312 = vld [vmem:[%s7 + $0x48] sm:$0xff]
    %v2313 = vld [vmem:[%s7 + $0x50] sm:$0xff]
    %v2314 = vld [vmem:[%s7 + $0x58] sm:$0xff]
    %v2315 = vld [vmem:[%s7 + $0x60] sm:$0xff]
    %v2316 = vld [vmem:[%s7 + $0x68] sm:$0xff]
    %v2317 = vld [vmem:[%s7 + $0x70] sm:$0xff]
    %v2318 = vld [vmem:[%s7 + $0x78] sm:$0xff]
    %v2319 = vld [vmem:[%s8] sm:$0x1]
    %v2321 = vlaneseq
    %v2322 = vshrl.u32 %v2321, 7
    %v2323 = vsub.s32 0, %v2322
    %v2324 = vrot.slane %v2319, %v2323
    %2326 = vmatprep.subr.mxu0 0.0
    %2327 = vmatpush1.msra.mxu0 %v2303
    %2328 = vmatprep.subr.mxu0 0.0
    %2329 = vmatpush1.msra.mxu0 %v2304
    %2330 = vmatprep.subr.mxu0 0.0
    %2331 = vmatpush1.msra.mxu0 %v2305
    %2332 = vmatprep.subr.mxu0 0.0
    %2333 = vmatpush1.msra.mxu0 %v2306
    %2334 = vmatprep.subr.mxu0 0.0
    %2335 = vmatpush1.msra.mxu0 %v2307
    %2336 = vmatprep.subr.mxu0 0.0
    %2337 = vmatpush1.msra.mxu0 %v2308
    %2338 = vmatprep.subr.mxu0 0.0
    %2339 = vmatpush1.msra.mxu0 %v2309
    %2340 = vmatprep.subr.mxu0 0.0
    %2341 = vmatpush1.msra.mxu0 %v2310
    %2342 = vmatprep.subr.mxu0 0.0
    %2343 = vmatpush1.msra.mxu0 %v2311
    %2344 = vmatprep.subr.mxu0 0.0
    %2345 = vmatpush1.msra.mxu0 %v2312
    %2346 = vmatprep.subr.mxu0 0.0
    %2347 = vmatpush1.msra.mxu0 %v2313
    %2348 = vmatprep.subr.mxu0 0.0
    %2349 = vmatpush1.msra.mxu0 %v2314
    %2350 = vmatprep.subr.mxu0 0.0
    %2351 = vmatpush1.msra.mxu0 %v2315
    %2352 = vmatprep.subr.mxu0 0.0
    %2353 = vmatpush1.msra.mxu0 %v2316
    %2354 = vmatprep.subr.mxu0 0.0
    %2355 = vmatpush1.msra.mxu0 %v2317
    %2356 = vmatprep.subr.mxu0 0.0
    %2357 = vmatpush1.msra.mxu0 %v2318
    %2358 = vmatprep.subr.mxu0 0.0
    %2359 = vmatpush1.msra.mxu0 0.0
    %2360 = vmatprep.subr.mxu0 0.0
    %2361 = vmatpush1.msra.mxu0 0.0
    %2362 = vmatprep.subr.mxu0 0.0
    %2363 = vmatpush1.msra.mxu0 0.0
    %2364 = vmatprep.subr.mxu0 0.0
    %2365 = vmatpush1.msra.mxu0 0.0
    %2366 = vmatprep.subr.mxu0 0.0
    %2367 = vmatpush1.msra.mxu0 0.0
    %2368 = vmatprep.subr.mxu0 0.0
    %2369 = vmatpush1.msra.mxu0 0.0
    %2370 = vmatprep.subr.mxu0 0.0
    %2371 = vmatpush1.msra.mxu0 0.0
    %2372 = vmatprep.subr.mxu0 0.0
    %2373 = vmatpush1.msra.mxu0 0.0
    %2374 = vmatprep.subr.mxu0 0.0
    %2375 = vmatpush1.msra.mxu0 0.0
    %2376 = vmatprep.subr.mxu0 0.0
    %2377 = vmatpush1.msra.mxu0 0.0
    %2378 = vmatprep.subr.mxu0 0.0
    %2379 = vmatpush1.msra.mxu0 0.0
    %2380 = vmatprep.subr.mxu0 0.0
    %2381 = vmatpush1.msra.mxu0 0.0
    %2382 = vmatprep.subr.mxu0 0.0
    %2383 = vmatpush1.msra.mxu0 0.0
    %2384 = vmatprep.subr.mxu0 0.0
    %2385 = vmatpush1.msra.mxu0 0.0
    %2386 = vmatprep.subr.mxu0 0.0
    %2387 = vmatpush1.msra.mxu0 0.0
    %2388 = vmatprep.subr.mxu0 0.0
    %2389 = vmatpush1.msra.mxu0 0.0
    %2390 = vmatprep.mubr.f32.mxu0 0.0
    %2391 = vmatmul.mubr.f32.gmra.mrb[0].mxu0 %v2302
    %v2392 = vpop.f32.mrb[0].mxu0
    %v2393 = vadd.f32 %v2324, %v2392
    %v2394 = vpop.f32.mrb[0].mxu0
    %2395 = vdwg.mxu0
    %v2396 = vxor.u32 %v2393, 2147483648
    %v2397 = vmul.f32 %v2396, 1.442695
    %v2398 = vpow.pop %v2397
    %v2399 = vadd.f32 %v2398, 1.0
    %v2400 = vrcp.pop %v2399
    %v2401 = vmul.f32 1.0, %v2400
    %2402 = vst [vmem:[#allocation6] sm:$0x3] %v2401
    // Predicated region
    $region38: #{cnn_forward.1} parent=1 // pred_check
      _
    $region39: #{cnn_forward.1} parent=1 // pred_check_branch
      %2404 = sbr.rel (0) target = $region41
    $region40: #{cnn_forward.1} parent=1 // pred_region
      %s2406 = ssub.s32 32, 32
      %2407 = vsyncadd [#allocation7], %s2406
      %s2409 = sshll.u32 [#allocation6], 4
      %s2410 = int_to_ptr.vmem [resolvable:$true] %s2409
      %2412 = dma.vmem_to_hbm [thread:$0]  %s2410, 32, %s9, [#allocation7]
    $region41: #{cnn_forward.1} parent=1 // pred_fallthru
      _
    // Predicated region
    $region42: #{cnn_forward.1} parent=1 // pred_check
      _
    $region43: #{cnn_forward.1} parent=1 // pred_check_branch
      %2414 = sbr.rel (0) target = $region45
    $region44: #{cnn_forward.1} parent=1 // pred_region
      %2415 = dma.done [#allocation7], 32
    $region45: #{cnn_forward.1} parent=1 // pred_fallthru
      _
    %2416 = vsyncpa [#allocation7], 1

</llo_original>
